<compile_context>
chip_gen: v6e
topology: v6e:2x2x1
jax: 0.10.0
libtpu: 0.0.40
codegen_flags: <defaults>
</compile_context>

<pallas_src>
import functools
import math

import jax
import jax.numpy as jnp
from jax.experimental import pallas as pl
from jax.experimental.pallas import tpu as pltpu


# ---------------------------------------------------------------------------
# Fused multi-step forward kernel.  grid = (T,): state carried in VMEM scratch,
# weights + att_proj resident (constant index maps), x streamed per step.
# ---------------------------------------------------------------------------

def fused_forward_kernel(x_ref, att_t_ref, attproj_ref, init_state_ref,
                         wh_att_ref, bh_att_ref, walpha_ref,
                         wcore_ref, bcore_ref, wproj_ref, bproj_ref,
                         out_state_ref, logsoft_ref, state_scr):
    num_layers, _, p4r = wcore_ref.shape
    B, R, L = att_t_ref.shape                  # att pre-transposed: (B, R, L)
    P = p4r // (4 * R)
    PR = P * R
    sig_lanes = 3 * PR                         # gate-major: [i|f|o] sigmoid, [g] tanh

    t_step = pl.program_id(0)

    @pl.when(t_step == 0)
    def _():
        state_scr[...] = init_state_ref[...]   # (B, 2*NL*R) lane-packed [c0,h0,c1,h1,...]

    x = x_ref[0]                               # (B, input_size)
    att_t = att_t_ref[...]                     # (B, R, L) f32
    state = state_scr[...]                     # (B, 2*NL*R) f32

    def attention(m, h):
        """Additive attention. att features projection precomputed & flattened to (B, L*A)."""
        h_proj = (jnp.dot(h.astype(wh_att_ref.dtype), wh_att_ref[m],
                          preferred_element_type=jnp.float32)
                  + bh_att_ref[m])                                        # (B, A) f32
        h_tiled = jnp.concatenate([h_proj] * L, axis=-1)                  # (B, L*A) lane-dense
        d = jnp.tanh(attproj_ref[m] + h_tiled)                            # (B, L*A) one wide tanh
        # alpha_net (Linear(A,1) per location) as a block-diagonal MXU matmul -> (B, L).
        # alpha_net bias dropped (softmax is shift-invariant).
        e = jnp.dot(d.astype(walpha_ref.dtype), walpha_ref[m],
                    preferred_element_type=jnp.float32)                   # (B, L)
        e = e - jnp.max(e, axis=-1, keepdims=True)
        w = jnp.exp(e)
        w = w * pl.reciprocal(jnp.sum(w, axis=-1, keepdims=True), approx=True)
        # context: reduce over the minor (lane) axis of (B, R, L)
        return jnp.sum(att_t * w[:, None, :], axis=-1)                    # (B, R)

    top_h = None
    new_state_pieces = []
    inv_p = 1.0 / P
    for i in range(num_layers):                                           # static, unrolled
        prev_c = state[:, (2 * i) * R:(2 * i + 1) * R]
        prev_h = state[:, (2 * i + 1) * R:(2 * i + 2) * R]
        xt = x if i == 0 else x + top_h                                   # x + outputs[-1]

        prev_att_res = attention(2 * i + 0, prev_h)

        # one fused matmul: [xt, prev_h, att_res] (B,3R) x (3R, P*4R), gate-major columns
        inp = jnp.concatenate([xt, prev_h, prev_att_res], axis=-1)
        sums = (jnp.dot(inp.astype(wcore_ref.dtype), wcore_ref[i],
                        preferred_element_type=jnp.float32)
                + bcore_ref[i])                                           # (B, P*4R) f32

        # single transcendental pass: sigmoid lanes were pre-scaled by 0.5 at init,
        # so sigma(x) = 0.5*tanh(x/2) + 0.5 and tanh lanes are untouched.
        t_all = jnp.tanh(sums)
        lane = jax.lax.broadcasted_iota(jnp.int32, sums.shape, 1)
        act = jnp.where(lane < sig_lanes, 0.5 * t_all + 0.5, t_all)

        i_g = act[:, 0 * PR:1 * PR]
        f_g = act[:, 1 * PR:2 * PR]
        o_g = act[:, 2 * PR:3 * PR]
        g_t = act[:, 3 * PR:4 * PR]
        prev_c_rep = jnp.concatenate([prev_c] * P, axis=-1)               # (B, P*R)
        nc = f_g * prev_c_rep + i_g * g_t                                 # all P cores at once
        nh = o_g * jnp.tanh(nc)                                           # one wide tanh

        # mean over the P parallel cores (lane-chunk reduce)
        next_c = nc[:, 0:R]
        next_h = nh[:, 0:R]
        for p in range(1, P):
            next_c = next_c + nc[:, p * R:(p + 1) * R]
            next_h = next_h + nh[:, p * R:(p + 1) * R]
        next_c = next_c * inv_p
        next_h = next_h * inv_p

        att_res = attention(2 * i + 1, next_h)
        top_h = att_res + next_h                                          # dropout == 0.0 -> skipped

        new_state_pieces += [next_c, top_h]

    # single lane-dense (B, 2*NL*R) state store + scratch carry for the next grid step
    new_state = jnp.concatenate(new_state_pieces, axis=-1)
    state_scr[...] = new_state
    out_state_ref[0] = new_state

    # final projection + log-softmax; O padded to 128 lanes (pad bias = -1e30 -> exp underflows to 0)
    logits = (jnp.dot(top_h.astype(wproj_ref.dtype), wproj_ref[...],
                      preferred_element_type=jnp.float32)
              + bproj_ref[...])                                           # (B, O_pad)
    z = logits - jnp.max(logits, axis=-1, keepdims=True)
    lse = jnp.log(jnp.sum(jnp.exp(z), axis=-1, keepdims=True))
    logsoft_ref[0] = z - lse


# ---------------------------------------------------------------------------
# Step-invariant attention precomputes (hoisted out of the decode loop)
# ---------------------------------------------------------------------------

def prepare_attention(att, params):
    B, L, R = att.shape
    M, _, A = params["w_att"].shape
    # att features projection, flattened lane-dense: (M, B, L*A)
    att_proj = (jnp.einsum("blr,mra->mbla", att, params["w_att"])
                + params["b_att"][:, None, None, :]).reshape(M, B, L * A)
    # alpha_net as a block-diagonal (L*A, L) matrix so the per-location reduce runs on the MXU
    eye = jnp.eye(L, dtype=jnp.float32)
    w_alpha_blk = jnp.einsum("lk,ma->mlak", eye, params["w_alpha"]).reshape(M, L * A, L)
    # att transposed so the context reduction is over the minor (lane) axis
    att_t = jnp.transpose(att, (0, 2, 1))                                  # (B, R, L)
    return (att_t.astype(jnp.float32),
            att_proj.astype(jnp.float32),
            w_alpha_blk.astype(jnp.bfloat16))


# ---------------------------------------------------------------------------
# Wrappers
# ---------------------------------------------------------------------------

def lstm_double_att_decode(xs, att, inputs, params):
    """T fused decode steps (teacher forcing): one pallas_call with grid=(T,)."""
    T, B, IN = xs.shape
    L = att.shape[1]
    R = inputs[0].shape[-1]
    num_layers, K3R, P4R = params["w_core"].shape
    M, _, A = params["w_h_att"].shape
    O_pad = params["w_proj"].shape[-1]

    att_t, att_proj, w_alpha_blk = prepare_attention(att, params)
    state0 = jnp.concatenate(inputs, axis=-1)                              # (B, 2*NL*R)
    S = state0.shape[-1]

    out_states, logsoft = pl.pallas_call(
        fused_forward_kernel,
        out_shape=(jax.ShapeDtypeStruct((T, B, S), jnp.float32),
                   jax.ShapeDtypeStruct((T, B, O_pad), jnp.float32)),
        grid_spec=pltpu.PrefetchScalarGridSpec(
            num_scalar_prefetch=0,
            grid=(T,),
            in_specs=[
                pl.BlockSpec((1, B, IN), lambda t: (t, 0, 0)),             # x_t streamed per step
                pl.BlockSpec((B, R, L), lambda t: (0, 0, 0)),              # resident across steps
                pl.BlockSpec((M, B, L * A), lambda t: (0, 0, 0)),
                pl.BlockSpec((B, S), lambda t: (0, 0)),
                pl.BlockSpec((M, R, A), lambda t: (0, 0, 0)),
                pl.BlockSpec((M, 1, A), lambda t: (0, 0, 0)),
                pl.BlockSpec((M, L * A, L), lambda t: (0, 0, 0)),
                pl.BlockSpec((num_layers, K3R, P4R), lambda t: (0, 0, 0)),
                pl.BlockSpec((num_layers, 1, P4R), lambda t: (0, 0, 0)),
                pl.BlockSpec((R, O_pad), lambda t: (0, 0)),
                pl.BlockSpec((1, O_pad), lambda t: (0, 0)),
            ],
            out_specs=(pl.BlockSpec((1, B, S), lambda t: (t, 0, 0)),
                       pl.BlockSpec((1, B, O_pad), lambda t: (t, 0, 0))),
            scratch_shapes=[pltpu.VMEM((B, S), jnp.float32)],              # carried (c, h) state
        ),
        compiler_params=pltpu.CompilerParams(
            dimension_semantics=("arbitrary",)),                           # sequential recurrence
        # TODO(synk): at production batch sizes add a leading "parallel" grid over B tiles so the
        # v7x megacore (2 TCs) is used; at B=8 cross-TC overhead exceeds the work.
    )(xs, att_t, att_proj, state0,
      params["w_h_att"], params["b_h_att"], w_alpha_blk,
      params["w_core"], params["b_core"], params["w_proj"], params["b_proj"])
    return out_states, logsoft


def lstm_double_att_forward(x, att, inputs, params, *, num_layers, output_size):
    """Single-step forward == the torch module's forward (T = 1)."""
    R = inputs[0].shape[-1]
    out_states, logsoft = lstm_double_att_decode(x[None], att, inputs, params)
    s = out_states[0]                                                      # (B, 2*NL*R)
    outputs = [s[:, k * R:(k + 1) * R] for k in range(2 * num_layers)]
    return outputs, logsoft[0, :, :output_size]


# ---------------------------------------------------------------------------
# Deterministic parameter init (shapes dictated by the module's __init__),
# pre-fused into the kernel-friendly layout.
# ---------------------------------------------------------------------------

def init_params(key, input_size, output_size, num_layers, num_parallels,
                rnn_size, att_size):
    def nk():
        nonlocal key
        key, sub = jax.random.split(key)
        return sub

    def linear(fan_in, fan_out):
        bound = 1.0 / math.sqrt(fan_in)
        w = jax.random.uniform(nk(), (fan_in, fan_out), jnp.float32, -bound, bound)
        b = jax.random.uniform(nk(), (fan_out,), jnp.float32, -bound, bound)
        return w, b

    R, A, P = rnn_size, att_size, num_parallels

    # --- cores: fuse [w_i; w_h; w_a] along K, permute columns to gate-major [i|f|o|g] across the
    # P parallel cores, pre-sum biases, and pre-scale sigmoid columns by 0.5 (single-tanh trick).
    w_core, b_core = [], []
    for _ in range(num_layers):
        per_w, per_b = [], []
        for _ in range(P):
            wi, bi = linear(input_size, 4 * R)
            wh, bh = linear(R, 4 * R)
            wa, ba = linear(R, 4 * R)
            per_w.append(jnp.concatenate([wi, wh, wa], axis=0))            # (input+2R, 4R)
            per_b.append(bi + bh + ba)                                     # (4R,)
        cols_w, cols_b = [], []
        for g in range(4):                                                 # gate-major layout
            for j in range(P):
                cols_w.append(per_w[j][:, g * R:(g + 1) * R])
                cols_b.append(per_b[j][g * R:(g + 1) * R])
        W = jnp.concatenate(cols_w, axis=1)                                # (input+2R, P*4R)
        bvec = jnp.concatenate(cols_b, axis=0)                             # (P*4R,)
        scale = jnp.concatenate([jnp.full((3 * P * R,), 0.5, jnp.float32),
                                 jnp.ones((P * R,), jnp.float32)])
        w_core.append(W * scale[None, :])
        b_core.append(bvec * scale)
    w_core = jnp.stack(w_core).astype(jnp.bfloat16)                        # (NL, input+2R, P*4R)
    b_core = jnp.stack(b_core)[:, None, :]                                 # (NL, 1, P*4R) f32

    # --- attention modules (2 per layer); alpha_net bias dropped (softmax shift-invariant)
    w_att, b_att, w_h_att, b_h_att, w_alpha = [], [], [], [], []
    for _ in range(num_layers * 2):
        wA, bA = linear(R, A)
        wH, bH = linear(R, A)
        wa1, _ba1 = linear(A, 1)
        w_att.append(wA)
        b_att.append(bA)
        w_h_att.append(wH)
        b_h_att.append(bH)
        w_alpha.append(wa1.reshape(A))

    # --- projection, padded to a lane-dense 128-multiple (zero cols, -1e30 pad bias)
    O_pad = max(128, ((output_size + 127) // 128) * 128)
    w_proj, b_proj = linear(R, output_size)
    w_proj_p = jnp.zeros((R, O_pad), jnp.float32).at[:, :output_size].set(w_proj)
    b_proj_p = jnp.full((O_pad,), -1e30, jnp.float32).at[:output_size].set(b_proj)

    return {
        # used only for the hoisted, step-invariant att_proj precompute (outside the kernel)
        "w_att": jnp.stack(w_att),                                         # (M, R, A) f32
        "b_att": jnp.stack(b_att),                                         # (M, A)    f32
        "w_alpha": jnp.stack(w_alpha),                                     # (M, A)    f32
        # kernel params
        "w_h_att": jnp.stack(w_h_att).astype(jnp.bfloat16),                # (M, R, A)
        "b_h_att": jnp.stack(b_h_att)[:, None, :],                         # (M, 1, A) f32
        "w_core": w_core, "b_core": b_core,
        "w_proj": w_proj_p.astype(jnp.bfloat16),                           # (R, O_pad)
        "b_proj": b_proj_p[None, :],                                       # (1, O_pad) f32
    }


# ---------------------------------------------------------------------------
# main
# ---------------------------------------------------------------------------

if __name__ == "__main__":
    # module hyper-params (input_size must equal rnn_size because of `x + outputs[-1]`)
    B = 8                # batch
    L = 16               # attention locations
    T = 8                # fused decode steps (teacher forcing) for the multi-step path
    input_size = 32
    rnn_size = 32
    att_size = 16
    output_size = 24
    num_layers = 2
    num_parallels = 2
    dropout = 0.0        # forward's dropout branch is skipped (stochastic in torch)

    key = jax.random.PRNGKey(0)
    kp, kx, ka, kst = jax.random.split(key, 4)

    params = init_params(kp, input_size, output_size, num_layers, num_parallels,
                         rnn_size, att_size)

    x = jax.random.normal(kx, (B, input_size), jnp.float32)
    att = jax.random.normal(ka, (B, L, rnn_size), jnp.float32)
    state_keys = jax.random.split(kst, 2 * num_layers)
    inputs = [jax.random.normal(state_keys[i], (B, rnn_size), jnp.float32)
              for i in range(2 * num_layers)]

    # 1) single-step forward == the torch module's forward
    fwd = jax.jit(functools.partial(lstm_double_att_forward,
                                    num_layers=num_layers, output_size=output_size))
    outputs, logsoft = fwd(x, att, inputs, params)
    jax.block_until_ready(logsoft)
    for o in outputs:
        jax.block_until_ready(o)

    # 2) T fused decode steps in one pallas_call (grid=(T,), state carried in VMEM scratch)
    xs = jax.random.normal(kx, (T, B, input_size), jnp.float32)
    dec = jax.jit(lstm_double_att_decode)
    states_T, logsoft_T = dec(xs, att, inputs, params)
    jax.block_until_ready(states_T)
    jax.block_until_ready(logsoft_T)

    print("KERNEL_OK")
</pallas_src>

<mosaic_0001>
module attributes {stable_mosaic.version = 11 : i64} {
  func.func @fused_forward_kernel(%arg0: i32, %arg1: memref<1x8x32xf32, #tpu.memory_space<vmem>>, %arg2: memref<8x32x16xf32, #tpu.memory_space<vmem>>, %arg3: memref<4x8x256xf32, #tpu.memory_space<vmem>>, %arg4: memref<8x128xf32, #tpu.memory_space<vmem>>, %arg5: memref<4x32x16xbf16, #tpu.memory_space<vmem>>, %arg6: memref<4x1x16xf32, #tpu.memory_space<vmem>>, %arg7: memref<4x256x16xbf16, #tpu.memory_space<vmem>>, %arg8: memref<2x96x256xbf16, #tpu.memory_space<vmem>>, %arg9: memref<2x1x256xf32, #tpu.memory_space<vmem>>, %arg10: memref<32x128xbf16, #tpu.memory_space<vmem>>, %arg11: memref<1x128xf32, #tpu.memory_space<vmem>>, %arg12: memref<1x8x128xf32, #tpu.memory_space<vmem>>, %arg13: memref<1x8x128xf32, #tpu.memory_space<vmem>>, %arg14: memref<8x128xf32, #tpu.memory_space<vmem>>) attributes {dimension_semantics = [#tpu.dimension_semantics<arbitrary>], iteration_bounds = array<i64: 1>, scalar_prefetch = 0 : i64, scratch_operands = 1 : i64, tpu.core_type = #tpu.core_type<tc>, window_params = [{transform_indices = @transform_0, window_bounds = array<i64: 1, 8, 32>}, {pipeline_mode = #tpu.pipeline_mode<synchronous>, transform_indices = @transform_1, window_bounds = array<i64: 8, 32, 16>}, {pipeline_mode = #tpu.pipeline_mode<synchronous>, transform_indices = @transform_2, window_bounds = array<i64: 4, 8, 256>}, {pipeline_mode = #tpu.pipeline_mode<synchronous>, transform_indices = @transform_3, window_bounds = array<i64: 8, 128>}, {pipeline_mode = #tpu.pipeline_mode<synchronous>, transform_indices = @transform_4, window_bounds = array<i64: 4, 32, 16>}, {pipeline_mode = #tpu.pipeline_mode<synchronous>, transform_indices = @transform_5, window_bounds = array<i64: 4, 1, 16>}, {pipeline_mode = #tpu.pipeline_mode<synchronous>, transform_indices = @transform_6, window_bounds = array<i64: 4, 256, 16>}, {pipeline_mode = #tpu.pipeline_mode<synchronous>, transform_indices = @transform_7, window_bounds = array<i64: 2, 96, 256>}, {pipeline_mode = #tpu.pipeline_mode<synchronous>, transform_indices = @transform_8, window_bounds = array<i64: 2, 1, 256>}, {pipeline_mode = #tpu.pipeline_mode<synchronous>, transform_indices = @transform_9, window_bounds = array<i64: 32, 128>}, {pipeline_mode = #tpu.pipeline_mode<synchronous>, transform_indices = @transform_10, window_bounds = array<i64: 1, 128>}, {transform_indices = @transform_11, window_bounds = array<i64: 1, 8, 128>}, {transform_indices = @transform_12, window_bounds = array<i64: 1, 8, 128>}]} {
    %c0_i32 = arith.constant 0 : i32
    %0 = arith.cmpi eq, %arg0, %c0_i32 : i32
    %1 = arith.extui %0 : i1 to i32
    %c0_i32_0 = arith.constant 0 : i32
    %2 = arith.cmpi ne, %1, %c0_i32_0 : i32
    scf.if %2 {
      %c0_110 = arith.constant 0 : index
      %c0_111 = arith.constant 0 : index
      %238 = vector.load %arg4[%c0_110, %c0_111] : memref<8x128xf32, #tpu.memory_space<vmem>>, vector<8x128xf32>
      %c0_112 = arith.constant 0 : index
      %c0_113 = arith.constant 0 : index
      %239 = vector.load %arg14[%c0_112, %c0_113] : memref<8x128xf32, #tpu.memory_space<vmem>>, vector<8x128xf32>
      tpu.vector_store %arg14[%c0_112, %c0_113], %238 {strides = array<i32>} : memref<8x128xf32, #tpu.memory_space<vmem>>, vector<8x128xf32>,
    } else {
    }
    %c0 = arith.constant 0 : index
    %c0_1 = arith.constant 0 : index
    %c0_2 = arith.constant 0 : index
    %3 = vector.load %arg1[%c0, %c0_1, %c0_2] : memref<1x8x32xf32, #tpu.memory_space<vmem>>, vector<1x8x32xf32>
    %4 = vector.shape_cast %3 : vector<1x8x32xf32> to vector<8x32xf32>
    %c0_3 = arith.constant 0 : index
    %c0_4 = arith.constant 0 : index
    %c0_5 = arith.constant 0 : index
    %5 = vector.load %arg2[%c0_3, %c0_4, %c0_5] : memref<8x32x16xf32, #tpu.memory_space<vmem>>, vector<8x32x16xf32>
    %c0_6 = arith.constant 0 : index
    %c0_7 = arith.constant 0 : index
    %6 = vector.load %arg14[%c0_6, %c0_7] : memref<8x128xf32, #tpu.memory_space<vmem>>, vector<8x128xf32>
    %7 = vector.extract_strided_slice %6 {offsets = [0, 0], sizes = [8, 32], strides = [1, 1]} : vector<8x128xf32> to vector<8x32xf32>
    %8 = vector.extract_strided_slice %6 {offsets = [0, 32], sizes = [8, 32], strides = [1, 1]} : vector<8x128xf32> to vector<8x32xf32>
    %9 = arith.truncf %8 : vector<8x32xf32> to vector<8x32xbf16>
    %c0_8 = arith.constant 0 : index
    %c0_9 = arith.constant 0 : index
    %c0_10 = arith.constant 0 : index
    %10 = vector.load %arg5[%c0_8, %c0_9, %c0_10] : memref<4x32x16xbf16, #tpu.memory_space<vmem>>, vector<1x32x16xbf16>
    %11 = vector.shape_cast %10 : vector<1x32x16xbf16> to vector<32x16xbf16>
    %cst = arith.constant dense<0.000000e+00> : vector<8x16xf32>
    %12 = tpu.matmul %9, %11, %cst {dimension_numbers = #tpu.dot_dimension_numbers<[1], [0], [0], [1], [0, 0, 1, 1], [], []>} : vector<8x32xbf16>, vector<32x16xbf16>, vector<8x16xf32> -> vector<8x16xf32>
    %c0_11 = arith.constant 0 : index
    %c0_12 = arith.constant 0 : index
    %c0_13 = arith.constant 0 : index
    %13 = vector.load %arg6[%c0_11, %c0_12, %c0_13] : memref<4x1x16xf32, #tpu.memory_space<vmem>>, vector<1x1x16xf32>
    %14 = vector.shape_cast %13 : vector<1x1x16xf32> to vector<1x16xf32>
    %15 = vector.broadcast %14 : vector<1x16xf32> to vector<8x16xf32>
    %16 = arith.addf %12, %15 : vector<8x16xf32>
    %17 = tpu.concatenate %16, %16, %16, %16, %16, %16, %16, %16, %16, %16, %16, %16, %16, %16, %16, %16 in 1 : vector<8x16xf32>, vector<8x16xf32>, vector<8x16xf32>, vector<8x16xf32>, vector<8x16xf32>, vector<8x16xf32>, vector<8x16xf32>, vector<8x16xf32>, vector<8x16xf32>, vector<8x16xf32>, vector<8x16xf32>, vector<8x16xf32>, vector<8x16xf32>, vector<8x16xf32>, vector<8x16xf32>, vector<8x16xf32> -> vector<8x256xf32>
    %c0_14 = arith.constant 0 : index
    %c0_15 = arith.constant 0 : index
    %c0_16 = arith.constant 0 : index
    %18 = vector.load %arg3[%c0_14, %c0_15, %c0_16] : memref<4x8x256xf32, #tpu.memory_space<vmem>>, vector<1x8x256xf32>
    %19 = vector.shape_cast %18 : vector<1x8x256xf32> to vector<8x256xf32>
    %20 = arith.addf %19, %17 : vector<8x256xf32>
    %21 = math.tanh %20 : vector<8x256xf32>
    %22 = arith.truncf %21 : vector<8x256xf32> to vector<8x256xbf16>
    %c0_17 = arith.constant 0 : index
    %c0_18 = arith.constant 0 : index
    %c0_19 = arith.constant 0 : index
    %23 = vector.load %arg7[%c0_17, %c0_18, %c0_19] : memref<4x256x16xbf16, #tpu.memory_space<vmem>>, vector<1x256x16xbf16>
    %24 = vector.shape_cast %23 : vector<1x256x16xbf16> to vector<256x16xbf16>
    %cst_20 = arith.constant dense<0.000000e+00> : vector<8x16xf32>
    %25 = tpu.matmul %22, %24, %cst_20 {dimension_numbers = #tpu.dot_dimension_numbers<[1], [0], [0], [1], [0, 0, 1, 1], [], []>} : vector<8x256xbf16>, vector<256x16xbf16>, vector<8x16xf32> -> vector<8x16xf32>
    %cst_21 = arith.constant dense<0xFF800000> : vector<8xf32>
    %26 = vector.multi_reduction <maximumf>, %25, %cst_21 [1] : vector<8x16xf32> to vector<8xf32>
    %27 = vector.shape_cast %26 : vector<8xf32> to vector<8x1xf32>
    %28 = vector.broadcast %27 : vector<8x1xf32> to vector<8x16xf32>
    %29 = arith.subf %25, %28 : vector<8x16xf32>
    %30 = math.exp %29 : vector<8x16xf32>
    %cst_22 = arith.constant dense<0.000000e+00> : vector<8xf32>
    %31 = vector.multi_reduction <add>, %30, %cst_22 [1] : vector<8x16xf32> to vector<8xf32>
    %32 = vector.shape_cast %31 : vector<8xf32> to vector<8x1xf32>
    %33 = tpu.reciprocal %32 {approx = true} : vector<8x1xf32> -> vector<8x1xf32>
    %34 = vector.broadcast %33 : vector<8x1xf32> to vector<8x16xf32>
    %35 = arith.mulf %30, %34 : vector<8x16xf32>
    %36 = vector.shape_cast %35 : vector<8x16xf32> to vector<8x1x16xf32>
    %37 = vector.broadcast %36 : vector<8x1x16xf32> to vector<8x32x16xf32>
    %38 = arith.mulf %5, %37 : vector<8x32x16xf32>
    %cst_23 = arith.constant dense<0.000000e+00> : vector<8x32xf32>
    %39 = vector.multi_reduction <add>, %38, %cst_23 [2] : vector<8x32x16xf32> to vector<8x32xf32>
    %40 = tpu.concatenate %4, %8, %39 in 1 : vector<8x32xf32>, vector<8x32xf32>, vector<8x32xf32> -> vector<8x96xf32>
    %41 = arith.truncf %40 : vector<8x96xf32> to vector<8x96xbf16>
    %c0_24 = arith.constant 0 : index
    %c0_25 = arith.constant 0 : index
    %c0_26 = arith.constant 0 : index
    %42 = vector.load %arg8[%c0_24, %c0_25, %c0_26] : memref<2x96x256xbf16, #tpu.memory_space<vmem>>, vector<1x96x256xbf16>
    %43 = vector.shape_cast %42 : vector<1x96x256xbf16> to vector<96x256xbf16>
    %cst_27 = arith.constant dense<0.000000e+00> : vector<8x256xf32>
    %44 = tpu.matmul %41, %43, %cst_27 {dimension_numbers = #tpu.dot_dimension_numbers<[1], [0], [0], [1], [0, 0, 1, 1], [], []>} : vector<8x96xbf16>, vector<96x256xbf16>, vector<8x256xf32> -> vector<8x256xf32>
    %c0_28 = arith.constant 0 : index
    %c0_29 = arith.constant 0 : index
    %c0_30 = arith.constant 0 : index
    %45 = vector.load %arg9[%c0_28, %c0_29, %c0_30] : memref<2x1x256xf32, #tpu.memory_space<vmem>>, vector<1x1x256xf32>
    %46 = vector.shape_cast %45 : vector<1x1x256xf32> to vector<1x256xf32>
    %47 = vector.broadcast %46 : vector<1x256xf32> to vector<8x256xf32>
    %48 = arith.addf %44, %47 : vector<8x256xf32>
    %49 = math.tanh %48 : vector<8x256xf32>
    %50 = tpu.iota {dimensions = array<i32: 1>} : vector<8x256xi32>
    %c192_i32 = arith.constant 192 : i32
    %51 = vector.broadcast %c192_i32 : i32 to vector<8x256xi32>
    %52 = arith.cmpi slt, %50, %51 : vector<8x256xi32>
    %cst_31 = arith.constant 5.000000e-01 : f32
    %53 = vector.broadcast %cst_31 : f32 to vector<8x256xf32>
    %54 = arith.mulf %53, %49 : vector<8x256xf32>
    %cst_32 = arith.constant 5.000000e-01 : f32
    %55 = vector.broadcast %cst_32 : f32 to vector<8x256xf32>
    %56 = arith.addf %54, %55 : vector<8x256xf32>
    %57 = arith.select %52, %56, %49 : vector<8x256xi1>, vector<8x256xf32>
    %58 = vector.extract_strided_slice %57 {offsets = [0, 0], sizes = [8, 64], strides = [1, 1]} : vector<8x256xf32> to vector<8x64xf32>
    %59 = vector.extract_strided_slice %57 {offsets = [0, 64], sizes = [8, 64], strides = [1, 1]} : vector<8x256xf32> to vector<8x64xf32>
    %60 = vector.extract_strided_slice %57 {offsets = [0, 128], sizes = [8, 64], strides = [1, 1]} : vector<8x256xf32> to vector<8x64xf32>
    %61 = vector.extract_strided_slice %57 {offsets = [0, 192], sizes = [8, 64], strides = [1, 1]} : vector<8x256xf32> to vector<8x64xf32>
    %62 = tpu.concatenate %7, %7 in 1 : vector<8x32xf32>, vector<8x32xf32> -> vector<8x64xf32>
    %63 = arith.mulf %59, %62 : vector<8x64xf32>
    %64 = arith.mulf %58, %61 : vector<8x64xf32>
    %65 = arith.addf %63, %64 : vector<8x64xf32>
    %66 = math.tanh %65 : vector<8x64xf32>
    %67 = arith.mulf %60, %66 : vector<8x64xf32>
    %68 = vector.extract_strided_slice %65 {offsets = [0, 0], sizes = [8, 32], strides = [1, 1]} : vector<8x64xf32> to vector<8x32xf32>
    %69 = vector.extract_strided_slice %67 {offsets = [0, 0], sizes = [8, 32], strides = [1, 1]} : vector<8x64xf32> to vector<8x32xf32>
    %70 = vector.extract_strided_slice %65 {offsets = [0, 32], sizes = [8, 32], strides = [1, 1]} : vector<8x64xf32> to vector<8x32xf32>
    %71 = arith.addf %68, %70 : vector<8x32xf32>
    %72 = vector.extract_strided_slice %67 {offsets = [0, 32], sizes = [8, 32], strides = [1, 1]} : vector<8x64xf32> to vector<8x32xf32>
    %73 = arith.addf %69, %72 : vector<8x32xf32>
    %cst_33 = arith.constant 5.000000e-01 : f32
    %74 = vector.broadcast %cst_33 : f32 to vector<8x32xf32>
    %75 = arith.mulf %71, %74 : vector<8x32xf32>
    %cst_34 = arith.constant 5.000000e-01 : f32
    %76 = vector.broadcast %cst_34 : f32 to vector<8x32xf32>
    %77 = arith.mulf %73, %76 : vector<8x32xf32>
    %78 = arith.truncf %77 : vector<8x32xf32> to vector<8x32xbf16>
    %c1 = arith.constant 1 : index
    %c0_35 = arith.constant 0 : index
    %c0_36 = arith.constant 0 : index
    %79 = vector.load %arg5[%c1, %c0_35, %c0_36] : memref<4x32x16xbf16, #tpu.memory_space<vmem>>, vector<1x32x16xbf16>
    %80 = vector.shape_cast %79 : vector<1x32x16xbf16> to vector<32x16xbf16>
    %cst_37 = arith.constant dense<0.000000e+00> : vector<8x16xf32>
    %81 = tpu.matmul %78, %80, %cst_37 {dimension_numbers = #tpu.dot_dimension_numbers<[1], [0], [0], [1], [0, 0, 1, 1], [], []>} : vector<8x32xbf16>, vector<32x16xbf16>, vector<8x16xf32> -> vector<8x16xf32>
    %c1_38 = arith.constant 1 : index
    %c0_39 = arith.constant 0 : index
    %c0_40 = arith.constant 0 : index
    %82 = vector.load %arg6[%c1_38, %c0_39, %c0_40] : memref<4x1x16xf32, #tpu.memory_space<vmem>>, vector<1x1x16xf32>
    %83 = vector.shape_cast %82 : vector<1x1x16xf32> to vector<1x16xf32>
    %84 = vector.broadcast %83 : vector<1x16xf32> to vector<8x16xf32>
    %85 = arith.addf %81, %84 : vector<8x16xf32>
    %86 = tpu.concatenate %85, %85, %85, %85, %85, %85, %85, %85, %85, %85, %85, %85, %85, %85, %85, %85 in 1 : vector<8x16xf32>, vector<8x16xf32>, vector<8x16xf32>, vector<8x16xf32>, vector<8x16xf32>, vector<8x16xf32>, vector<8x16xf32>, vector<8x16xf32>, vector<8x16xf32>, vector<8x16xf32>, vector<8x16xf32>, vector<8x16xf32>, vector<8x16xf32>, vector<8x16xf32>, vector<8x16xf32>, vector<8x16xf32> -> vector<8x256xf32>
    %c1_41 = arith.constant 1 : index
    %c0_42 = arith.constant 0 : index
    %c0_43 = arith.constant 0 : index
    %87 = vector.load %arg3[%c1_41, %c0_42, %c0_43] : memref<4x8x256xf32, #tpu.memory_space<vmem>>, vector<1x8x256xf32>
    %88 = vector.shape_cast %87 : vector<1x8x256xf32> to vector<8x256xf32>
    %89 = arith.addf %88, %86 : vector<8x256xf32>
    %90 = math.tanh %89 : vector<8x256xf32>
    %91 = arith.truncf %90 : vector<8x256xf32> to vector<8x256xbf16>
    %c1_44 = arith.constant 1 : index
    %c0_45 = arith.constant 0 : index
    %c0_46 = arith.constant 0 : index
    %92 = vector.load %arg7[%c1_44, %c0_45, %c0_46] : memref<4x256x16xbf16, #tpu.memory_space<vmem>>, vector<1x256x16xbf16>
    %93 = vector.shape_cast %92 : vector<1x256x16xbf16> to vector<256x16xbf16>
    %cst_47 = arith.constant dense<0.000000e+00> : vector<8x16xf32>
    %94 = tpu.matmul %91, %93, %cst_47 {dimension_numbers = #tpu.dot_dimension_numbers<[1], [0], [0], [1], [0, 0, 1, 1], [], []>} : vector<8x256xbf16>, vector<256x16xbf16>, vector<8x16xf32> -> vector<8x16xf32>
    %cst_48 = arith.constant dense<0xFF800000> : vector<8xf32>
    %95 = vector.multi_reduction <maximumf>, %94, %cst_48 [1] : vector<8x16xf32> to vector<8xf32>
    %96 = vector.shape_cast %95 : vector<8xf32> to vector<8x1xf32>
    %97 = vector.broadcast %96 : vector<8x1xf32> to vector<8x16xf32>
    %98 = arith.subf %94, %97 : vector<8x16xf32>
    %99 = math.exp %98 : vector<8x16xf32>
    %cst_49 = arith.constant dense<0.000000e+00> : vector<8xf32>
    %100 = vector.multi_reduction <add>, %99, %cst_49 [1] : vector<8x16xf32> to vector<8xf32>
    %101 = vector.shape_cast %100 : vector<8xf32> to vector<8x1xf32>
    %102 = tpu.reciprocal %101 {approx = true} : vector<8x1xf32> -> vector<8x1xf32>
    %103 = vector.broadcast %102 : vector<8x1xf32> to vector<8x16xf32>
    %104 = arith.mulf %99, %103 : vector<8x16xf32>
    %105 = vector.shape_cast %104 : vector<8x16xf32> to vector<8x1x16xf32>
    %106 = vector.broadcast %105 : vector<8x1x16xf32> to vector<8x32x16xf32>
    %107 = arith.mulf %5, %106 : vector<8x32x16xf32>
    %cst_50 = arith.constant dense<0.000000e+00> : vector<8x32xf32>
    %108 = vector.multi_reduction <add>, %107, %cst_50 [2] : vector<8x32x16xf32> to vector<8x32xf32>
    %109 = arith.addf %108, %77 : vector<8x32xf32>
    %110 = vector.extract_strided_slice %6 {offsets = [0, 64], sizes = [8, 32], strides = [1, 1]} : vector<8x128xf32> to vector<8x32xf32>
    %111 = vector.extract_strided_slice %6 {offsets = [0, 96], sizes = [8, 32], strides = [1, 1]} : vector<8x128xf32> to vector<8x32xf32>
    %112 = arith.addf %4, %109 : vector<8x32xf32>
    %113 = arith.truncf %111 : vector<8x32xf32> to vector<8x32xbf16>
    %c2 = arith.constant 2 : index
    %c0_51 = arith.constant 0 : index
    %c0_52 = arith.constant 0 : index
    %114 = vector.load %arg5[%c2, %c0_51, %c0_52] : memref<4x32x16xbf16, #tpu.memory_space<vmem>>, vector<1x32x16xbf16>
    %115 = vector.shape_cast %114 : vector<1x32x16xbf16> to vector<32x16xbf16>
    %cst_53 = arith.constant dense<0.000000e+00> : vector<8x16xf32>
    %116 = tpu.matmul %113, %115, %cst_53 {dimension_numbers = #tpu.dot_dimension_numbers<[1], [0], [0], [1], [0, 0, 1, 1], [], []>} : vector<8x32xbf16>, vector<32x16xbf16>, vector<8x16xf32> -> vector<8x16xf32>
    %c2_54 = arith.constant 2 : index
    %c0_55 = arith.constant 0 : index
    %c0_56 = arith.constant 0 : index
    %117 = vector.load %arg6[%c2_54, %c0_55, %c0_56] : memref<4x1x16xf32, #tpu.memory_space<vmem>>, vector<1x1x16xf32>
    %118 = vector.shape_cast %117 : vector<1x1x16xf32> to vector<1x16xf32>
    %119 = vector.broadcast %118 : vector<1x16xf32> to vector<8x16xf32>
    %120 = arith.addf %116, %119 : vector<8x16xf32>
    %121 = tpu.concatenate %120, %120, %120, %120, %120, %120, %120, %120, %120, %120, %120, %120, %120, %120, %120, %120 in 1 : vector<8x16xf32>, vector<8x16xf32>, vector<8x16xf32>, vector<8x16xf32>, vector<8x16xf32>, vector<8x16xf32>, vector<8x16xf32>, vector<8x16xf32>, vector<8x16xf32>, vector<8x16xf32>, vector<8x16xf32>, vector<8x16xf32>, vector<8x16xf32>, vector<8x16xf32>, vector<8x16xf32>, vector<8x16xf32> -> vector<8x256xf32>
    %c2_57 = arith.constant 2 : index
    %c0_58 = arith.constant 0 : index
    %c0_59 = arith.constant 0 : index
    %122 = vector.load %arg3[%c2_57, %c0_58, %c0_59] : memref<4x8x256xf32, #tpu.memory_space<vmem>>, vector<1x8x256xf32>
    %123 = vector.shape_cast %122 : vector<1x8x256xf32> to vector<8x256xf32>
    %124 = arith.addf %123, %121 : vector<8x256xf32>
    %125 = math.tanh %124 : vector<8x256xf32>
    %126 = arith.truncf %125 : vector<8x256xf32> to vector<8x256xbf16>
    %c2_60 = arith.constant 2 : index
    %c0_61 = arith.constant 0 : index
    %c0_62 = arith.constant 0 : index
    %127 = vector.load %arg7[%c2_60, %c0_61, %c0_62] : memref<4x256x16xbf16, #tpu.memory_space<vmem>>, vector<1x256x16xbf16>
    %128 = vector.shape_cast %127 : vector<1x256x16xbf16> to vector<256x16xbf16>
    %cst_63 = arith.constant dense<0.000000e+00> : vector<8x16xf32>
    %129 = tpu.matmul %126, %128, %cst_63 {dimension_numbers = #tpu.dot_dimension_numbers<[1], [0], [0], [1], [0, 0, 1, 1], [], []>} : vector<8x256xbf16>, vector<256x16xbf16>, vector<8x16xf32> -> vector<8x16xf32>
    %cst_64 = arith.constant dense<0xFF800000> : vector<8xf32>
    %130 = vector.multi_reduction <maximumf>, %129, %cst_64 [1] : vector<8x16xf32> to vector<8xf32>
    %131 = vector.shape_cast %130 : vector<8xf32> to vector<8x1xf32>
    %132 = vector.broadcast %131 : vector<8x1xf32> to vector<8x16xf32>
    %133 = arith.subf %129, %132 : vector<8x16xf32>
    %134 = math.exp %133 : vector<8x16xf32>
    %cst_65 = arith.constant dense<0.000000e+00> : vector<8xf32>
    %135 = vector.multi_reduction <add>, %134, %cst_65 [1] : vector<8x16xf32> to vector<8xf32>
    %136 = vector.shape_cast %135 : vector<8xf32> to vector<8x1xf32>
    %137 = tpu.reciprocal %136 {approx = true} : vector<8x1xf32> -> vector<8x1xf32>
    %138 = vector.broadcast %137 : vector<8x1xf32> to vector<8x16xf32>
    %139 = arith.mulf %134, %138 : vector<8x16xf32>
    %140 = vector.shape_cast %139 : vector<8x16xf32> to vector<8x1x16xf32>
    %141 = vector.broadcast %140 : vector<8x1x16xf32> to vector<8x32x16xf32>
    %142 = arith.mulf %5, %141 : vector<8x32x16xf32>
    %cst_66 = arith.constant dense<0.000000e+00> : vector<8x32xf32>
    %143 = vector.multi_reduction <add>, %142, %cst_66 [2] : vector<8x32x16xf32> to vector<8x32xf32>
    %144 = tpu.concatenate %112, %111, %143 in 1 : vector<8x32xf32>, vector<8x32xf32>, vector<8x32xf32> -> vector<8x96xf32>
    %145 = arith.truncf %144 : vector<8x96xf32> to vector<8x96xbf16>
    %c1_67 = arith.constant 1 : index
    %c0_68 = arith.constant 0 : index
    %c0_69 = arith.constant 0 : index
    %146 = vector.load %arg8[%c1_67, %c0_68, %c0_69] : memref<2x96x256xbf16, #tpu.memory_space<vmem>>, vector<1x96x256xbf16>
    %147 = vector.shape_cast %146 : vector<1x96x256xbf16> to vector<96x256xbf16>
    %cst_70 = arith.constant dense<0.000000e+00> : vector<8x256xf32>
    %148 = tpu.matmul %145, %147, %cst_70 {dimension_numbers = #tpu.dot_dimension_numbers<[1], [0], [0], [1], [0, 0, 1, 1], [], []>} : vector<8x96xbf16>, vector<96x256xbf16>, vector<8x256xf32> -> vector<8x256xf32>
    %c1_71 = arith.constant 1 : index
    %c0_72 = arith.constant 0 : index
    %c0_73 = arith.constant 0 : index
    %149 = vector.load %arg9[%c1_71, %c0_72, %c0_73] : memref<2x1x256xf32, #tpu.memory_space<vmem>>, vector<1x1x256xf32>
    %150 = vector.shape_cast %149 : vector<1x1x256xf32> to vector<1x256xf32>
    %151 = vector.broadcast %150 : vector<1x256xf32> to vector<8x256xf32>
    %152 = arith.addf %148, %151 : vector<8x256xf32>
    %153 = math.tanh %152 : vector<8x256xf32>
    %154 = tpu.iota {dimensions = array<i32: 1>} : vector<8x256xi32>
    %c192_i32_74 = arith.constant 192 : i32
    %155 = vector.broadcast %c192_i32_74 : i32 to vector<8x256xi32>
    %156 = arith.cmpi slt, %154, %155 : vector<8x256xi32>
    %cst_75 = arith.constant 5.000000e-01 : f32
    %157 = vector.broadcast %cst_75 : f32 to vector<8x256xf32>
    %158 = arith.mulf %157, %153 : vector<8x256xf32>
    %cst_76 = arith.constant 5.000000e-01 : f32
    %159 = vector.broadcast %cst_76 : f32 to vector<8x256xf32>
    %160 = arith.addf %158, %159 : vector<8x256xf32>
    %161 = arith.select %156, %160, %153 : vector<8x256xi1>, vector<8x256xf32>
    %162 = vector.extract_strided_slice %161 {offsets = [0, 0], sizes = [8, 64], strides = [1, 1]} : vector<8x256xf32> to vector<8x64xf32>
    %163 = vector.extract_strided_slice %161 {offsets = [0, 64], sizes = [8, 64], strides = [1, 1]} : vector<8x256xf32> to vector<8x64xf32>
    %164 = vector.extract_strided_slice %161 {offsets = [0, 128], sizes = [8, 64], strides = [1, 1]} : vector<8x256xf32> to vector<8x64xf32>
    %165 = vector.extract_strided_slice %161 {offsets = [0, 192], sizes = [8, 64], strides = [1, 1]} : vector<8x256xf32> to vector<8x64xf32>
    %166 = tpu.concatenate %110, %110 in 1 : vector<8x32xf32>, vector<8x32xf32> -> vector<8x64xf32>
    %167 = arith.mulf %163, %166 : vector<8x64xf32>
    %168 = arith.mulf %162, %165 : vector<8x64xf32>
    %169 = arith.addf %167, %168 : vector<8x64xf32>
    %170 = math.tanh %169 : vector<8x64xf32>
    %171 = arith.mulf %164, %170 : vector<8x64xf32>
    %172 = vector.extract_strided_slice %169 {offsets = [0, 0], sizes = [8, 32], strides = [1, 1]} : vector<8x64xf32> to vector<8x32xf32>
    %173 = vector.extract_strided_slice %171 {offsets = [0, 0], sizes = [8, 32], strides = [1, 1]} : vector<8x64xf32> to vector<8x32xf32>
    %174 = vector.extract_strided_slice %169 {offsets = [0, 32], sizes = [8, 32], strides = [1, 1]} : vector<8x64xf32> to vector<8x32xf32>
    %175 = arith.addf %172, %174 : vector<8x32xf32>
    %176 = vector.extract_strided_slice %171 {offsets = [0, 32], sizes = [8, 32], strides = [1, 1]} : vector<8x64xf32> to vector<8x32xf32>
    %177 = arith.addf %173, %176 : vector<8x32xf32>
    %cst_77 = arith.constant 5.000000e-01 : f32
    %178 = vector.broadcast %cst_77 : f32 to vector<8x32xf32>
    %179 = arith.mulf %175, %178 : vector<8x32xf32>
    %cst_78 = arith.constant 5.000000e-01 : f32
    %180 = vector.broadcast %cst_78 : f32 to vector<8x32xf32>
    %181 = arith.mulf %177, %180 : vector<8x32xf32>
    %182 = arith.truncf %181 : vector<8x32xf32> to vector<8x32xbf16>
    %c3 = arith.constant 3 : index
    %c0_79 = arith.constant 0 : index
    %c0_80 = arith.constant 0 : index
    %183 = vector.load %arg5[%c3, %c0_79, %c0_80] : memref<4x32x16xbf16, #tpu.memory_space<vmem>>, vector<1x32x16xbf16>
    %184 = vector.shape_cast %183 : vector<1x32x16xbf16> to vector<32x16xbf16>
    %cst_81 = arith.constant dense<0.000000e+00> : vector<8x16xf32>
    %185 = tpu.matmul %182, %184, %cst_81 {dimension_numbers = #tpu.dot_dimension_numbers<[1], [0], [0], [1], [0, 0, 1, 1], [], []>} : vector<8x32xbf16>, vector<32x16xbf16>, vector<8x16xf32> -> vector<8x16xf32>
    %c3_82 = arith.constant 3 : index
    %c0_83 = arith.constant 0 : index
    %c0_84 = arith.constant 0 : index
    %186 = vector.load %arg6[%c3_82, %c0_83, %c0_84] : memref<4x1x16xf32, #tpu.memory_space<vmem>>, vector<1x1x16xf32>
    %187 = vector.shape_cast %186 : vector<1x1x16xf32> to vector<1x16xf32>
    %188 = vector.broadcast %187 : vector<1x16xf32> to vector<8x16xf32>
    %189 = arith.addf %185, %188 : vector<8x16xf32>
    %190 = tpu.concatenate %189, %189, %189, %189, %189, %189, %189, %189, %189, %189, %189, %189, %189, %189, %189, %189 in 1 : vector<8x16xf32>, vector<8x16xf32>, vector<8x16xf32>, vector<8x16xf32>, vector<8x16xf32>, vector<8x16xf32>, vector<8x16xf32>, vector<8x16xf32>, vector<8x16xf32>, vector<8x16xf32>, vector<8x16xf32>, vector<8x16xf32>, vector<8x16xf32>, vector<8x16xf32>, vector<8x16xf32>, vector<8x16xf32> -> vector<8x256xf32>
    %c3_85 = arith.constant 3 : index
    %c0_86 = arith.constant 0 : index
    %c0_87 = arith.constant 0 : index
    %191 = vector.load %arg3[%c3_85, %c0_86, %c0_87] : memref<4x8x256xf32, #tpu.memory_space<vmem>>, vector<1x8x256xf32>
    %192 = vector.shape_cast %191 : vector<1x8x256xf32> to vector<8x256xf32>
    %193 = arith.addf %192, %190 : vector<8x256xf32>
    %194 = math.tanh %193 : vector<8x256xf32>
    %195 = arith.truncf %194 : vector<8x256xf32> to vector<8x256xbf16>
    %c3_88 = arith.constant 3 : index
    %c0_89 = arith.constant 0 : index
    %c0_90 = arith.constant 0 : index
    %196 = vector.load %arg7[%c3_88, %c0_89, %c0_90] : memref<4x256x16xbf16, #tpu.memory_space<vmem>>, vector<1x256x16xbf16>
    %197 = vector.shape_cast %196 : vector<1x256x16xbf16> to vector<256x16xbf16>
    %cst_91 = arith.constant dense<0.000000e+00> : vector<8x16xf32>
    %198 = tpu.matmul %195, %197, %cst_91 {dimension_numbers = #tpu.dot_dimension_numbers<[1], [0], [0], [1], [0, 0, 1, 1], [], []>} : vector<8x256xbf16>, vector<256x16xbf16>, vector<8x16xf32> -> vector<8x16xf32>
    %cst_92 = arith.constant dense<0xFF800000> : vector<8xf32>
    %199 = vector.multi_reduction <maximumf>, %198, %cst_92 [1] : vector<8x16xf32> to vector<8xf32>
    %200 = vector.shape_cast %199 : vector<8xf32> to vector<8x1xf32>
    %201 = vector.broadcast %200 : vector<8x1xf32> to vector<8x16xf32>
    %202 = arith.subf %198, %201 : vector<8x16xf32>
    %203 = math.exp %202 : vector<8x16xf32>
    %cst_93 = arith.constant dense<0.000000e+00> : vector<8xf32>
    %204 = vector.multi_reduction <add>, %203, %cst_93 [1] : vector<8x16xf32> to vector<8xf32>
    %205 = vector.shape_cast %204 : vector<8xf32> to vector<8x1xf32>
    %206 = tpu.reciprocal %205 {approx = true} : vector<8x1xf32> -> vector<8x1xf32>
    %207 = vector.broadcast %206 : vector<8x1xf32> to vector<8x16xf32>
    %208 = arith.mulf %203, %207 : vector<8x16xf32>
    %209 = vector.shape_cast %208 : vector<8x16xf32> to vector<8x1x16xf32>
    %210 = vector.broadcast %209 : vector<8x1x16xf32> to vector<8x32x16xf32>
    %211 = arith.mulf %5, %210 : vector<8x32x16xf32>
    %cst_94 = arith.constant dense<0.000000e+00> : vector<8x32xf32>
    %212 = vector.multi_reduction <add>, %211, %cst_94 [2] : vector<8x32x16xf32> to vector<8x32xf32>
    %213 = arith.addf %212, %181 : vector<8x32xf32>
    %214 = tpu.concatenate %75, %109, %179, %213 in 1 : vector<8x32xf32>, vector<8x32xf32>, vector<8x32xf32>, vector<8x32xf32> -> vector<8x128xf32>
    %c0_95 = arith.constant 0 : index
    %c0_96 = arith.constant 0 : index
    %215 = vector.load %arg14[%c0_95, %c0_96] : memref<8x128xf32, #tpu.memory_space<vmem>>, vector<8x128xf32>
    tpu.vector_store %arg14[%c0_95, %c0_96], %214 {strides = array<i32>} : memref<8x128xf32, #tpu.memory_space<vmem>>, vector<8x128xf32>,
    %c0_97 = arith.constant 0 : index
    %c0_98 = arith.constant 0 : index
    %c0_99 = arith.constant 0 : index
    %216 = vector.load %arg12[%c0_97, %c0_98, %c0_99] : memref<1x8x128xf32, #tpu.memory_space<vmem>>, vector<1x8x128xf32>
    %217 = vector.shape_cast %216 : vector<1x8x128xf32> to vector<8x128xf32>
    %218 = vector.shape_cast %214 : vector<8x128xf32> to vector<1x8x128xf32>
    tpu.vector_store %arg12[%c0_97, %c0_98, %c0_99], %218 {strides = array<i32>} : memref<1x8x128xf32, #tpu.memory_space<vmem>>, vector<1x8x128xf32>,
    %219 = arith.truncf %213 : vector<8x32xf32> to vector<8x32xbf16>
    %c0_100 = arith.constant 0 : index
    %c0_101 = arith.constant 0 : index
    %220 = vector.load %arg10[%c0_100, %c0_101] : memref<32x128xbf16, #tpu.memory_space<vmem>>, vector<32x128xbf16>
    %cst_102 = arith.constant dense<0.000000e+00> : vector<8x128xf32>
    %221 = tpu.matmul %219, %220, %cst_102 {dimension_numbers = #tpu.dot_dimension_numbers<[1], [0], [0], [1], [0, 0, 1, 1], [], []>} : vector<8x32xbf16>, vector<32x128xbf16>, vector<8x128xf32> -> vector<8x128xf32>
    %c0_103 = arith.constant 0 : index
    %c0_104 = arith.constant 0 : index
    %222 = vector.load %arg11[%c0_103, %c0_104] : memref<1x128xf32, #tpu.memory_space<vmem>>, vector<1x128xf32>
    %223 = vector.broadcast %222 : vector<1x128xf32> to vector<8x128xf32>
    %224 = arith.addf %221, %223 : vector<8x128xf32>
    %cst_105 = arith.constant dense<0xFF800000> : vector<8xf32>
    %225 = vector.multi_reduction <maximumf>, %224, %cst_105 [1] : vector<8x128xf32> to vector<8xf32>
    %226 = vector.shape_cast %225 : vector<8xf32> to vector<8x1xf32>
    %227 = vector.broadcast %226 : vector<8x1xf32> to vector<8x128xf32>
    %228 = arith.subf %224, %227 : vector<8x128xf32>
    %229 = math.exp %228 : vector<8x128xf32>
    %cst_106 = arith.constant dense<0.000000e+00> : vector<8xf32>
    %230 = vector.multi_reduction <add>, %229, %cst_106 [1] : vector<8x128xf32> to vector<8xf32>
    %231 = vector.shape_cast %230 : vector<8xf32> to vector<8x1xf32>
    %232 = math.log %231 : vector<8x1xf32>
    %233 = vector.broadcast %232 : vector<8x1xf32> to vector<8x128xf32>
    %234 = arith.subf %228, %233 : vector<8x128xf32>
    %c0_107 = arith.constant 0 : index
    %c0_108 = arith.constant 0 : index
    %c0_109 = arith.constant 0 : index
    %235 = vector.load %arg13[%c0_107, %c0_108, %c0_109] : memref<1x8x128xf32, #tpu.memory_space<vmem>>, vector<1x8x128xf32>
    %236 = vector.shape_cast %235 : vector<1x8x128xf32> to vector<8x128xf32>
    %237 = vector.shape_cast %234 : vector<8x128xf32> to vector<1x8x128xf32>
    tpu.vector_store %arg13[%c0_107, %c0_108, %c0_109], %237 {strides = array<i32>} : memref<1x8x128xf32, #tpu.memory_space<vmem>>, vector<1x8x128xf32>,
    return
  }
  func.func @transform_0(%arg0: i32) -> (i32, i32, i32) {
    %c0_i32 = arith.constant 0 : i32
    %c0_i32_0 = arith.constant 0 : i32
    %c0_i32_1 = arith.constant 0 : i32
    return %arg0, %c0_i32, %c0_i32_0 : i32, i32, i32
  }
  func.func @transform_1(%arg0: i32) -> (i32, i32, i32) {
    %c0_i32 = arith.constant 0 : i32
    %c0_i32_0 = arith.constant 0 : i32
    %c0_i32_1 = arith.constant 0 : i32
    %c0_i32_2 = arith.constant 0 : i32
    return %c0_i32, %c0_i32_0, %c0_i32_1 : i32, i32, i32
  }
  func.func @transform_2(%arg0: i32) -> (i32, i32, i32) {
    %c0_i32 = arith.constant 0 : i32
    %c0_i32_0 = arith.constant 0 : i32
    %c0_i32_1 = arith.constant 0 : i32
    %c0_i32_2 = arith.constant 0 : i32
    return %c0_i32, %c0_i32_0, %c0_i32_1 : i32, i32, i32
  }
  func.func @transform_3(%arg0: i32) -> (i32, i32) {
    %c0_i32 = arith.constant 0 : i32
    %c0_i32_0 = arith.constant 0 : i32
    %c0_i32_1 = arith.constant 0 : i32
    return %c0_i32, %c0_i32_0 : i32, i32
  }
  func.func @transform_4(%arg0: i32) -> (i32, i32, i32) {
    %c0_i32 = arith.constant 0 : i32
    %c0_i32_0 = arith.constant 0 : i32
    %c0_i32_1 = arith.constant 0 : i32
    %c0_i32_2 = arith.constant 0 : i32
    return %c0_i32, %c0_i32_0, %c0_i32_1 : i32, i32, i32
  }
  func.func @transform_5(%arg0: i32) -> (i32, i32, i32) {
    %c0_i32 = arith.constant 0 : i32
    %c0_i32_0 = arith.constant 0 : i32
    %c0_i32_1 = arith.constant 0 : i32
    %c0_i32_2 = arith.constant 0 : i32
    return %c0_i32, %c0_i32_0, %c0_i32_1 : i32, i32, i32
  }
  func.func @transform_6(%arg0: i32) -> (i32, i32, i32) {
    %c0_i32 = arith.constant 0 : i32
    %c0_i32_0 = arith.constant 0 : i32
    %c0_i32_1 = arith.constant 0 : i32
    %c0_i32_2 = arith.constant 0 : i32
    return %c0_i32, %c0_i32_0, %c0_i32_1 : i32, i32, i32
  }
  func.func @transform_7(%arg0: i32) -> (i32, i32, i32) {
    %c0_i32 = arith.constant 0 : i32
    %c0_i32_0 = arith.constant 0 : i32
    %c0_i32_1 = arith.constant 0 : i32
    %c0_i32_2 = arith.constant 0 : i32
    return %c0_i32, %c0_i32_0, %c0_i32_1 : i32, i32, i32
  }
  func.func @transform_8(%arg0: i32) -> (i32, i32, i32) {
    %c0_i32 = arith.constant 0 : i32
    %c0_i32_0 = arith.constant 0 : i32
    %c0_i32_1 = arith.constant 0 : i32
    %c0_i32_2 = arith.constant 0 : i32
    return %c0_i32, %c0_i32_0, %c0_i32_1 : i32, i32, i32
  }
  func.func @transform_9(%arg0: i32) -> (i32, i32) {
    %c0_i32 = arith.constant 0 : i32
    %c0_i32_0 = arith.constant 0 : i32
    %c0_i32_1 = arith.constant 0 : i32
    return %c0_i32, %c0_i32_0 : i32, i32
  }
  func.func @transform_10(%arg0: i32) -> (i32, i32) {
    %c0_i32 = arith.constant 0 : i32
    %c0_i32_0 = arith.constant 0 : i32
    %c0_i32_1 = arith.constant 0 : i32
    return %c0_i32, %c0_i32_0 : i32, i32
  }
  func.func @transform_11(%arg0: i32) -> (i32, i32, i32) {
    %c0_i32 = arith.constant 0 : i32
    %c0_i32_0 = arith.constant 0 : i32
    %c0_i32_1 = arith.constant 0 : i32
    return %arg0, %c0_i32, %c0_i32_0 : i32, i32, i32
  }
  func.func @transform_12(%arg0: i32) -> (i32, i32, i32) {
    %c0_i32 = arith.constant 0 : i32
    %c0_i32_0 = arith.constant 0 : i32
    %c0_i32_1 = arith.constant 0 : i32
    return %arg0, %c0_i32, %c0_i32_0 : i32, i32, i32
  }
}

</mosaic_0001>

<llo_original>
// kernel: lstm_double_att_forward.1
$region0: #{lstm_double_att_forward.1}
  #allocation0 [shape = 'u32[]', space=smem, size = 0x4, offset = 0x4, fixed_abs, tag = 'smem constant byte address 0x4 - core index']
  #allocation1 [shape = 'u32[144,128]{1,0:T(1,128)}', space=vmem, size = 0x12000, scoped, tag = 'internal scratch']
  #allocation2 [shape = 'f32[8,128]{1,0:T(8,128)}', space=vmem, size = 0x1000, scoped, tag = 'scratch operand']
  %s0 = inlined_call_operand.vmem [shape: f32[1,8,32], index: 0, kind: input, shape index: {}]
  %s1 = inlined_call_operand.vmem [shape: f32[8,32,16], index: 1, kind: input, shape index: {}]
  %s2 = inlined_call_operand.vmem [shape: f32[4,8,256], index: 2, kind: input, shape index: {}]
  %s3 = inlined_call_operand.vmem [shape: f32[8,128], index: 3, kind: input, shape index: {}]
  %s4 = inlined_call_operand.vmem [shape: bf16[4,32,16], index: 4, kind: input, shape index: {}]
  %s5 = inlined_call_operand.vmem [shape: f32[4,1,16], index: 5, kind: input, shape index: {}]
  %s6 = inlined_call_operand.vmem [shape: bf16[4,256,16], index: 6, kind: input, shape index: {}]
  %s7 = inlined_call_operand.vmem [shape: bf16[2,96,256], index: 7, kind: input, shape index: {}]
  %s8 = inlined_call_operand.vmem [shape: f32[2,1,256], index: 8, kind: input, shape index: {}]
  %s9 = inlined_call_operand.vmem [shape: bf16[32,128], index: 9, kind: input, shape index: {}]
  %s10 = inlined_call_operand.vmem [shape: f32[1,128], index: 10, kind: input, shape index: {}]
  %s11 = inlined_call_operand.vmem [shape: f32[1,8,128], index: 11, kind: output, shape index: {0}]
  %s12 = inlined_call_operand.vmem [shape: f32[1,8,128], index: 12, kind: output, shape index: {1}]
  %13 = xla_tuple %s11, %s12
  %s14 = sld [smem:[#allocation0]]
  $region66: #{lstm_double_att_forward.1} parent=0
    _
  %s16 = ssub.s32 1, %s14
  %s17 = scalar_select 0, %s16, %s14
  // Predicated region
  $region2: #{lstm_double_att_forward.1} parent=0 // pred_check
    _
  $region3: #{lstm_double_att_forward.1} parent=0 // pred_check_branch
    %19 = sbr.rel (0) target = $region5
  $region4: #{lstm_double_att_forward.1} parent=0 // pred_region
    _
  $region5: #{lstm_double_att_forward.1} parent=0 // pred_fallthru
    _
  // Predicated region
  $region6: #{lstm_double_att_forward.1} parent=0 // pred_check
    _
  $region7: #{lstm_double_att_forward.1} parent=0 // pred_check_branch
    %21 = sbr.rel (0) target = $region9
  $region8: #{lstm_double_att_forward.1} parent=0 // pred_region
    _
  $region9: #{lstm_double_att_forward.1} parent=0 // pred_fallthru
    _
  // Predicated region
  $region10: #{lstm_double_att_forward.1} parent=0 // pred_check
    _
  $region11: #{lstm_double_att_forward.1} parent=0 // pred_check_branch
    %23 = sbr.rel (0) target = $region13
  $region12: #{lstm_double_att_forward.1} parent=0 // pred_region
    _
  $region13: #{lstm_double_att_forward.1} parent=0 // pred_fallthru
    _
  // Predicated region
  $region14: #{lstm_double_att_forward.1} parent=0 // pred_check
    _
  $region15: #{lstm_double_att_forward.1} parent=0 // pred_check_branch
    %25 = sbr.rel (0) target = $region17
  $region16: #{lstm_double_att_forward.1} parent=0 // pred_region
    _
  $region17: #{lstm_double_att_forward.1} parent=0 // pred_fallthru
    _
  // Predicated region
  $region18: #{lstm_double_att_forward.1} parent=0 // pred_check
    _
  $region19: #{lstm_double_att_forward.1} parent=0 // pred_check_branch
    %27 = sbr.rel (0) target = $region21
  $region20: #{lstm_double_att_forward.1} parent=0 // pred_region
    _
  $region21: #{lstm_double_att_forward.1} parent=0 // pred_fallthru
    _
  // Predicated region
  $region22: #{lstm_double_att_forward.1} parent=0 // pred_check
    _
  $region23: #{lstm_double_att_forward.1} parent=0 // pred_check_branch
    %29 = sbr.rel (0) target = $region25
  $region24: #{lstm_double_att_forward.1} parent=0 // pred_region
    _
  $region25: #{lstm_double_att_forward.1} parent=0 // pred_fallthru
    _
  // Predicated region
  $region26: #{lstm_double_att_forward.1} parent=0 // pred_check
    _
  $region27: #{lstm_double_att_forward.1} parent=0 // pred_check_branch
    %31 = sbr.rel (0) target = $region29
  $region28: #{lstm_double_att_forward.1} parent=0 // pred_region
    _
  $region29: #{lstm_double_att_forward.1} parent=0 // pred_fallthru
    _
  // Predicated region
  $region30: #{lstm_double_att_forward.1} parent=0 // pred_check
    _
  $region31: #{lstm_double_att_forward.1} parent=0 // pred_check_branch
    %33 = sbr.rel (0) target = $region33
  $region32: #{lstm_double_att_forward.1} parent=0 // pred_region
    _
  $region33: #{lstm_double_att_forward.1} parent=0 // pred_fallthru
    _
  // Predicated region
  $region34: #{lstm_double_att_forward.1} parent=0 // pred_check
    _
  $region35: #{lstm_double_att_forward.1} parent=0 // pred_check_branch
    %35 = sbr.rel (0) target = $region37
  $region36: #{lstm_double_att_forward.1} parent=0 // pred_region
    _
  $region37: #{lstm_double_att_forward.1} parent=0 // pred_fallthru
    _
  // Predicated region
  $region38: #{lstm_double_att_forward.1} parent=0 // pred_check
    _
  $region39: #{lstm_double_att_forward.1} parent=0 // pred_check_branch
    %37 = sbr.rel (0) target = $region41
  $region40: #{lstm_double_att_forward.1} parent=0 // pred_region
    _
  $region41: #{lstm_double_att_forward.1} parent=0 // pred_fallthru
    _
  // Predicated region
  $region42: #{lstm_double_att_forward.1} parent=0 // pred_check
    _
  $region43: #{lstm_double_att_forward.1} parent=0 // pred_check_branch
    %39 = sbr.rel (0) target = $region45
  $region44: #{lstm_double_att_forward.1} parent=0 // pred_region
    _
  $region45: #{lstm_double_att_forward.1} parent=0 // pred_fallthru
    _
  %p41 = scmp.eq.s32.totalorder 0, 0
  // Predicated region
  $region46: #{lstm_double_att_forward.1} parent=0 // pred_check
    %p42 = pneg %p41
  $region47: #{lstm_double_att_forward.1} parent=0 // pred_check_branch
    %44 = sbr.rel (%p42) target = $region49
  $region48: #{lstm_double_att_forward.1} parent=0 // pred_region
    %v45 = vld [vmem:[%s3] sm:$0xff]
    %46 = vst [vmem:[#allocation2] sm:$0xff] %v45
  $region49: #{lstm_double_att_forward.1} parent=0 // pred_fallthru
    _
  %v47 = vld [vmem:[%s0] sm:$0xff]
  %v48 = vld [vmem:[%s1] sm:$0xff]
  %v49 = vld [vmem:[%s1 + $0x8] sm:$0xff]
  %v50 = vld [vmem:[%s1 + $0x10] sm:$0xff]
  %v51 = vld [vmem:[%s1 + $0x18] sm:$0xff]
  %v52 = vld [vmem:[%s1 + $0x20] sm:$0xff]
  %v53 = vld [vmem:[%s1 + $0x28] sm:$0xff]
  %v54 = vld [vmem:[%s1 + $0x30] sm:$0xff]
  %v55 = vld [vmem:[%s1 + $0x38] sm:$0xff]
  %v56 = vld [vmem:[%s1 + $0x40] sm:$0xff]
  %v57 = vld [vmem:[%s1 + $0x48] sm:$0xff]
  %v58 = vld [vmem:[%s1 + $0x50] sm:$0xff]
  %v59 = vld [vmem:[%s1 + $0x58] sm:$0xff]
  %v60 = vld [vmem:[%s1 + $0x60] sm:$0xff]
  %v61 = vld [vmem:[%s1 + $0x68] sm:$0xff]
  %v62 = vld [vmem:[%s1 + $0x70] sm:$0xff]
  %v63 = vld [vmem:[%s1 + $0x78] sm:$0xff]
  %v64 = vld [vmem:[%s1 + $0x80] sm:$0xff]
  %v65 = vld [vmem:[%s1 + $0x88] sm:$0xff]
  %v66 = vld [vmem:[%s1 + $0x90] sm:$0xff]
  %v67 = vld [vmem:[%s1 + $0x98] sm:$0xff]
  %v68 = vld [vmem:[%s1 + $0xa0] sm:$0xff]
  %v69 = vld [vmem:[%s1 + $0xa8] sm:$0xff]
  %v70 = vld [vmem:[%s1 + $0xb0] sm:$0xff]
  %v71 = vld [vmem:[%s1 + $0xb8] sm:$0xff]
  %v72 = vld [vmem:[%s1 + $0xc0] sm:$0xff]
  %v73 = vld [vmem:[%s1 + $0xc8] sm:$0xff]
  %v74 = vld [vmem:[%s1 + $0xd0] sm:$0xff]
  %v75 = vld [vmem:[%s1 + $0xd8] sm:$0xff]
  %v76 = vld [vmem:[%s1 + $0xe0] sm:$0xff]
  %v77 = vld [vmem:[%s1 + $0xe8] sm:$0xff]
  %v78 = vld [vmem:[%s1 + $0xf0] sm:$0xff]
  %v79 = vld [vmem:[%s1 + $0xf8] sm:$0xff]
  %v80 = vld [vmem:[#allocation2] sm:$0xff]
  %v81 = vpack.c.bf16 %v80, %v80
  %v82 = vld [vmem:[%s4] sm:$0xf]
  %v83 = vld [vmem:[%s4 + $0x4] sm:$0xf]
  %v84 = vld [vmem:[%s4 + $0x8] sm:$0xf]
  %v85 = vld [vmem:[%s4 + $0xc] sm:$0xf]
  %v86 = vld [vmem:[%s5] sm:$0x1]
  %v88 = vlaneseq
  %v89 = vshrl.u32 %v88, 7
  %v90 = vsub.s32 0, %v89
  %v91 = vrot.slane %v86, %v90
  %94 = vrot.lane.b32.xlu0 %v81, 96
  %v95 = vpop.permute.xlu0 %94
  %v100 = vunpack.c.l.b16 %v82
  %v101 = vunpack.c.l.b16 %v83
  %v102 = vunpack.c.l.b16 %v84
  %v103 = vunpack.c.l.b16 %v85
  %v104 = vpack.c.b16 %v101, %v100
  %v105 = vpack.c.b16 %v103, %v102
  %vm108 = vcmask 261120
  %v110 = vsel %vm108, %v95, 0
  %112 = vmatprep.subr.bf16.mxu0 0
  %113 = vmatpush1.bf16.msra.mxu0 0
  %114 = vmatprep.subr.bf16.mxu0 0
  %115 = vmatpush1.bf16.msra.mxu0 0
  %116 = vmatprep.subr.bf16.mxu0 0
  %117 = vmatpush1.bf16.msra.mxu0 0
  %118 = vmatprep.subr.bf16.mxu0 0
  %119 = vmatpush1.bf16.msra.mxu0 0
  %120 = vmatprep.subr.bf16.mxu0 0
  %121 = vmatpush1.bf16.msra.mxu0 0
  %122 = vmatprep.subr.bf16.mxu0 0
  %123 = vmatpush1.bf16.msra.mxu0 0
  %124 = vmatprep.subr.bf16.mxu0 0
  %125 = vmatpush1.bf16.msra.mxu0 %v105
  %126 = vmatprep.subr.bf16.mxu0 0
  %127 = vmatpush1.bf16.msra.mxu0 %v104
  %128 = vmatprep.subr.bf16.mxu0 0
  %129 = vmatpush2.bf16.msra.mxu0 0
  %130 = vmatprep.subr.bf16.mxu0 0
  %131 = vmatpush2.bf16.msra.mxu0 0
  %132 = vmatprep.subr.bf16.mxu0 0
  %133 = vmatpush2.bf16.msra.mxu0 0
  %134 = vmatprep.subr.bf16.mxu0 0
  %135 = vmatpush2.bf16.msra.mxu0 0
  %136 = vmatprep.subr.bf16.mxu0 0
  %137 = vmatpush2.bf16.msra.mxu0 0
  %138 = vmatprep.subr.bf16.mxu0 0
  %139 = vmatpush2.bf16.msra.mxu0 0
  %140 = vmatprep.subr.bf16.mxu0 0
  %141 = vmatpush2.bf16.msra.mxu0 0
  %142 = vmatprep.subr.bf16.mxu0 0
  %143 = vmatpush2.bf16.msra.mxu0 0
  %144 = vmatprep.mubr.bf16.mxu0 0
  %145 = vmatmul.mubr.bf16.gmra.mxu0 %v110
  %v146 = vpop.f32.mrf.mxu0
  %v147 = vadd.f32 %v91, %v146
  %v148 = vpop.f32.mrf.mxu0
  %v149 = vpop.f32.mrf.mxu0
  %v150 = vpop.f32.mrf.mxu0
  %151 = vdwg.mxu0
  %153 = vrot.lane.b32.xlu0 %v147, 16
  %v154 = vpop.permute.xlu0 %153
  %156 = vrot.lane.b32.xlu0 %v147, 32
  %v157 = vpop.permute.xlu0 %156
  %159 = vrot.lane.b32.xlu0 %v147, 48
  %v160 = vpop.permute.xlu0 %159
  %162 = vrot.lane.b32.xlu0 %v147, 64
  %v163 = vpop.permute.xlu0 %162
  %165 = vrot.lane.b32.xlu0 %v147, 80
  %v166 = vpop.permute.xlu0 %165
  %168 = vrot.lane.b32.xlu0 %v147, 96
  %v169 = vpop.permute.xlu0 %168
  %171 = vrot.lane.b32.xlu0 %v147, 112
  %v172 = vpop.permute.xlu0 %171
  %vm174 = vcmask 130048
  %v175 = vsel %vm174, %v147, %v154
  %v176 = vsel %vm108, %v175, %v157
  %vm177 = vcmask 392192
  %v178 = vsel %vm177, %v176, %v160
  %vm179 = vcmask 523264
  %v180 = vsel %vm179, %v178, %v163
  %vm181 = vcmask 654336
  %v182 = vsel %vm181, %v180, %v166
  %vm183 = vcmask 785408
  %v184 = vsel %vm183, %v182, %v169
  %vm185 = vcmask 916480
  %v186 = vsel %vm185, %v184, %v172
  %v187 = vld [vmem:[%s2] sm:$0xff]
  %v188 = vld [vmem:[%s2 + $0x8] sm:$0xff]
  %v189 = vadd.f32 %v187, %v186
  %v190 = vadd.f32 %v188, %v186
  %v191 = vtanh.pop %v189
  %v192 = vtanh.pop %v190
  %v193 = vpack.c.bf16 %v191, %v191
  %v194 = vpack.c.bf16 %v192, %v192
  %v195 = vld [vmem:[%s6] sm:$0xf]
  %v196 = vld [vmem:[%s6 + $0x4] sm:$0xf]
  %v197 = vld [vmem:[%s6 + $0x8] sm:$0xf]
  %v198 = vld [vmem:[%s6 + $0xc] sm:$0xf]
  %v199 = vld [vmem:[%s6 + $0x10] sm:$0xf]
  %v200 = vld [vmem:[%s6 + $0x14] sm:$0xf]
  %v201 = vld [vmem:[%s6 + $0x18] sm:$0xf]
  %v202 = vld [vmem:[%s6 + $0x1c] sm:$0xf]
  %v203 = vld [vmem:[%s6 + $0x20] sm:$0xf]
  %v204 = vld [vmem:[%s6 + $0x24] sm:$0xf]
  %v205 = vld [vmem:[%s6 + $0x28] sm:$0xf]
  %v206 = vld [vmem:[%s6 + $0x2c] sm:$0xf]
  %v207 = vld [vmem:[%s6 + $0x30] sm:$0xf]
  %v208 = vld [vmem:[%s6 + $0x34] sm:$0xf]
  %v209 = vld [vmem:[%s6 + $0x38] sm:$0xf]
  %v210 = vld [vmem:[%s6 + $0x3c] sm:$0xf]
  %v211 = vld [vmem:[%s6 + $0x40] sm:$0xf]
  %v212 = vld [vmem:[%s6 + $0x44] sm:$0xf]
  %v213 = vld [vmem:[%s6 + $0x48] sm:$0xf]
  %v214 = vld [vmem:[%s6 + $0x4c] sm:$0xf]
  %v215 = vld [vmem:[%s6 + $0x50] sm:$0xf]
  %v216 = vld [vmem:[%s6 + $0x54] sm:$0xf]
  %v217 = vld [vmem:[%s6 + $0x58] sm:$0xf]
  %v218 = vld [vmem:[%s6 + $0x5c] sm:$0xf]
  %v219 = vld [vmem:[%s6 + $0x60] sm:$0xf]
  %v220 = vld [vmem:[%s6 + $0x64] sm:$0xf]
  %v221 = vld [vmem:[%s6 + $0x68] sm:$0xf]
  %v222 = vld [vmem:[%s6 + $0x6c] sm:$0xf]
  %v223 = vld [vmem:[%s6 + $0x70] sm:$0xf]
  %v224 = vld [vmem:[%s6 + $0x74] sm:$0xf]
  %v225 = vld [vmem:[%s6 + $0x78] sm:$0xf]
  %v226 = vld [vmem:[%s6 + $0x7c] sm:$0xf]
  %v259 = vunpack.c.l.b16 %v195
  %v260 = vunpack.c.l.b16 %v196
  %v261 = vunpack.c.l.b16 %v197
  %v262 = vunpack.c.l.b16 %v198
  %v263 = vunpack.c.l.b16 %v199
  %v264 = vunpack.c.l.b16 %v200
  %v265 = vunpack.c.l.b16 %v201
  %v266 = vunpack.c.l.b16 %v202
  %v267 = vunpack.c.l.b16 %v203
  %v268 = vunpack.c.l.b16 %v204
  %v269 = vunpack.c.l.b16 %v205
  %v270 = vunpack.c.l.b16 %v206
  %v271 = vunpack.c.l.b16 %v207
  %v272 = vunpack.c.l.b16 %v208
  %v273 = vunpack.c.l.b16 %v209
  %v274 = vunpack.c.l.b16 %v210
  %v275 = vunpack.c.l.b16 %v211
  %v276 = vunpack.c.l.b16 %v212
  %v277 = vunpack.c.l.b16 %v213
  %v278 = vunpack.c.l.b16 %v214
  %v279 = vunpack.c.l.b16 %v215
  %v280 = vunpack.c.l.b16 %v216
  %v281 = vunpack.c.l.b16 %v217
  %v282 = vunpack.c.l.b16 %v218
  %v283 = vunpack.c.l.b16 %v219
  %v284 = vunpack.c.l.b16 %v220
  %v285 = vunpack.c.l.b16 %v221
  %v286 = vunpack.c.l.b16 %v222
  %v287 = vunpack.c.l.b16 %v223
  %v288 = vunpack.c.l.b16 %v224
  %v289 = vunpack.c.l.b16 %v225
  %v290 = vunpack.c.l.b16 %v226
  %v291 = vpack.c.b16 %v260, %v259
  %v292 = vpack.c.b16 %v262, %v261
  %v293 = vpack.c.b16 %v264, %v263
  %v294 = vpack.c.b16 %v266, %v265
  %v295 = vpack.c.b16 %v268, %v267
  %v296 = vpack.c.b16 %v270, %v269
  %v297 = vpack.c.b16 %v272, %v271
  %v298 = vpack.c.b16 %v274, %v273
  %v299 = vpack.c.b16 %v276, %v275
  %v300 = vpack.c.b16 %v278, %v277
  %v301 = vpack.c.b16 %v280, %v279
  %v302 = vpack.c.b16 %v282, %v281
  %v303 = vpack.c.b16 %v284, %v283
  %v304 = vpack.c.b16 %v286, %v285
  %v305 = vpack.c.b16 %v288, %v287
  %v306 = vpack.c.b16 %v290, %v289
  %323 = vmatprep.subr.bf16.mxu0 0
  %324 = vmatpush1.bf16.msra.mxu0 %v298
  %325 = vmatprep.subr.bf16.mxu0 0
  %326 = vmatpush1.bf16.msra.mxu0 %v297
  %327 = vmatprep.subr.bf16.mxu0 0
  %328 = vmatpush1.bf16.msra.mxu0 %v296
  %329 = vmatprep.subr.bf16.mxu0 0
  %330 = vmatpush1.bf16.msra.mxu0 %v295
  %331 = vmatprep.subr.bf16.mxu0 0
  %332 = vmatpush1.bf16.msra.mxu0 %v294
  %333 = vmatprep.subr.bf16.mxu0 0
  %334 = vmatpush1.bf16.msra.mxu0 %v293
  %335 = vmatprep.subr.bf16.mxu0 0
  %336 = vmatpush1.bf16.msra.mxu0 %v292
  %337 = vmatprep.subr.bf16.mxu0 0
  %338 = vmatpush1.bf16.msra.mxu0 %v291
  %339 = vmatprep.subr.bf16.mxu0 0
  %340 = vmatpush2.bf16.msra.mxu0 %v306
  %341 = vmatprep.subr.bf16.mxu0 0
  %342 = vmatpush2.bf16.msra.mxu0 %v305
  %343 = vmatprep.subr.bf16.mxu0 0
  %344 = vmatpush2.bf16.msra.mxu0 %v304
  %345 = vmatprep.subr.bf16.mxu0 0
  %346 = vmatpush2.bf16.msra.mxu0 %v303
  %347 = vmatprep.subr.bf16.mxu0 0
  %348 = vmatpush2.bf16.msra.mxu0 %v302
  %349 = vmatprep.subr.bf16.mxu0 0
  %350 = vmatpush2.bf16.msra.mxu0 %v301
  %351 = vmatprep.subr.bf16.mxu0 0
  %352 = vmatpush2.bf16.msra.mxu0 %v300
  %353 = vmatprep.subr.bf16.mxu0 0
  %354 = vmatpush2.bf16.msra.mxu0 %v299
  %355 = vmatprep.mubr.bf16.mxu0 %v194
  %356 = vmatmul.mubr.bf16.gmra.mxu0 %v193
  %v357 = vpop.f32.mrf.mxu0
  %v358 = vadd.f32 0.0, %v357
  %v359 = vpop.f32.mrf.mxu0
  %v360 = vpop.f32.mrf.mxu0
  %v361 = vpop.f32.mrf.mxu0
  %362 = vdwg.mxu0
  %v363 = vsel %vm174, %v358, -inf
  %364 = vmax.xlane.f32.xlu0 %v363
  %v365 = vpop.xlane.xlu0 %364
  %v366 = vsub.f32 %v358, %v365
  %v367 = vmul.f32 %v366, 1.442695
  %v368 = vpow.pop %v367
  %v369 = vsel %vm174, %v368, 0.0
  %370 = vadd.xlane.f32.xlu0 %v369
  %v371 = vpop.xlane.xlu0 %370
  %v372 = vrcp.pop %v371
  %v373 = vmul.f32 %v368, %v372
  %v375 = vcombine.high %v373, %v373
  %v377 = vunpack.c.l.s4 1966171168
  %v378 = vunpack.c.0.s8 %v377
  %v379 = vlaneseq
  %v380 = vshrl.u32 %v379, 7
  %v381 = vsub.s32 %v378, %v380
  %v382 = vrot.slane %v373, %v381
  %v384 = vunpack.c.l.s4 1966171168
  %v385 = vunpack.c.0.s8 %v384
  %v386 = vlaneseq
  %v387 = vshrl.u32 %v386, 7
  %v388 = vsub.s32 %v385, %v387
  %v389 = vrot.slane %v375, %v388
  %v390 = vcombine.high %v382, %v382
  %v391 = vcombine.high %v389, %v389
  %v393 = vunpack.c.l.s4 1966171168
  %v394 = vunpack.c.0.s8 %v393
  %v395 = vlaneseq
  %v396 = vshrl.u32 %v395, 7
  %v397 = vsub.s32 %v394, %v396
  %v398 = vrot.slane %v382, %v397
  %v400 = vunpack.c.l.s4 1966171168
  %v401 = vunpack.c.0.s8 %v400
  %v402 = vlaneseq
  %v403 = vshrl.u32 %v402, 7
  %v404 = vsub.s32 %v401, %v403
  %v405 = vrot.slane %v389, %v404
  %v407 = vunpack.c.l.s4 1966171168
  %v408 = vunpack.c.0.s8 %v407
  %v409 = vlaneseq
  %v410 = vshrl.u32 %v409, 7
  %v411 = vsub.s32 %v408, %v410
  %v412 = vrot.slane %v390, %v411
  %v414 = vunpack.c.l.s4 1966171168
  %v415 = vunpack.c.0.s8 %v414
  %v416 = vlaneseq
  %v417 = vshrl.u32 %v416, 7
  %v418 = vsub.s32 %v415, %v417
  %v419 = vrot.slane %v391, %v418
  %v420 = vcombine.high %v398, %v398
  %v421 = vcombine.high %v405, %v405
  %v422 = vcombine.high %v412, %v412
  %v423 = vcombine.high %v419, %v419
  %v424 = vlaneseq
  %v425 = vshrl.u32 %v424, 7
  %v426 = vsub.s32 0, %v425
  %v427 = vrot.slane %v398, %v426
  %v428 = vlaneseq
  %v429 = vshrl.u32 %v428, 7
  %v430 = vsub.s32 0, %v429
  %v431 = vrot.slane %v412, %v430
  %v432 = vlaneseq
  %v433 = vshrl.u32 %v432, 7
  %v434 = vsub.s32 0, %v433
  %v435 = vrot.slane %v420, %v434
  %v436 = vlaneseq
  %v437 = vshrl.u32 %v436, 7
  %v438 = vsub.s32 0, %v437
  %v439 = vrot.slane %v422, %v438
  %v440 = vlaneseq
  %v441 = vshrl.u32 %v440, 7
  %v442 = vsub.s32 0, %v441
  %v443 = vrot.slane %v405, %v442
  %v444 = vlaneseq
  %v445 = vshrl.u32 %v444, 7
  %v446 = vsub.s32 0, %v445
  %v447 = vrot.slane %v419, %v446
  %v448 = vlaneseq
  %v449 = vshrl.u32 %v448, 7
  %v450 = vsub.s32 0, %v449
  %v451 = vrot.slane %v421, %v450
  %v452 = vlaneseq
  %v453 = vshrl.u32 %v452, 7
  %v454 = vsub.s32 0, %v453
  %v455 = vrot.slane %v423, %v454
  %v464 = vmul.f32 %v48, %v427
  %v465 = vmul.f32 %v49, %v427
  %v466 = vmul.f32 %v50, %v427
  %v467 = vmul.f32 %v51, %v427
  %v468 = vmul.f32 %v52, %v431
  %v469 = vmul.f32 %v53, %v431
  %v470 = vmul.f32 %v54, %v431
  %v471 = vmul.f32 %v55, %v431
  %v472 = vmul.f32 %v56, %v435
  %v473 = vmul.f32 %v57, %v435
  %v474 = vmul.f32 %v58, %v435
  %v475 = vmul.f32 %v59, %v435
  %v476 = vmul.f32 %v60, %v439
  %v477 = vmul.f32 %v61, %v439
  %v478 = vmul.f32 %v62, %v439
  %v479 = vmul.f32 %v63, %v439
  %v480 = vmul.f32 %v64, %v443
  %v481 = vmul.f32 %v65, %v443
  %v482 = vmul.f32 %v66, %v443
  %v483 = vmul.f32 %v67, %v443
  %v484 = vmul.f32 %v68, %v447
  %v485 = vmul.f32 %v69, %v447
  %v486 = vmul.f32 %v70, %v447
  %v487 = vmul.f32 %v71, %v447
  %v488 = vmul.f32 %v72, %v451
  %v489 = vmul.f32 %v73, %v451
  %v490 = vmul.f32 %v74, %v451
  %v491 = vmul.f32 %v75, %v451
  %v492 = vmul.f32 %v76, %v455
  %v493 = vmul.f32 %v77, %v455
  %v494 = vmul.f32 %v78, %v455
  %v495 = vmul.f32 %v79, %v455
  %v496 = vsel %vm174, %v464, 0.0
  %497 = vadd.xlane.f32.xlu0 %v496
  %v498 = vpop.xlane.xlu0 %497
  %v499 = vsel %vm174, %v465, 0.0
  %500 = vadd.xlane.f32.xlu0 %v499
  %v501 = vpop.xlane.xlu0 %500
  %v502 = vsel %vm174, %v466, 0.0
  %503 = vadd.xlane.f32.xlu0 %v502
  %v504 = vpop.xlane.xlu0 %503
  %v505 = vsel %vm174, %v467, 0.0
  %506 = vadd.xlane.f32.xlu0 %v505
  %v507 = vpop.xlane.xlu0 %506
  %v508 = vsel %vm174, %v468, 0.0
  %509 = vadd.xlane.f32.xlu0 %v508
  %v510 = vpop.xlane.xlu0 %509
  %v511 = vsel %vm174, %v469, 0.0
  %512 = vadd.xlane.f32.xlu0 %v511
  %v513 = vpop.xlane.xlu0 %512
  %v514 = vsel %vm174, %v470, 0.0
  %515 = vadd.xlane.f32.xlu0 %v514
  %v516 = vpop.xlane.xlu0 %515
  %v517 = vsel %vm174, %v471, 0.0
  %518 = vadd.xlane.f32.xlu0 %v517
  %v519 = vpop.xlane.xlu0 %518
  %v520 = vsel %vm174, %v472, 0.0
  %521 = vadd.xlane.f32.xlu0 %v520
  %v522 = vpop.xlane.xlu0 %521
  %v523 = vsel %vm174, %v473, 0.0
  %524 = vadd.xlane.f32.xlu0 %v523
  %v525 = vpop.xlane.xlu0 %524
  %v526 = vsel %vm174, %v474, 0.0
  %527 = vadd.xlane.f32.xlu0 %v526
  %v528 = vpop.xlane.xlu0 %527
  %v529 = vsel %vm174, %v475, 0.0
  %530 = vadd.xlane.f32.xlu0 %v529
  %v531 = vpop.xlane.xlu0 %530
  %v532 = vsel %vm174, %v476, 0.0
  %533 = vadd.xlane.f32.xlu0 %v532
  %v534 = vpop.xlane.xlu0 %533
  %v535 = vsel %vm174, %v477, 0.0
  %536 = vadd.xlane.f32.xlu0 %v535
  %v537 = vpop.xlane.xlu0 %536
  %v538 = vsel %vm174, %v478, 0.0
  %539 = vadd.xlane.f32.xlu0 %v538
  %v540 = vpop.xlane.xlu0 %539
  %v541 = vsel %vm174, %v479, 0.0
  %542 = vadd.xlane.f32.xlu0 %v541
  %v543 = vpop.xlane.xlu0 %542
  %v544 = vsel %vm174, %v480, 0.0
  %545 = vadd.xlane.f32.xlu0 %v544
  %v546 = vpop.xlane.xlu0 %545
  %v547 = vsel %vm174, %v481, 0.0
  %548 = vadd.xlane.f32.xlu0 %v547
  %v549 = vpop.xlane.xlu0 %548
  %v550 = vsel %vm174, %v482, 0.0
  %551 = vadd.xlane.f32.xlu0 %v550
  %v552 = vpop.xlane.xlu0 %551
  %v553 = vsel %vm174, %v483, 0.0
  %554 = vadd.xlane.f32.xlu0 %v553
  %v555 = vpop.xlane.xlu0 %554
  %v556 = vsel %vm174, %v484, 0.0
  %557 = vadd.xlane.f32.xlu0 %v556
  %v558 = vpop.xlane.xlu0 %557
  %v559 = vsel %vm174, %v485, 0.0
  %560 = vadd.xlane.f32.xlu0 %v559
  %v561 = vpop.xlane.xlu0 %560
  %v562 = vsel %vm174, %v486, 0.0
  %563 = vadd.xlane.f32.xlu0 %v562
  %v564 = vpop.xlane.xlu0 %563
  %v565 = vsel %vm174, %v487, 0.0
  %566 = vadd.xlane.f32.xlu0 %v565
  %v567 = vpop.xlane.xlu0 %566
  %v568 = vsel %vm174, %v488, 0.0
  %569 = vadd.xlane.f32.xlu0 %v568
  %v570 = vpop.xlane.xlu0 %569
  %v571 = vsel %vm174, %v489, 0.0
  %572 = vadd.xlane.f32.xlu0 %v571
  %v573 = vpop.xlane.xlu0 %572
  %v574 = vsel %vm174, %v490, 0.0
  %575 = vadd.xlane.f32.xlu0 %v574
  %v576 = vpop.xlane.xlu0 %575
  %v577 = vsel %vm174, %v491, 0.0
  %578 = vadd.xlane.f32.xlu0 %v577
  %v579 = vpop.xlane.xlu0 %578
  %v580 = vsel %vm174, %v492, 0.0
  %581 = vadd.xlane.f32.xlu0 %v580
  %v582 = vpop.xlane.xlu0 %581
  %v583 = vsel %vm174, %v493, 0.0
  %584 = vadd.xlane.f32.xlu0 %v583
  %v585 = vpop.xlane.xlu0 %584
  %v586 = vsel %vm174, %v494, 0.0
  %587 = vadd.xlane.f32.xlu0 %v586
  %v588 = vpop.xlane.xlu0 %587
  %v589 = vsel %vm174, %v495, 0.0
  %590 = vadd.xlane.f32.xlu0 %v589
  %v591 = vpop.xlane.xlu0 %590
  %v624 = vlaneseq
  %v625 = vand.u32 %v624, 127
  %v626 = vadd.s32 %v625, 4294967232
  %v627 = vlaneseq
  %v628 = vshrl.u32 %v627, 7
  %v629 = vsub.s32 %v626, %v628
  %v630 = vrot.slane %v498, %v629
  %v631 = vadd.s32 %v625, 4294967224
  %v632 = vlaneseq
  %v633 = vshrl.u32 %v632, 7
  %v634 = vsub.s32 %v631, %v633
  %v635 = vrot.slane %v501, %v634
  %vm636 = vcmask 654912
  %v637 = vsel %vm636, %v635, %v630
  %v638 = vadd.s32 %v625, 4294967216
  %v639 = vlaneseq
  %v640 = vshrl.u32 %v639, 7
  %v641 = vsub.s32 %v638, %v640
  %v642 = vrot.slane %v504, %v641
  %vm643 = vcmask 720512
  %v644 = vsel %vm643, %v642, %v637
  %v645 = vadd.s32 %v625, 4294967208
  %v646 = vlaneseq
  %v647 = vshrl.u32 %v646, 7
  %v648 = vsub.s32 %v645, %v647
  %v649 = vrot.slane %v507, %v648
  %vm650 = vcmask 786112
  %v651 = vsel %vm650, %v649, %v644
  %v652 = vlaneseq
  %v653 = vshrl.u32 %v652, 7
  %v654 = vsub.s32 %v626, %v653
  %v655 = vrot.slane %v510, %v654
  %v656 = vlaneseq
  %v657 = vshrl.u32 %v656, 7
  %v658 = vsub.s32 %v631, %v657
  %v659 = vrot.slane %v513, %v658
  %v660 = vsel %vm636, %v659, %v655
  %v661 = vlaneseq
  %v662 = vshrl.u32 %v661, 7
  %v663 = vsub.s32 %v638, %v662
  %v664 = vrot.slane %v516, %v663
  %v665 = vsel %vm643, %v664, %v660
  %v666 = vlaneseq
  %v667 = vshrl.u32 %v666, 7
  %v668 = vsub.s32 %v645, %v667
  %v669 = vrot.slane %v519, %v668
  %v670 = vsel %vm650, %v669, %v665
  %v671 = vlaneseq
  %v672 = vshrl.u32 %v671, 7
  %v673 = vsub.s32 %v626, %v672
  %v674 = vrot.slane %v522, %v673
  %v675 = vlaneseq
  %v676 = vshrl.u32 %v675, 7
  %v677 = vsub.s32 %v631, %v676
  %v678 = vrot.slane %v525, %v677
  %v679 = vsel %vm636, %v678, %v674
  %v680 = vlaneseq
  %v681 = vshrl.u32 %v680, 7
  %v682 = vsub.s32 %v638, %v681
  %v683 = vrot.slane %v528, %v682
  %v684 = vsel %vm643, %v683, %v679
  %v685 = vlaneseq
  %v686 = vshrl.u32 %v685, 7
  %v687 = vsub.s32 %v645, %v686
  %v688 = vrot.slane %v531, %v687
  %v689 = vsel %vm650, %v688, %v684
  %v690 = vlaneseq
  %v691 = vshrl.u32 %v690, 7
  %v692 = vsub.s32 %v626, %v691
  %v693 = vrot.slane %v534, %v692
  %v694 = vlaneseq
  %v695 = vshrl.u32 %v694, 7
  %v696 = vsub.s32 %v631, %v695
  %v697 = vrot.slane %v537, %v696
  %v698 = vsel %vm636, %v697, %v693
  %v699 = vlaneseq
  %v700 = vshrl.u32 %v699, 7
  %v701 = vsub.s32 %v638, %v700
  %v702 = vrot.slane %v540, %v701
  %v703 = vsel %vm643, %v702, %v698
  %v704 = vlaneseq
  %v705 = vshrl.u32 %v704, 7
  %v706 = vsub.s32 %v645, %v705
  %v707 = vrot.slane %v543, %v706
  %v708 = vsel %vm650, %v707, %v703
  %v709 = vlaneseq
  %v710 = vshrl.u32 %v709, 7
  %v711 = vsub.s32 %v626, %v710
  %v712 = vrot.slane %v546, %v711
  %v713 = vlaneseq
  %v714 = vshrl.u32 %v713, 7
  %v715 = vsub.s32 %v631, %v714
  %v716 = vrot.slane %v549, %v715
  %v717 = vsel %vm636, %v716, %v712
  %v718 = vlaneseq
  %v719 = vshrl.u32 %v718, 7
  %v720 = vsub.s32 %v638, %v719
  %v721 = vrot.slane %v552, %v720
  %v722 = vsel %vm643, %v721, %v717
  %v723 = vlaneseq
  %v724 = vshrl.u32 %v723, 7
  %v725 = vsub.s32 %v645, %v724
  %v726 = vrot.slane %v555, %v725
  %v727 = vsel %vm650, %v726, %v722
  %v728 = vlaneseq
  %v729 = vshrl.u32 %v728, 7
  %v730 = vsub.s32 %v626, %v729
  %v731 = vrot.slane %v558, %v730
  %v732 = vlaneseq
  %v733 = vshrl.u32 %v732, 7
  %v734 = vsub.s32 %v631, %v733
  %v735 = vrot.slane %v561, %v734
  %v736 = vsel %vm636, %v735, %v731
  %v737 = vlaneseq
  %v738 = vshrl.u32 %v737, 7
  %v739 = vsub.s32 %v638, %v738
  %v740 = vrot.slane %v564, %v739
  %v741 = vsel %vm643, %v740, %v736
  %v742 = vlaneseq
  %v743 = vshrl.u32 %v742, 7
  %v744 = vsub.s32 %v645, %v743
  %v745 = vrot.slane %v567, %v744
  %v746 = vsel %vm650, %v745, %v741
  %v747 = vlaneseq
  %v748 = vshrl.u32 %v747, 7
  %v749 = vsub.s32 %v626, %v748
  %v750 = vrot.slane %v570, %v749
  %v751 = vlaneseq
  %v752 = vshrl.u32 %v751, 7
  %v753 = vsub.s32 %v631, %v752
  %v754 = vrot.slane %v573, %v753
  %v755 = vsel %vm636, %v754, %v750
  %v756 = vlaneseq
  %v757 = vshrl.u32 %v756, 7
  %v758 = vsub.s32 %v638, %v757
  %v759 = vrot.slane %v576, %v758
  %v760 = vsel %vm643, %v759, %v755
  %v761 = vlaneseq
  %v762 = vshrl.u32 %v761, 7
  %v763 = vsub.s32 %v645, %v762
  %v764 = vrot.slane %v579, %v763
  %v765 = vsel %vm650, %v764, %v760
  %v766 = vlaneseq
  %v767 = vshrl.u32 %v766, 7
  %v768 = vsub.s32 %v626, %v767
  %v769 = vrot.slane %v582, %v768
  %v770 = vlaneseq
  %v771 = vshrl.u32 %v770, 7
  %v772 = vsub.s32 %v631, %v771
  %v773 = vrot.slane %v585, %v772
  %v774 = vsel %vm636, %v773, %v769
  %v775 = vlaneseq
  %v776 = vshrl.u32 %v775, 7
  %v777 = vsub.s32 %v638, %v776
  %v778 = vrot.slane %v588, %v777
  %v779 = vsel %vm643, %v778, %v774
  %v780 = vlaneseq
  %v781 = vshrl.u32 %v780, 7
  %v782 = vsub.s32 %v645, %v781
  %v783 = vrot.slane %v591, %v782
  %v784 = vsel %vm650, %v783, %v779
  %vm785 = vcmask 1041409
  %v786 = vsel %vm785, %v670, %v651
  %vm787 = vcmask 1042434
  %v788 = vsel %vm787, %v689, %v786
  %vm789 = vcmask 1043459
  %v790 = vsel %vm789, %v708, %v788
  %vm791 = vcmask 1044484
  %v792 = vsel %vm791, %v727, %v790
  %vm793 = vcmask 1045509
  %v794 = vsel %vm793, %v746, %v792
  %vm795 = vcmask 1046534
  %v796 = vsel %vm795, %v765, %v794
  %vm797 = vcmask 1047559
  %v798 = vsel %vm797, %v784, %v796
  %v800 = vsel %vm108, %v47, %v80
  %v801 = vsel %vm179, %v800, %v798
  %v802 = vpack.c.bf16 %v801, %v801
  %v803 = vld [vmem:[%s7] sm:$0xff]
  %v804 = vld [vmem:[%s7 + $0x8] sm:$0xff]
  %v805 = vld [vmem:[%s7 + $0x10] sm:$0xff]
  %v806 = vld [vmem:[%s7 + $0x18] sm:$0xff]
  %v807 = vld [vmem:[%s7 + $0x20] sm:$0xff]
  %v808 = vld [vmem:[%s7 + $0x28] sm:$0xff]
  %v809 = vld [vmem:[%s7 + $0x30] sm:$0xff]
  %v810 = vld [vmem:[%s7 + $0x38] sm:$0xff]
  %v811 = vld [vmem:[%s7 + $0x40] sm:$0xff]
  %v812 = vld [vmem:[%s7 + $0x48] sm:$0xff]
  %v813 = vld [vmem:[%s7 + $0x50] sm:$0xff]
  %v814 = vld [vmem:[%s7 + $0x58] sm:$0xff]
  %v815 = vld [vmem:[%s8] sm:$0x3]
  %v817 = vlaneseq
  %v818 = vshrl.u32 %v817, 7
  %v819 = vsub.s32 0, %v818
  %v820 = vrot.slane %v815, %v819
  %v821 = vlaneseq
  %v822 = vshrl.u32 %v821, 7
  %v823 = vsub.s32 1, %v822
  %v824 = vrot.slane %v815, %v823
  %v839 = vunpack.c.l.b16 %v803
  %v840 = vunpack.c.h.b16 %v803
  %v841 = vunpack.c.l.b16 %v804
  %v842 = vunpack.c.h.b16 %v804
  %v843 = vunpack.c.l.b16 %v805
  %v844 = vunpack.c.h.b16 %v805
  %v845 = vunpack.c.l.b16 %v806
  %v846 = vunpack.c.h.b16 %v806
  %v847 = vunpack.c.l.b16 %v807
  %v848 = vunpack.c.h.b16 %v807
  %v849 = vunpack.c.l.b16 %v808
  %v850 = vunpack.c.h.b16 %v808
  %v851 = vunpack.c.l.b16 %v809
  %v852 = vunpack.c.h.b16 %v809
  %v853 = vunpack.c.l.b16 %v810
  %v854 = vunpack.c.h.b16 %v810
  %v855 = vunpack.c.l.b16 %v811
  %v856 = vunpack.c.h.b16 %v811
  %v857 = vunpack.c.l.b16 %v812
  %v858 = vunpack.c.h.b16 %v812
  %v859 = vunpack.c.l.b16 %v813
  %v860 = vunpack.c.h.b16 %v813
  %v861 = vunpack.c.l.b16 %v814
  %v862 = vunpack.c.h.b16 %v814
  %v863 = vpack.c.b16 %v841, %v839
  %v864 = vpack.c.b16 %v842, %v840
  %v865 = vpack.c.b16 %v845, %v843
  %v866 = vpack.c.b16 %v846, %v844
  %v867 = vpack.c.b16 %v849, %v847
  %v868 = vpack.c.b16 %v850, %v848
  %v869 = vpack.c.b16 %v853, %v851
  %v870 = vpack.c.b16 %v854, %v852
  %v871 = vpack.c.b16 %v857, %v855
  %v872 = vpack.c.b16 %v858, %v856
  %v873 = vpack.c.b16 %v861, %v859
  %v874 = vpack.c.b16 %v862, %v860
  %v888 = vsel %vm183, %v802, 0
  %890 = vmatprep.subr.bf16.mxu0 0
  %891 = vmatpush1.bf16.msra.mxu0 0
  %892 = vmatprep.subr.bf16.mxu0 0
  %893 = vmatpush1.bf16.msra.mxu0 0
  %894 = vmatprep.subr.bf16.mxu0 %v874
  %895 = vmatpush1.bf16.msra.mxu0 %v873
  %896 = vmatprep.subr.bf16.mxu0 %v872
  %897 = vmatpush1.bf16.msra.mxu0 %v871
  %898 = vmatprep.subr.bf16.mxu0 %v870
  %899 = vmatpush1.bf16.msra.mxu0 %v869
  %900 = vmatprep.subr.bf16.mxu0 %v868
  %901 = vmatpush1.bf16.msra.mxu0 %v867
  %902 = vmatprep.subr.bf16.mxu0 %v866
  %903 = vmatpush1.bf16.msra.mxu0 %v865
  %904 = vmatprep.subr.bf16.mxu0 %v864
  %905 = vmatpush1.bf16.msra.mxu0 %v863
  %906 = vmatprep.subr.bf16.mxu0 0
  %907 = vmatpush2.bf16.msra.mxu0 0
  %908 = vmatprep.subr.bf16.mxu0 0
  %909 = vmatpush2.bf16.msra.mxu0 0
  %910 = vmatprep.subr.bf16.mxu0 0
  %911 = vmatpush2.bf16.msra.mxu0 0
  %912 = vmatprep.subr.bf16.mxu0 0
  %913 = vmatpush2.bf16.msra.mxu0 0
  %914 = vmatprep.subr.bf16.mxu0 0
  %915 = vmatpush2.bf16.msra.mxu0 0
  %916 = vmatprep.subr.bf16.mxu0 0
  %917 = vmatpush2.bf16.msra.mxu0 0
  %918 = vmatprep.subr.bf16.mxu0 0
  %919 = vmatpush2.bf16.msra.mxu0 0
  %920 = vmatprep.subr.bf16.mxu0 0
  %921 = vmatpush2.bf16.msra.mxu0 0
  %922 = vmatprep.mubr.bf16.mxu0 0
  %923 = vmatmul.mubr.bf16.gmra.mxu0 %v888
  %v924 = vpop.f32.mrf.mxu0
  %v925 = vadd.f32 %v820, %v924
  %v926 = vpop.f32.mrf.mxu0
  %v927 = vadd.f32 %v824, %v926
  %v928 = vpop.f32.mrf.mxu0
  %v929 = vpop.f32.mrf.mxu0
  %930 = vdwg.mxu0
  %v931 = vtanh.pop %v925
  %v932 = vtanh.pop %v927
  %v933 = vadd.s32 %v625, 128
  %vm934 = vcmp.lt.s32.totalorder %v625, 192
  %vm935 = vcmp.lt.s32.totalorder %v933, 192
  %v936 = vmul.f32 %v931, 0.5
  %v937 = vmul.f32 %v932, 0.5
  %v938 = vadd.f32 %v936, 0.5
  %v939 = vadd.f32 %v937, 0.5
  %v940 = vsel %vm934, %v938, %v931
  %v941 = vsel %vm935, %v939, %v932
  %943 = vrot.lane.b32.xlu0 %v80, 32
  %v944 = vpop.permute.xlu0 %943
  %v946 = vsel %vm108, %v80, %v944
  %948 = vrot.lane.b32.xlu0 %v946, 64
  %v949 = vpop.permute.xlu0 %948
  %v951 = vmul.f32 %v940, %v949
  %953 = vrot.lane.b32.xlu0 %v941, 64
  %v954 = vpop.permute.xlu0 %953
  %v956 = vmul.f32 %v940, %v954
  %958 = vrot.lane.b32.xlu0 %v956, 64
  %v959 = vpop.permute.xlu0 %958
  %v961 = vadd.f32 %v951, %v959
  %v962 = vtanh.pop %v961
  %964 = vrot.lane.b32.xlu0 %v962, 64
  %v965 = vpop.permute.xlu0 %964
  %v967 = vmul.f32 %v941, %v965
  %969 = vrot.lane.b32.xlu0 %v961, 96
  %v970 = vpop.permute.xlu0 %969
  %v972 = vadd.f32 %v961, %v970
  %974 = vrot.lane.b32.xlu0 %v967, 96
  %v975 = vpop.permute.xlu0 %974
  %v977 = vadd.f32 %v967, %v975
  %v978 = vmul.f32 %v972, 0.5
  %v979 = vmul.f32 %v977, 0.5
  %v980 = vpack.c.bf16 %v979, %v979
  %s981 = scalar_lea.vmem %s4, 16
  %v982 = vld [vmem:[%s981] sm:$0xf]
  %v983 = vld [vmem:[%s981 + $0x4] sm:$0xf]
  %v984 = vld [vmem:[%s981 + $0x8] sm:$0xf]
  %v985 = vld [vmem:[%s981 + $0xc] sm:$0xf]
  %s986 = scalar_lea.vmem %s5, 1
  %v987 = vld [vmem:[%s986] sm:$0x1]
  %v989 = vlaneseq
  %v990 = vshrl.u32 %v989, 7
  %v991 = vsub.s32 0, %v990
  %v992 = vrot.slane %v987, %v991
  %v998 = vunpack.c.l.b16 %v982
  %v999 = vunpack.c.l.b16 %v983
  %v1000 = vunpack.c.l.b16 %v984
  %v1001 = vunpack.c.l.b16 %v985
  %v1002 = vpack.c.b16 %v999, %v998
  %v1003 = vpack.c.b16 %v1001, %v1000
  %v1007 = vsel %vm108, %v980, 0
  %1009 = vmatprep.subr.bf16.mxu0 0
  %1010 = vmatpush1.bf16.msra.mxu0 0
  %1011 = vmatprep.subr.bf16.mxu0 0
  %1012 = vmatpush1.bf16.msra.mxu0 0
  %1013 = vmatprep.subr.bf16.mxu0 0
  %1014 = vmatpush1.bf16.msra.mxu0 0
  %1015 = vmatprep.subr.bf16.mxu0 0
  %1016 = vmatpush1.bf16.msra.mxu0 0
  %1017 = vmatprep.subr.bf16.mxu0 0
  %1018 = vmatpush1.bf16.msra.mxu0 0
  %1019 = vmatprep.subr.bf16.mxu0 0
  %1020 = vmatpush1.bf16.msra.mxu0 0
  %1021 = vmatprep.subr.bf16.mxu0 0
  %1022 = vmatpush1.bf16.msra.mxu0 %v1003
  %1023 = vmatprep.subr.bf16.mxu0 0
  %1024 = vmatpush1.bf16.msra.mxu0 %v1002
  %1025 = vmatprep.subr.bf16.mxu0 0
  %1026 = vmatpush2.bf16.msra.mxu0 0
  %1027 = vmatprep.subr.bf16.mxu0 0
  %1028 = vmatpush2.bf16.msra.mxu0 0
  %1029 = vmatprep.subr.bf16.mxu0 0
  %1030 = vmatpush2.bf16.msra.mxu0 0
  %1031 = vmatprep.subr.bf16.mxu0 0
  %1032 = vmatpush2.bf16.msra.mxu0 0
  %1033 = vmatprep.subr.bf16.mxu0 0
  %1034 = vmatpush2.bf16.msra.mxu0 0
  %1035 = vmatprep.subr.bf16.mxu0 0
  %1036 = vmatpush2.bf16.msra.mxu0 0
  %1037 = vmatprep.subr.bf16.mxu0 0
  %1038 = vmatpush2.bf16.msra.mxu0 0
  %1039 = vmatprep.subr.bf16.mxu0 0
  %1040 = vmatpush2.bf16.msra.mxu0 0
  %1041 = vmatprep.mubr.bf16.mxu0 0
  %1042 = vmatmul.mubr.bf16.gmra.mxu0 %v1007
  %v1043 = vpop.f32.mrf.mxu0
  %v1044 = vadd.f32 %v992, %v1043
  %v1045 = vpop.f32.mrf.mxu0
  %v1046 = vpop.f32.mrf.mxu0
  %v1047 = vpop.f32.mrf.mxu0
  %1048 = vdwg.mxu0
  %1050 = vrot.lane.b32.xlu0 %v1044, 16
  %v1051 = vpop.permute.xlu0 %1050
  %1053 = vrot.lane.b32.xlu0 %v1044, 32
  %v1054 = vpop.permute.xlu0 %1053
  %1056 = vrot.lane.b32.xlu0 %v1044, 48
  %v1057 = vpop.permute.xlu0 %1056
  %1059 = vrot.lane.b32.xlu0 %v1044, 64
  %v1060 = vpop.permute.xlu0 %1059
  %1062 = vrot.lane.b32.xlu0 %v1044, 80
  %v1063 = vpop.permute.xlu0 %1062
  %1065 = vrot.lane.b32.xlu0 %v1044, 96
  %v1066 = vpop.permute.xlu0 %1065
  %1068 = vrot.lane.b32.xlu0 %v1044, 112
  %v1069 = vpop.permute.xlu0 %1068
  %v1071 = vsel %vm174, %v1044, %v1051
  %v1072 = vsel %vm108, %v1071, %v1054
  %v1073 = vsel %vm177, %v1072, %v1057
  %v1074 = vsel %vm179, %v1073, %v1060
  %v1075 = vsel %vm181, %v1074, %v1063
  %v1076 = vsel %vm183, %v1075, %v1066
  %v1077 = vsel %vm185, %v1076, %v1069
  %s1078 = scalar_lea.vmem %s2, 16
  %v1079 = vld [vmem:[%s1078] sm:$0xff]
  %v1080 = vld [vmem:[%s1078 + $0x8] sm:$0xff]
  %v1081 = vadd.f32 %v1079, %v1077
  %v1082 = vadd.f32 %v1080, %v1077
  %v1083 = vtanh.pop %v1081
  %v1084 = vtanh.pop %v1082
  %v1085 = vpack.c.bf16 %v1083, %v1083
  %v1086 = vpack.c.bf16 %v1084, %v1084
  %s1087 = scalar_lea.vmem %s6, 128
  %v1088 = vld [vmem:[%s1087] sm:$0xf]
  %v1089 = vld [vmem:[%s1087 + $0x4] sm:$0xf]
  %v1090 = vld [vmem:[%s1087 + $0x8] sm:$0xf]
  %v1091 = vld [vmem:[%s1087 + $0xc] sm:$0xf]
  %v1092 = vld [vmem:[%s1087 + $0x10] sm:$0xf]
  %v1093 = vld [vmem:[%s1087 + $0x14] sm:$0xf]
  %v1094 = vld [vmem:[%s1087 + $0x18] sm:$0xf]
  %v1095 = vld [vmem:[%s1087 + $0x1c] sm:$0xf]
  %v1096 = vld [vmem:[%s1087 + $0x20] sm:$0xf]
  %v1097 = vld [vmem:[%s1087 + $0x24] sm:$0xf]
  %v1098 = vld [vmem:[%s1087 + $0x28] sm:$0xf]
  %v1099 = vld [vmem:[%s1087 + $0x2c] sm:$0xf]
  %v1100 = vld [vmem:[%s1087 + $0x30] sm:$0xf]
  %v1101 = vld [vmem:[%s1087 + $0x34] sm:$0xf]
  %v1102 = vld [vmem:[%s1087 + $0x38] sm:$0xf]
  %v1103 = vld [vmem:[%s1087 + $0x3c] sm:$0xf]
  %v1104 = vld [vmem:[%s1087 + $0x40] sm:$0xf]
  %v1105 = vld [vmem:[%s1087 + $0x44] sm:$0xf]
  %v1106 = vld [vmem:[%s1087 + $0x48] sm:$0xf]
  %v1107 = vld [vmem:[%s1087 + $0x4c] sm:$0xf]
  %v1108 = vld [vmem:[%s1087 + $0x50] sm:$0xf]
  %v1109 = vld [vmem:[%s1087 + $0x54] sm:$0xf]
  %v1110 = vld [vmem:[%s1087 + $0x58] sm:$0xf]
  %v1111 = vld [vmem:[%s1087 + $0x5c] sm:$0xf]
  %v1112 = vld [vmem:[%s1087 + $0x60] sm:$0xf]
  %v1113 = vld [vmem:[%s1087 + $0x64] sm:$0xf]
  %v1114 = vld [vmem:[%s1087 + $0x68] sm:$0xf]
  %v1115 = vld [vmem:[%s1087 + $0x6c] sm:$0xf]
  %v1116 = vld [vmem:[%s1087 + $0x70] sm:$0xf]
  %v1117 = vld [vmem:[%s1087 + $0x74] sm:$0xf]
  %v1118 = vld [vmem:[%s1087 + $0x78] sm:$0xf]
  %v1119 = vld [vmem:[%s1087 + $0x7c] sm:$0xf]
  %v1152 = vunpack.c.l.b16 %v1088
  %v1153 = vunpack.c.l.b16 %v1089
  %v1154 = vunpack.c.l.b16 %v1090
  %v1155 = vunpack.c.l.b16 %v1091
  %v1156 = vunpack.c.l.b16 %v1092
  %v1157 = vunpack.c.l.b16 %v1093
  %v1158 = vunpack.c.l.b16 %v1094
  %v1159 = vunpack.c.l.b16 %v1095
  %v1160 = vunpack.c.l.b16 %v1096
  %v1161 = vunpack.c.l.b16 %v1097
  %v1162 = vunpack.c.l.b16 %v1098
  %v1163 = vunpack.c.l.b16 %v1099
  %v1164 = vunpack.c.l.b16 %v1100
  %v1165 = vunpack.c.l.b16 %v1101
  %v1166 = vunpack.c.l.b16 %v1102
  %v1167 = vunpack.c.l.b16 %v1103
  %v1168 = vunpack.c.l.b16 %v1104
  %v1169 = vunpack.c.l.b16 %v1105
  %v1170 = vunpack.c.l.b16 %v1106
  %v1171 = vunpack.c.l.b16 %v1107
  %v1172 = vunpack.c.l.b16 %v1108
  %v1173 = vunpack.c.l.b16 %v1109
  %v1174 = vunpack.c.l.b16 %v1110
  %v1175 = vunpack.c.l.b16 %v1111
  %v1176 = vunpack.c.l.b16 %v1112
  %v1177 = vunpack.c.l.b16 %v1113
  %v1178 = vunpack.c.l.b16 %v1114
  %v1179 = vunpack.c.l.b16 %v1115
  %v1180 = vunpack.c.l.b16 %v1116
  %v1181 = vunpack.c.l.b16 %v1117
  %v1182 = vunpack.c.l.b16 %v1118
  %v1183 = vunpack.c.l.b16 %v1119
  %v1184 = vpack.c.b16 %v1153, %v1152
  %v1185 = vpack.c.b16 %v1155, %v1154
  %v1186 = vpack.c.b16 %v1157, %v1156
  %v1187 = vpack.c.b16 %v1159, %v1158
  %v1188 = vpack.c.b16 %v1161, %v1160
  %v1189 = vpack.c.b16 %v1163, %v1162
  %v1190 = vpack.c.b16 %v1165, %v1164
  %v1191 = vpack.c.b16 %v1167, %v1166
  %v1192 = vpack.c.b16 %v1169, %v1168
  %v1193 = vpack.c.b16 %v1171, %v1170
  %v1194 = vpack.c.b16 %v1173, %v1172
  %v1195 = vpack.c.b16 %v1175, %v1174
  %v1196 = vpack.c.b16 %v1177, %v1176
  %v1197 = vpack.c.b16 %v1179, %v1178
  %v1198 = vpack.c.b16 %v1181, %v1180
  %v1199 = vpack.c.b16 %v1183, %v1182
  %1216 = vmatprep.subr.bf16.mxu0 0
  %1217 = vmatpush1.bf16.msra.mxu0 %v1191
  %1218 = vmatprep.subr.bf16.mxu0 0
  %1219 = vmatpush1.bf16.msra.mxu0 %v1190
  %1220 = vmatprep.subr.bf16.mxu0 0
  %1221 = vmatpush1.bf16.msra.mxu0 %v1189
  %1222 = vmatprep.subr.bf16.mxu0 0
  %1223 = vmatpush1.bf16.msra.mxu0 %v1188
  %1224 = vmatprep.subr.bf16.mxu0 0
  %1225 = vmatpush1.bf16.msra.mxu0 %v1187
  %1226 = vmatprep.subr.bf16.mxu0 0
  %1227 = vmatpush1.bf16.msra.mxu0 %v1186
  %1228 = vmatprep.subr.bf16.mxu0 0
  %1229 = vmatpush1.bf16.msra.mxu0 %v1185
  %1230 = vmatprep.subr.bf16.mxu0 0
  %1231 = vmatpush1.bf16.msra.mxu0 %v1184
  %1232 = vmatprep.subr.bf16.mxu0 0
  %1233 = vmatpush2.bf16.msra.mxu0 %v1199
  %1234 = vmatprep.subr.bf16.mxu0 0
  %1235 = vmatpush2.bf16.msra.mxu0 %v1198
  %1236 = vmatprep.subr.bf16.mxu0 0
  %1237 = vmatpush2.bf16.msra.mxu0 %v1197
  %1238 = vmatprep.subr.bf16.mxu0 0
  %1239 = vmatpush2.bf16.msra.mxu0 %v1196
  %1240 = vmatprep.subr.bf16.mxu0 0
  %1241 = vmatpush2.bf16.msra.mxu0 %v1195
  %1242 = vmatprep.subr.bf16.mxu0 0
  %1243 = vmatpush2.bf16.msra.mxu0 %v1194
  %1244 = vmatprep.subr.bf16.mxu0 0
  %1245 = vmatpush2.bf16.msra.mxu0 %v1193
  %1246 = vmatprep.subr.bf16.mxu0 0
  %1247 = vmatpush2.bf16.msra.mxu0 %v1192
  %1248 = vmatprep.mubr.bf16.mxu0 %v1086
  %1249 = vmatmul.mubr.bf16.gmra.mxu0 %v1085
  %v1250 = vpop.f32.mrf.mxu0
  %v1251 = vadd.f32 0.0, %v1250
  %v1252 = vpop.f32.mrf.mxu0
  %v1253 = vpop.f32.mrf.mxu0
  %v1254 = vpop.f32.mrf.mxu0
  %1255 = vdwg.mxu0
  %v1256 = vsel %vm174, %v1251, -inf
  %1257 = vmax.xlane.f32.xlu0 %v1256
  %v1258 = vpop.xlane.xlu0 %1257
  %v1259 = vsub.f32 %v1251, %v1258
  %v1260 = vmul.f32 %v1259, 1.442695
  %v1261 = vpow.pop %v1260
  %v1262 = vsel %vm174, %v1261, 0.0
  %1263 = vadd.xlane.f32.xlu0 %v1262
  %v1264 = vpop.xlane.xlu0 %1263
  %v1265 = vrcp.pop %v1264
  %v1266 = vmul.f32 %v1261, %v1265
  %v1268 = vcombine.high %v1266, %v1266
  %v1270 = vunpack.c.l.s4 1966171168
  %v1271 = vunpack.c.0.s8 %v1270
  %v1272 = vlaneseq
  %v1273 = vshrl.u32 %v1272, 7
  %v1274 = vsub.s32 %v1271, %v1273
  %v1275 = vrot.slane %v1266, %v1274
  %v1277 = vunpack.c.l.s4 1966171168
  %v1278 = vunpack.c.0.s8 %v1277
  %v1279 = vlaneseq
  %v1280 = vshrl.u32 %v1279, 7
  %v1281 = vsub.s32 %v1278, %v1280
  %v1282 = vrot.slane %v1268, %v1281
  %v1283 = vcombine.high %v1275, %v1275
  %v1284 = vcombine.high %v1282, %v1282
  %v1286 = vunpack.c.l.s4 1966171168
  %v1287 = vunpack.c.0.s8 %v1286
  %v1288 = vlaneseq
  %v1289 = vshrl.u32 %v1288, 7
  %v1290 = vsub.s32 %v1287, %v1289
  %v1291 = vrot.slane %v1275, %v1290
  %v1293 = vunpack.c.l.s4 1966171168
  %v1294 = vunpack.c.0.s8 %v1293
  %v1295 = vlaneseq
  %v1296 = vshrl.u32 %v1295, 7
  %v1297 = vsub.s32 %v1294, %v1296
  %v1298 = vrot.slane %v1282, %v1297
  %v1300 = vunpack.c.l.s4 1966171168
  %v1301 = vunpack.c.0.s8 %v1300
  %v1302 = vlaneseq
  %v1303 = vshrl.u32 %v1302, 7
  %v1304 = vsub.s32 %v1301, %v1303
  %v1305 = vrot.slane %v1283, %v1304
  %v1307 = vunpack.c.l.s4 1966171168
  %v1308 = vunpack.c.0.s8 %v1307
  %v1309 = vlaneseq
  %v1310 = vshrl.u32 %v1309, 7
  %v1311 = vsub.s32 %v1308, %v1310
  %v1312 = vrot.slane %v1284, %v1311
  %v1313 = vcombine.high %v1291, %v1291
  %v1314 = vcombine.high %v1298, %v1298
  %v1315 = vcombine.high %v1305, %v1305
  %v1316 = vcombine.high %v1312, %v1312
  %v1317 = vlaneseq
  %v1318 = vshrl.u32 %v1317, 7
  %v1319 = vsub.s32 0, %v1318
  %v1320 = vrot.slane %v1291, %v1319
  %v1321 = vlaneseq
  %v1322 = vshrl.u32 %v1321, 7
  %v1323 = vsub.s32 0, %v1322
  %v1324 = vrot.slane %v1305, %v1323
  %v1325 = vlaneseq
  %v1326 = vshrl.u32 %v1325, 7
  %v1327 = vsub.s32 0, %v1326
  %v1328 = vrot.slane %v1313, %v1327
  %v1329 = vlaneseq
  %v1330 = vshrl.u32 %v1329, 7
  %v1331 = vsub.s32 0, %v1330
  %v1332 = vrot.slane %v1315, %v1331
  %v1333 = vlaneseq
  %v1334 = vshrl.u32 %v1333, 7
  %v1335 = vsub.s32 0, %v1334
  %v1336 = vrot.slane %v1298, %v1335
  %v1337 = vlaneseq
  %v1338 = vshrl.u32 %v1337, 7
  %v1339 = vsub.s32 0, %v1338
  %v1340 = vrot.slane %v1312, %v1339
  %v1341 = vlaneseq
  %v1342 = vshrl.u32 %v1341, 7
  %v1343 = vsub.s32 0, %v1342
  %v1344 = vrot.slane %v1314, %v1343
  %v1345 = vlaneseq
  %v1346 = vshrl.u32 %v1345, 7
  %v1347 = vsub.s32 0, %v1346
  %v1348 = vrot.slane %v1316, %v1347
  %v1357 = vmul.f32 %v48, %v1320
  %v1358 = vmul.f32 %v49, %v1320
  %v1359 = vmul.f32 %v50, %v1320
  %v1360 = vmul.f32 %v51, %v1320
  %v1361 = vmul.f32 %v52, %v1324
  %v1362 = vmul.f32 %v53, %v1324
  %v1363 = vmul.f32 %v54, %v1324
  %v1364 = vmul.f32 %v55, %v1324
  %v1365 = vmul.f32 %v56, %v1328
  %v1366 = vmul.f32 %v57, %v1328
  %v1367 = vmul.f32 %v58, %v1328
  %v1368 = vmul.f32 %v59, %v1328
  %v1369 = vmul.f32 %v60, %v1332
  %v1370 = vmul.f32 %v61, %v1332
  %v1371 = vmul.f32 %v62, %v1332
  %v1372 = vmul.f32 %v63, %v1332
  %v1373 = vmul.f32 %v64, %v1336
  %v1374 = vmul.f32 %v65, %v1336
  %v1375 = vmul.f32 %v66, %v1336
  %v1376 = vmul.f32 %v67, %v1336
  %v1377 = vmul.f32 %v68, %v1340
  %v1378 = vmul.f32 %v69, %v1340
  %v1379 = vmul.f32 %v70, %v1340
  %v1380 = vmul.f32 %v71, %v1340
  %v1381 = vmul.f32 %v72, %v1344
  %v1382 = vmul.f32 %v73, %v1344
  %v1383 = vmul.f32 %v74, %v1344
  %v1384 = vmul.f32 %v75, %v1344
  %v1385 = vmul.f32 %v76, %v1348
  %v1386 = vmul.f32 %v77, %v1348
  %v1387 = vmul.f32 %v78, %v1348
  %v1388 = vmul.f32 %v79, %v1348
  %v1389 = vsel %vm174, %v1357, 0.0
  %1390 = vadd.xlane.f32.xlu0 %v1389
  %v1391 = vpop.xlane.xlu0 %1390
  %v1392 = vsel %vm174, %v1358, 0.0
  %1393 = vadd.xlane.f32.xlu0 %v1392
  %v1394 = vpop.xlane.xlu0 %1393
  %v1395 = vsel %vm174, %v1359, 0.0
  %1396 = vadd.xlane.f32.xlu0 %v1395
  %v1397 = vpop.xlane.xlu0 %1396
  %v1398 = vsel %vm174, %v1360, 0.0
  %1399 = vadd.xlane.f32.xlu0 %v1398
  %v1400 = vpop.xlane.xlu0 %1399
  %v1401 = vsel %vm174, %v1361, 0.0
  %1402 = vadd.xlane.f32.xlu0 %v1401
  %v1403 = vpop.xlane.xlu0 %1402
  %v1404 = vsel %vm174, %v1362, 0.0
  %1405 = vadd.xlane.f32.xlu0 %v1404
  %v1406 = vpop.xlane.xlu0 %1405
  %v1407 = vsel %vm174, %v1363, 0.0
  %1408 = vadd.xlane.f32.xlu0 %v1407
  %v1409 = vpop.xlane.xlu0 %1408
  %v1410 = vsel %vm174, %v1364, 0.0
  %1411 = vadd.xlane.f32.xlu0 %v1410
  %v1412 = vpop.xlane.xlu0 %1411
  %v1413 = vsel %vm174, %v1365, 0.0
  %1414 = vadd.xlane.f32.xlu0 %v1413
  %v1415 = vpop.xlane.xlu0 %1414
  %v1416 = vsel %vm174, %v1366, 0.0
  %1417 = vadd.xlane.f32.xlu0 %v1416
  %v1418 = vpop.xlane.xlu0 %1417
  %v1419 = vsel %vm174, %v1367, 0.0
  %1420 = vadd.xlane.f32.xlu0 %v1419
  %v1421 = vpop.xlane.xlu0 %1420
  %v1422 = vsel %vm174, %v1368, 0.0
  %1423 = vadd.xlane.f32.xlu0 %v1422
  %v1424 = vpop.xlane.xlu0 %1423
  %v1425 = vsel %vm174, %v1369, 0.0
  %1426 = vadd.xlane.f32.xlu0 %v1425
  %v1427 = vpop.xlane.xlu0 %1426
  %v1428 = vsel %vm174, %v1370, 0.0
  %1429 = vadd.xlane.f32.xlu0 %v1428
  %v1430 = vpop.xlane.xlu0 %1429
  %v1431 = vsel %vm174, %v1371, 0.0
  %1432 = vadd.xlane.f32.xlu0 %v1431
  %v1433 = vpop.xlane.xlu0 %1432
  %v1434 = vsel %vm174, %v1372, 0.0
  %1435 = vadd.xlane.f32.xlu0 %v1434
  %v1436 = vpop.xlane.xlu0 %1435
  %v1437 = vsel %vm174, %v1373, 0.0
  %1438 = vadd.xlane.f32.xlu0 %v1437
  %v1439 = vpop.xlane.xlu0 %1438
  %v1440 = vsel %vm174, %v1374, 0.0
  %1441 = vadd.xlane.f32.xlu0 %v1440
  %v1442 = vpop.xlane.xlu0 %1441
  %v1443 = vsel %vm174, %v1375, 0.0
  %1444 = vadd.xlane.f32.xlu0 %v1443
  %v1445 = vpop.xlane.xlu0 %1444
  %v1446 = vsel %vm174, %v1376, 0.0
  %1447 = vadd.xlane.f32.xlu0 %v1446
  %v1448 = vpop.xlane.xlu0 %1447
  %v1449 = vsel %vm174, %v1377, 0.0
  %1450 = vadd.xlane.f32.xlu0 %v1449
  %v1451 = vpop.xlane.xlu0 %1450
  %v1452 = vsel %vm174, %v1378, 0.0
  %1453 = vadd.xlane.f32.xlu0 %v1452
  %v1454 = vpop.xlane.xlu0 %1453
  %v1455 = vsel %vm174, %v1379, 0.0
  %1456 = vadd.xlane.f32.xlu0 %v1455
  %v1457 = vpop.xlane.xlu0 %1456
  %v1458 = vsel %vm174, %v1380, 0.0
  %1459 = vadd.xlane.f32.xlu0 %v1458
  %v1460 = vpop.xlane.xlu0 %1459
  %v1461 = vsel %vm174, %v1381, 0.0
  %1462 = vadd.xlane.f32.xlu0 %v1461
  %v1463 = vpop.xlane.xlu0 %1462
  %v1464 = vsel %vm174, %v1382, 0.0
  %1465 = vadd.xlane.f32.xlu0 %v1464
  %v1466 = vpop.xlane.xlu0 %1465
  %v1467 = vsel %vm174, %v1383, 0.0
  %1468 = vadd.xlane.f32.xlu0 %v1467
  %v1469 = vpop.xlane.xlu0 %1468
  %v1470 = vsel %vm174, %v1384, 0.0
  %1471 = vadd.xlane.f32.xlu0 %v1470
  %v1472 = vpop.xlane.xlu0 %1471
  %v1473 = vsel %vm174, %v1385, 0.0
  %1474 = vadd.xlane.f32.xlu0 %v1473
  %v1475 = vpop.xlane.xlu0 %1474
  %v1476 = vsel %vm174, %v1386, 0.0
  %1477 = vadd.xlane.f32.xlu0 %v1476
  %v1478 = vpop.xlane.xlu0 %1477
  %v1479 = vsel %vm174, %v1387, 0.0
  %1480 = vadd.xlane.f32.xlu0 %v1479
  %v1481 = vpop.xlane.xlu0 %1480
  %v1482 = vsel %vm174, %v1388, 0.0
  %1483 = vadd.xlane.f32.xlu0 %v1482
  %v1484 = vpop.xlane.xlu0 %1483
  %v1486 = vlaneseq
  %v1487 = vshrl.u32 %v1486, 7
  %v1488 = vsub.s32 0, %v1487
  %v1489 = vrot.slane %v979, %v1488
  %1491 = vbcast.lane.b32.xlu0 %v1489, 256
  %v1492 = vpop.permute.xlu0 %1491
  %s1494 = sor.u32 256, 8
  %1495 = vbcast.lane.b32.xlu0 %v1489, %s1494
  %v1496 = vpop.permute.xlu0 %1495
  %s1498 = sor.u32 256, 16
  %1499 = vbcast.lane.b32.xlu0 %v1489, %s1498
  %v1500 = vpop.permute.xlu0 %1499
  %s1502 = sor.u32 256, 24
  %1503 = vbcast.lane.b32.xlu0 %v1489, %s1502
  %v1504 = vpop.permute.xlu0 %1503
  %v1505 = vlaneseq
  %v1506 = vshrl.u32 %v1505, 7
  %v1507 = vsub.s32 1, %v1506
  %v1508 = vrot.slane %v979, %v1507
  %1510 = vbcast.lane.b32.xlu0 %v1508, 256
  %v1511 = vpop.permute.xlu0 %1510
  %s1513 = sor.u32 256, 8
  %1514 = vbcast.lane.b32.xlu0 %v1508, %s1513
  %v1515 = vpop.permute.xlu0 %1514
  %s1517 = sor.u32 256, 16
  %1518 = vbcast.lane.b32.xlu0 %v1508, %s1517
  %v1519 = vpop.permute.xlu0 %1518
  %s1521 = sor.u32 256, 24
  %1522 = vbcast.lane.b32.xlu0 %v1508, %s1521
  %v1523 = vpop.permute.xlu0 %1522
  %v1524 = vlaneseq
  %v1525 = vshrl.u32 %v1524, 7
  %v1526 = vsub.s32 2, %v1525
  %v1527 = vrot.slane %v979, %v1526
  %1529 = vbcast.lane.b32.xlu0 %v1527, 256
  %v1530 = vpop.permute.xlu0 %1529
  %s1532 = sor.u32 256, 8
  %1533 = vbcast.lane.b32.xlu0 %v1527, %s1532
  %v1534 = vpop.permute.xlu0 %1533
  %s1536 = sor.u32 256, 16
  %1537 = vbcast.lane.b32.xlu0 %v1527, %s1536
  %v1538 = vpop.permute.xlu0 %1537
  %s1540 = sor.u32 256, 24
  %1541 = vbcast.lane.b32.xlu0 %v1527, %s1540
  %v1542 = vpop.permute.xlu0 %1541
  %v1543 = vlaneseq
  %v1544 = vshrl.u32 %v1543, 7
  %v1545 = vsub.s32 3, %v1544
  %v1546 = vrot.slane %v979, %v1545
  %1548 = vbcast.lane.b32.xlu0 %v1546, 256
  %v1549 = vpop.permute.xlu0 %1548
  %s1551 = sor.u32 256, 8
  %1552 = vbcast.lane.b32.xlu0 %v1546, %s1551
  %v1553 = vpop.permute.xlu0 %1552
  %s1555 = sor.u32 256, 16
  %1556 = vbcast.lane.b32.xlu0 %v1546, %s1555
  %v1557 = vpop.permute.xlu0 %1556
  %s1559 = sor.u32 256, 24
  %1560 = vbcast.lane.b32.xlu0 %v1546, %s1559
  %v1561 = vpop.permute.xlu0 %1560
  %v1562 = vlaneseq
  %v1563 = vshrl.u32 %v1562, 7
  %v1564 = vsub.s32 4, %v1563
  %v1565 = vrot.slane %v979, %v1564
  %1567 = vbcast.lane.b32.xlu0 %v1565, 256
  %v1568 = vpop.permute.xlu0 %1567
  %s1570 = sor.u32 256, 8
  %1571 = vbcast.lane.b32.xlu0 %v1565, %s1570
  %v1572 = vpop.permute.xlu0 %1571
  %s1574 = sor.u32 256, 16
  %1575 = vbcast.lane.b32.xlu0 %v1565, %s1574
  %v1576 = vpop.permute.xlu0 %1575
  %s1578 = sor.u32 256, 24
  %1579 = vbcast.lane.b32.xlu0 %v1565, %s1578
  %v1580 = vpop.permute.xlu0 %1579
  %v1581 = vlaneseq
  %v1582 = vshrl.u32 %v1581, 7
  %v1583 = vsub.s32 5, %v1582
  %v1584 = vrot.slane %v979, %v1583
  %1586 = vbcast.lane.b32.xlu0 %v1584, 256
  %v1587 = vpop.permute.xlu0 %1586
  %s1589 = sor.u32 256, 8
  %1590 = vbcast.lane.b32.xlu0 %v1584, %s1589
  %v1591 = vpop.permute.xlu0 %1590
  %s1593 = sor.u32 256, 16
  %1594 = vbcast.lane.b32.xlu0 %v1584, %s1593
  %v1595 = vpop.permute.xlu0 %1594
  %s1597 = sor.u32 256, 24
  %1598 = vbcast.lane.b32.xlu0 %v1584, %s1597
  %v1599 = vpop.permute.xlu0 %1598
  %v1600 = vlaneseq
  %v1601 = vshrl.u32 %v1600, 7
  %v1602 = vsub.s32 6, %v1601
  %v1603 = vrot.slane %v979, %v1602
  %1605 = vbcast.lane.b32.xlu0 %v1603, 256
  %v1606 = vpop.permute.xlu0 %1605
  %s1608 = sor.u32 256, 8
  %1609 = vbcast.lane.b32.xlu0 %v1603, %s1608
  %v1610 = vpop.permute.xlu0 %1609
  %s1612 = sor.u32 256, 16
  %1613 = vbcast.lane.b32.xlu0 %v1603, %s1612
  %v1614 = vpop.permute.xlu0 %1613
  %s1616 = sor.u32 256, 24
  %1617 = vbcast.lane.b32.xlu0 %v1603, %s1616
  %v1618 = vpop.permute.xlu0 %1617
  %v1619 = vlaneseq
  %v1620 = vshrl.u32 %v1619, 7
  %v1621 = vsub.s32 7, %v1620
  %v1622 = vrot.slane %v979, %v1621
  %1624 = vbcast.lane.b32.xlu0 %v1622, 256
  %v1625 = vpop.permute.xlu0 %1624
  %s1627 = sor.u32 256, 8
  %1628 = vbcast.lane.b32.xlu0 %v1622, %s1627
  %v1629 = vpop.permute.xlu0 %1628
  %s1631 = sor.u32 256, 16
  %1632 = vbcast.lane.b32.xlu0 %v1622, %s1631
  %v1633 = vpop.permute.xlu0 %1632
  %s1635 = sor.u32 256, 24
  %1636 = vbcast.lane.b32.xlu0 %v1622, %s1635
  %v1637 = vpop.permute.xlu0 %1636
  %v1670 = vadd.f32 %v1391, %v1492
  %v1671 = vadd.f32 %v1394, %v1496
  %v1672 = vadd.f32 %v1397, %v1500
  %v1673 = vadd.f32 %v1400, %v1504
  %v1674 = vadd.f32 %v1403, %v1511
  %v1675 = vadd.f32 %v1406, %v1515
  %v1676 = vadd.f32 %v1409, %v1519
  %v1677 = vadd.f32 %v1412, %v1523
  %v1678 = vadd.f32 %v1415, %v1530
  %v1679 = vadd.f32 %v1418, %v1534
  %v1680 = vadd.f32 %v1421, %v1538
  %v1681 = vadd.f32 %v1424, %v1542
  %v1682 = vadd.f32 %v1427, %v1549
  %v1683 = vadd.f32 %v1430, %v1553
  %v1684 = vadd.f32 %v1433, %v1557
  %v1685 = vadd.f32 %v1436, %v1561
  %v1686 = vadd.f32 %v1439, %v1568
  %v1687 = vadd.f32 %v1442, %v1572
  %v1688 = vadd.f32 %v1445, %v1576
  %v1689 = vadd.f32 %v1448, %v1580
  %v1690 = vadd.f32 %v1451, %v1587
  %v1691 = vadd.f32 %v1454, %v1591
  %v1692 = vadd.f32 %v1457, %v1595
  %v1693 = vadd.f32 %v1460, %v1599
  %v1694 = vadd.f32 %v1463, %v1606
  %v1695 = vadd.f32 %v1466, %v1610
  %v1696 = vadd.f32 %v1469, %v1614
  %v1697 = vadd.f32 %v1472, %v1618
  %v1698 = vadd.f32 %v1475, %v1625
  %v1699 = vadd.f32 %v1478, %v1629
  %v1700 = vadd.f32 %v1481, %v1633
  %v1701 = vadd.f32 %v1484, %v1637
  %1734 = vset.pattern.permute.xlu0 0
  %1735 = vperm.xlu0 %1734, %v1670
  %v1736 = vpop.permute.xlu0 %1735
  %1737 = vset.pattern.permute.xlu0 0
  %1738 = vperm.xlu0 %1737, %v1671
  %v1739 = vpop.permute.xlu0 %1738
  %1740 = vset.pattern.permute.xlu0 0
  %1741 = vperm.xlu0 %1740, %v1672
  %v1742 = vpop.permute.xlu0 %1741
  %1743 = vset.pattern.permute.xlu0 0
  %1744 = vperm.xlu0 %1743, %v1673
  %v1745 = vpop.permute.xlu0 %1744
  %1746 = vset.pattern.permute.xlu0 0
  %1747 = vperm.xlu0 %1746, %v1674
  %v1748 = vpop.permute.xlu0 %1747
  %1749 = vset.pattern.permute.xlu0 0
  %1750 = vperm.xlu0 %1749, %v1675
  %v1751 = vpop.permute.xlu0 %1750
  %1752 = vset.pattern.permute.xlu0 0
  %1753 = vperm.xlu0 %1752, %v1676
  %v1754 = vpop.permute.xlu0 %1753
  %1755 = vset.pattern.permute.xlu0 0
  %1756 = vperm.xlu0 %1755, %v1677
  %v1757 = vpop.permute.xlu0 %1756
  %1758 = vset.pattern.permute.xlu0 0
  %1759 = vperm.xlu0 %1758, %v1678
  %v1760 = vpop.permute.xlu0 %1759
  %1761 = vset.pattern.permute.xlu0 0
  %1762 = vperm.xlu0 %1761, %v1679
  %v1763 = vpop.permute.xlu0 %1762
  %1764 = vset.pattern.permute.xlu0 0
  %1765 = vperm.xlu0 %1764, %v1680
  %v1766 = vpop.permute.xlu0 %1765
  %1767 = vset.pattern.permute.xlu0 0
  %1768 = vperm.xlu0 %1767, %v1681
  %v1769 = vpop.permute.xlu0 %1768
  %1770 = vset.pattern.permute.xlu0 0
  %1771 = vperm.xlu0 %1770, %v1682
  %v1772 = vpop.permute.xlu0 %1771
  %1773 = vset.pattern.permute.xlu0 0
  %1774 = vperm.xlu0 %1773, %v1683
  %v1775 = vpop.permute.xlu0 %1774
  %1776 = vset.pattern.permute.xlu0 0
  %1777 = vperm.xlu0 %1776, %v1684
  %v1778 = vpop.permute.xlu0 %1777
  %1779 = vset.pattern.permute.xlu0 0
  %1780 = vperm.xlu0 %1779, %v1685
  %v1781 = vpop.permute.xlu0 %1780
  %1782 = vset.pattern.permute.xlu0 0
  %1783 = vperm.xlu0 %1782, %v1686
  %v1784 = vpop.permute.xlu0 %1783
  %1785 = vset.pattern.permute.xlu0 0
  %1786 = vperm.xlu0 %1785, %v1687
  %v1787 = vpop.permute.xlu0 %1786
  %1788 = vset.pattern.permute.xlu0 0
  %1789 = vperm.xlu0 %1788, %v1688
  %v1790 = vpop.permute.xlu0 %1789
  %1791 = vset.pattern.permute.xlu0 0
  %1792 = vperm.xlu0 %1791, %v1689
  %v1793 = vpop.permute.xlu0 %1792
  %1794 = vset.pattern.permute.xlu0 0
  %1795 = vperm.xlu0 %1794, %v1690
  %v1796 = vpop.permute.xlu0 %1795
  %1797 = vset.pattern.permute.xlu0 0
  %1798 = vperm.xlu0 %1797, %v1691
  %v1799 = vpop.permute.xlu0 %1798
  %1800 = vset.pattern.permute.xlu0 0
  %1801 = vperm.xlu0 %1800, %v1692
  %v1802 = vpop.permute.xlu0 %1801
  %1803 = vset.pattern.permute.xlu0 0
  %1804 = vperm.xlu0 %1803, %v1693
  %v1805 = vpop.permute.xlu0 %1804
  %1806 = vset.pattern.permute.xlu0 0
  %1807 = vperm.xlu0 %1806, %v1694
  %v1808 = vpop.permute.xlu0 %1807
  %1809 = vset.pattern.permute.xlu0 0
  %1810 = vperm.xlu0 %1809, %v1695
  %v1811 = vpop.permute.xlu0 %1810
  %1812 = vset.pattern.permute.xlu0 0
  %1813 = vperm.xlu0 %1812, %v1696
  %v1814 = vpop.permute.xlu0 %1813
  %1815 = vset.pattern.permute.xlu0 0
  %1816 = vperm.xlu0 %1815, %v1697
  %v1817 = vpop.permute.xlu0 %1816
  %1818 = vset.pattern.permute.xlu0 0
  %1819 = vperm.xlu0 %1818, %v1698
  %v1820 = vpop.permute.xlu0 %1819
  %1821 = vset.pattern.permute.xlu0 0
  %1822 = vperm.xlu0 %1821, %v1699
  %v1823 = vpop.permute.xlu0 %1822
  %1824 = vset.pattern.permute.xlu0 0
  %1825 = vperm.xlu0 %1824, %v1700
  %v1826 = vpop.permute.xlu0 %1825
  %1827 = vset.pattern.permute.xlu0 0
  %1828 = vperm.xlu0 %1827, %v1701
  %v1829 = vpop.permute.xlu0 %1828
  %v1830 = vlaneseq
  %v1831 = vshrl.u32 %v1830, 7
  %v1832 = vsub.s32 %v625, %v1831
  %v1833 = vrot.slane %v1736, %v1832
  %v1834 = vadd.s32 %v625, 4294967288
  %v1835 = vlaneseq
  %v1836 = vshrl.u32 %v1835, 7
  %v1837 = vsub.s32 %v1834, %v1836
  %v1838 = vrot.slane %v1739, %v1837
  %vm1839 = vcmask 130112
  %v1840 = vsel %vm1839, %v1838, %v1833
  %v1841 = vadd.s32 %v625, 4294967280
  %v1842 = vlaneseq
  %v1843 = vshrl.u32 %v1842, 7
  %v1844 = vsub.s32 %v1841, %v1843
  %v1845 = vrot.slane %v1742, %v1844
  %vm1846 = vcmask 195712
  %v1847 = vsel %vm1846, %v1845, %v1840
  %v1848 = vadd.s32 %v625, 4294967272
  %v1849 = vlaneseq
  %v1850 = vshrl.u32 %v1849, 7
  %v1851 = vsub.s32 %v1848, %v1850
  %v1852 = vrot.slane %v1745, %v1851
  %vm1853 = vcmask 261312
  %v1854 = vsel %vm1853, %v1852, %v1847
  %v1855 = vlaneseq
  %v1856 = vshrl.u32 %v1855, 7
  %v1857 = vsub.s32 %v625, %v1856
  %v1858 = vrot.slane %v1748, %v1857
  %v1859 = vlaneseq
  %v1860 = vshrl.u32 %v1859, 7
  %v1861 = vsub.s32 %v1834, %v1860
  %v1862 = vrot.slane %v1751, %v1861
  %v1863 = vsel %vm1839, %v1862, %v1858
  %v1864 = vlaneseq
  %v1865 = vshrl.u32 %v1864, 7
  %v1866 = vsub.s32 %v1841, %v1865
  %v1867 = vrot.slane %v1754, %v1866
  %v1868 = vsel %vm1846, %v1867, %v1863
  %v1869 = vlaneseq
  %v1870 = vshrl.u32 %v1869, 7
  %v1871 = vsub.s32 %v1848, %v1870
  %v1872 = vrot.slane %v1757, %v1871
  %v1873 = vsel %vm1853, %v1872, %v1868
  %v1874 = vlaneseq
  %v1875 = vshrl.u32 %v1874, 7
  %v1876 = vsub.s32 %v625, %v1875
  %v1877 = vrot.slane %v1760, %v1876
  %v1878 = vlaneseq
  %v1879 = vshrl.u32 %v1878, 7
  %v1880 = vsub.s32 %v1834, %v1879
  %v1881 = vrot.slane %v1763, %v1880
  %v1882 = vsel %vm1839, %v1881, %v1877
  %v1883 = vlaneseq
  %v1884 = vshrl.u32 %v1883, 7
  %v1885 = vsub.s32 %v1841, %v1884
  %v1886 = vrot.slane %v1766, %v1885
  %v1887 = vsel %vm1846, %v1886, %v1882
  %v1888 = vlaneseq
  %v1889 = vshrl.u32 %v1888, 7
  %v1890 = vsub.s32 %v1848, %v1889
  %v1891 = vrot.slane %v1769, %v1890
  %v1892 = vsel %vm1853, %v1891, %v1887
  %v1893 = vlaneseq
  %v1894 = vshrl.u32 %v1893, 7
  %v1895 = vsub.s32 %v625, %v1894
  %v1896 = vrot.slane %v1772, %v1895
  %v1897 = vlaneseq
  %v1898 = vshrl.u32 %v1897, 7
  %v1899 = vsub.s32 %v1834, %v1898
  %v1900 = vrot.slane %v1775, %v1899
  %v1901 = vsel %vm1839, %v1900, %v1896
  %v1902 = vlaneseq
  %v1903 = vshrl.u32 %v1902, 7
  %v1904 = vsub.s32 %v1841, %v1903
  %v1905 = vrot.slane %v1778, %v1904
  %v1906 = vsel %vm1846, %v1905, %v1901
  %v1907 = vlaneseq
  %v1908 = vshrl.u32 %v1907, 7
  %v1909 = vsub.s32 %v1848, %v1908
  %v1910 = vrot.slane %v1781, %v1909
  %v1911 = vsel %vm1853, %v1910, %v1906
  %v1912 = vlaneseq
  %v1913 = vshrl.u32 %v1912, 7
  %v1914 = vsub.s32 %v625, %v1913
  %v1915 = vrot.slane %v1784, %v1914
  %v1916 = vlaneseq
  %v1917 = vshrl.u32 %v1916, 7
  %v1918 = vsub.s32 %v1834, %v1917
  %v1919 = vrot.slane %v1787, %v1918
  %v1920 = vsel %vm1839, %v1919, %v1915
  %v1921 = vlaneseq
  %v1922 = vshrl.u32 %v1921, 7
  %v1923 = vsub.s32 %v1841, %v1922
  %v1924 = vrot.slane %v1790, %v1923
  %v1925 = vsel %vm1846, %v1924, %v1920
  %v1926 = vlaneseq
  %v1927 = vshrl.u32 %v1926, 7
  %v1928 = vsub.s32 %v1848, %v1927
  %v1929 = vrot.slane %v1793, %v1928
  %v1930 = vsel %vm1853, %v1929, %v1925
  %v1931 = vlaneseq
  %v1932 = vshrl.u32 %v1931, 7
  %v1933 = vsub.s32 %v625, %v1932
  %v1934 = vrot.slane %v1796, %v1933
  %v1935 = vlaneseq
  %v1936 = vshrl.u32 %v1935, 7
  %v1937 = vsub.s32 %v1834, %v1936
  %v1938 = vrot.slane %v1799, %v1937
  %v1939 = vsel %vm1839, %v1938, %v1934
  %v1940 = vlaneseq
  %v1941 = vshrl.u32 %v1940, 7
  %v1942 = vsub.s32 %v1841, %v1941
  %v1943 = vrot.slane %v1802, %v1942
  %v1944 = vsel %vm1846, %v1943, %v1939
  %v1945 = vlaneseq
  %v1946 = vshrl.u32 %v1945, 7
  %v1947 = vsub.s32 %v1848, %v1946
  %v1948 = vrot.slane %v1805, %v1947
  %v1949 = vsel %vm1853, %v1948, %v1944
  %v1950 = vlaneseq
  %v1951 = vshrl.u32 %v1950, 7
  %v1952 = vsub.s32 %v625, %v1951
  %v1953 = vrot.slane %v1808, %v1952
  %v1954 = vlaneseq
  %v1955 = vshrl.u32 %v1954, 7
  %v1956 = vsub.s32 %v1834, %v1955
  %v1957 = vrot.slane %v1811, %v1956
  %v1958 = vsel %vm1839, %v1957, %v1953
  %v1959 = vlaneseq
  %v1960 = vshrl.u32 %v1959, 7
  %v1961 = vsub.s32 %v1841, %v1960
  %v1962 = vrot.slane %v1814, %v1961
  %v1963 = vsel %vm1846, %v1962, %v1958
  %v1964 = vlaneseq
  %v1965 = vshrl.u32 %v1964, 7
  %v1966 = vsub.s32 %v1848, %v1965
  %v1967 = vrot.slane %v1817, %v1966
  %v1968 = vsel %vm1853, %v1967, %v1963
  %v1969 = vlaneseq
  %v1970 = vshrl.u32 %v1969, 7
  %v1971 = vsub.s32 %v625, %v1970
  %v1972 = vrot.slane %v1820, %v1971
  %v1973 = vlaneseq
  %v1974 = vshrl.u32 %v1973, 7
  %v1975 = vsub.s32 %v1834, %v1974
  %v1976 = vrot.slane %v1823, %v1975
  %v1977 = vsel %vm1839, %v1976, %v1972
  %v1978 = vlaneseq
  %v1979 = vshrl.u32 %v1978, 7
  %v1980 = vsub.s32 %v1841, %v1979
  %v1981 = vrot.slane %v1826, %v1980
  %v1982 = vsel %vm1846, %v1981, %v1977
  %v1983 = vlaneseq
  %v1984 = vshrl.u32 %v1983, 7
  %v1985 = vsub.s32 %v1848, %v1984
  %v1986 = vrot.slane %v1829, %v1985
  %v1987 = vsel %vm1853, %v1986, %v1982
  %v1988 = vsel %vm785, %v1873, %v1854
  %v1989 = vsel %vm787, %v1892, %v1988
  %v1990 = vsel %vm789, %v1911, %v1989
  %v1991 = vsel %vm791, %v1930, %v1990
  %v1992 = vsel %vm793, %v1949, %v1991
  %v1993 = vsel %vm795, %v1968, %v1992
  %v1994 = vsel %vm797, %v1987, %v1993
  %v1996 = vadd.f32 %v47, %v1994
  %s1997 = scalar_lea.vmem %s4, 32
  %v1998 = vld [vmem:[%s1997] sm:$0xf]
  %v1999 = vld [vmem:[%s1997 + $0x4] sm:$0xf]
  %v2000 = vld [vmem:[%s1997 + $0x8] sm:$0xf]
  %v2001 = vld [vmem:[%s1997 + $0xc] sm:$0xf]
  %s2002 = scalar_lea.vmem %s5, 2
  %v2003 = vld [vmem:[%s2002] sm:$0x1]
  %v2005 = vlaneseq
  %v2006 = vshrl.u32 %v2005, 7
  %v2007 = vsub.s32 0, %v2006
  %v2008 = vrot.slane %v2003, %v2007
  %2010 = vrot.lane.b32.xlu0 %v81, 32
  %v2011 = vpop.permute.xlu0 %2010
  %v2016 = vunpack.c.l.b16 %v1998
  %v2017 = vunpack.c.l.b16 %v1999
  %v2018 = vunpack.c.l.b16 %v2000
  %v2019 = vunpack.c.l.b16 %v2001
  %v2020 = vpack.c.b16 %v2017, %v2016
  %v2021 = vpack.c.b16 %v2019, %v2018
  %v2025 = vsel %vm108, %v2011, 0
  %2027 = vmatprep.subr.bf16.mxu0 0
  %2028 = vmatpush1.bf16.msra.mxu0 0
  %2029 = vmatprep.subr.bf16.mxu0 0
  %2030 = vmatpush1.bf16.msra.mxu0 0
  %2031 = vmatprep.subr.bf16.mxu0 0
  %2032 = vmatpush1.bf16.msra.mxu0 0
  %2033 = vmatprep.subr.bf16.mxu0 0
  %2034 = vmatpush1.bf16.msra.mxu0 0
  %2035 = vmatprep.subr.bf16.mxu0 0
  %2036 = vmatpush1.bf16.msra.mxu0 0
  %2037 = vmatprep.subr.bf16.mxu0 0
  %2038 = vmatpush1.bf16.msra.mxu0 0
  %2039 = vmatprep.subr.bf16.mxu0 0
  %2040 = vmatpush1.bf16.msra.mxu0 %v2021
  %2041 = vmatprep.subr.bf16.mxu0 0
  %2042 = vmatpush1.bf16.msra.mxu0 %v2020
  %2043 = vmatprep.subr.bf16.mxu0 0
  %2044 = vmatpush2.bf16.msra.mxu0 0
  %2045 = vmatprep.subr.bf16.mxu0 0
  %2046 = vmatpush2.bf16.msra.mxu0 0
  %2047 = vmatprep.subr.bf16.mxu0 0
  %2048 = vmatpush2.bf16.msra.mxu0 0
  %2049 = vmatprep.subr.bf16.mxu0 0
  %2050 = vmatpush2.bf16.msra.mxu0 0
  %2051 = vmatprep.subr.bf16.mxu0 0
  %2052 = vmatpush2.bf16.msra.mxu0 0
  %2053 = vmatprep.subr.bf16.mxu0 0
  %2054 = vmatpush2.bf16.msra.mxu0 0
  %2055 = vmatprep.subr.bf16.mxu0 0
  %2056 = vmatpush2.bf16.msra.mxu0 0
  %2057 = vmatprep.subr.bf16.mxu0 0
  %2058 = vmatpush2.bf16.msra.mxu0 0
  %2059 = vmatprep.mubr.bf16.mxu0 0
  %2060 = vmatmul.mubr.bf16.gmra.mxu0 %v2025
  %v2061 = vpop.f32.mrf.mxu0
  %v2062 = vadd.f32 %v2008, %v2061
  %v2063 = vpop.f32.mrf.mxu0
  %v2064 = vpop.f32.mrf.mxu0
  %v2065 = vpop.f32.mrf.mxu0
  %2066 = vdwg.mxu0
  %2068 = vrot.lane.b32.xlu0 %v2062, 16
  %v2069 = vpop.permute.xlu0 %2068
  %2071 = vrot.lane.b32.xlu0 %v2062, 32
  %v2072 = vpop.permute.xlu0 %2071
  %2074 = vrot.lane.b32.xlu0 %v2062, 48
  %v2075 = vpop.permute.xlu0 %2074
  %2077 = vrot.lane.b32.xlu0 %v2062, 64
  %v2078 = vpop.permute.xlu0 %2077
  %2080 = vrot.lane.b32.xlu0 %v2062, 80
  %v2081 = vpop.permute.xlu0 %2080
  %2083 = vrot.lane.b32.xlu0 %v2062, 96
  %v2084 = vpop.permute.xlu0 %2083
  %2086 = vrot.lane.b32.xlu0 %v2062, 112
  %v2087 = vpop.permute.xlu0 %2086
  %v2089 = vsel %vm174, %v2062, %v2069
  %v2090 = vsel %vm108, %v2089, %v2072
  %v2091 = vsel %vm177, %v2090, %v2075
  %v2092 = vsel %vm179, %v2091, %v2078
  %v2093 = vsel %vm181, %v2092, %v2081
  %v2094 = vsel %vm183, %v2093, %v2084
  %v2095 = vsel %vm185, %v2094, %v2087
  %s2096 = scalar_lea.vmem %s2, 32
  %v2097 = vld [vmem:[%s2096] sm:$0xff]
  %v2098 = vld [vmem:[%s2096 + $0x8] sm:$0xff]
  %v2099 = vadd.f32 %v2097, %v2095
  %v2100 = vadd.f32 %v2098, %v2095
  %v2101 = vtanh.pop %v2099
  %v2102 = vtanh.pop %v2100
  %v2103 = vpack.c.bf16 %v2101, %v2101
  %v2104 = vpack.c.bf16 %v2102, %v2102
  %s2105 = scalar_lea.vmem %s6, 256
  %v2106 = vld [vmem:[%s2105] sm:$0xf]
  %v2107 = vld [vmem:[%s2105 + $0x4] sm:$0xf]
  %v2108 = vld [vmem:[%s2105 + $0x8] sm:$0xf]
  %v2109 = vld [vmem:[%s2105 + $0xc] sm:$0xf]
  %v2110 = vld [vmem:[%s2105 + $0x10] sm:$0xf]
  %v2111 = vld [vmem:[%s2105 + $0x14] sm:$0xf]
  %v2112 = vld [vmem:[%s2105 + $0x18] sm:$0xf]
  %v2113 = vld [vmem:[%s2105 + $0x1c] sm:$0xf]
  %v2114 = vld [vmem:[%s2105 + $0x20] sm:$0xf]
  %v2115 = vld [vmem:[%s2105 + $0x24] sm:$0xf]
  %v2116 = vld [vmem:[%s2105 + $0x28] sm:$0xf]
  %v2117 = vld [vmem:[%s2105 + $0x2c] sm:$0xf]
  %v2118 = vld [vmem:[%s2105 + $0x30] sm:$0xf]
  %v2119 = vld [vmem:[%s2105 + $0x34] sm:$0xf]
  %v2120 = vld [vmem:[%s2105 + $0x38] sm:$0xf]
  %v2121 = vld [vmem:[%s2105 + $0x3c] sm:$0xf]
  %v2122 = vld [vmem:[%s2105 + $0x40] sm:$0xf]
  %v2123 = vld [vmem:[%s2105 + $0x44] sm:$0xf]
  %v2124 = vld [vmem:[%s2105 + $0x48] sm:$0xf]
  %v2125 = vld [vmem:[%s2105 + $0x4c] sm:$0xf]
  %v2126 = vld [vmem:[%s2105 + $0x50] sm:$0xf]
  %v2127 = vld [vmem:[%s2105 + $0x54] sm:$0xf]
  %v2128 = vld [vmem:[%s2105 + $0x58] sm:$0xf]
  %v2129 = vld [vmem:[%s2105 + $0x5c] sm:$0xf]
  %v2130 = vld [vmem:[%s2105 + $0x60] sm:$0xf]
  %v2131 = vld [vmem:[%s2105 + $0x64] sm:$0xf]
  %v2132 = vld [vmem:[%s2105 + $0x68] sm:$0xf]
  %v2133 = vld [vmem:[%s2105 + $0x6c] sm:$0xf]
  %v2134 = vld [vmem:[%s2105 + $0x70] sm:$0xf]
  %v2135 = vld [vmem:[%s2105 + $0x74] sm:$0xf]
  %v2136 = vld [vmem:[%s2105 + $0x78] sm:$0xf]
  %v2137 = vld [vmem:[%s2105 + $0x7c] sm:$0xf]
  %v2170 = vunpack.c.l.b16 %v2106
  %v2171 = vunpack.c.l.b16 %v2107
  %v2172 = vunpack.c.l.b16 %v2108
  %v2173 = vunpack.c.l.b16 %v2109
  %v2174 = vunpack.c.l.b16 %v2110
  %v2175 = vunpack.c.l.b16 %v2111
  %v2176 = vunpack.c.l.b16 %v2112
  %v2177 = vunpack.c.l.b16 %v2113
  %v2178 = vunpack.c.l.b16 %v2114
  %v2179 = vunpack.c.l.b16 %v2115
  %v2180 = vunpack.c.l.b16 %v2116
  %v2181 = vunpack.c.l.b16 %v2117
  %v2182 = vunpack.c.l.b16 %v2118
  %v2183 = vunpack.c.l.b16 %v2119
  %v2184 = vunpack.c.l.b16 %v2120
  %v2185 = vunpack.c.l.b16 %v2121
  %v2186 = vunpack.c.l.b16 %v2122
  %v2187 = vunpack.c.l.b16 %v2123
  %v2188 = vunpack.c.l.b16 %v2124
  %v2189 = vunpack.c.l.b16 %v2125
  %v2190 = vunpack.c.l.b16 %v2126
  %v2191 = vunpack.c.l.b16 %v2127
  %v2192 = vunpack.c.l.b16 %v2128
  %v2193 = vunpack.c.l.b16 %v2129
  %v2194 = vunpack.c.l.b16 %v2130
  %v2195 = vunpack.c.l.b16 %v2131
  %v2196 = vunpack.c.l.b16 %v2132
  %v2197 = vunpack.c.l.b16 %v2133
  %v2198 = vunpack.c.l.b16 %v2134
  %v2199 = vunpack.c.l.b16 %v2135
  %v2200 = vunpack.c.l.b16 %v2136
  %v2201 = vunpack.c.l.b16 %v2137
  %v2202 = vpack.c.b16 %v2171, %v2170
  %v2203 = vpack.c.b16 %v2173, %v2172
  %v2204 = vpack.c.b16 %v2175, %v2174
  %v2205 = vpack.c.b16 %v2177, %v2176
  %v2206 = vpack.c.b16 %v2179, %v2178
  %v2207 = vpack.c.b16 %v2181, %v2180
  %v2208 = vpack.c.b16 %v2183, %v2182
  %v2209 = vpack.c.b16 %v2185, %v2184
  %v2210 = vpack.c.b16 %v2187, %v2186
  %v2211 = vpack.c.b16 %v2189, %v2188
  %v2212 = vpack.c.b16 %v2191, %v2190
  %v2213 = vpack.c.b16 %v2193, %v2192
  %v2214 = vpack.c.b16 %v2195, %v2194
  %v2215 = vpack.c.b16 %v2197, %v2196
  %v2216 = vpack.c.b16 %v2199, %v2198
  %v2217 = vpack.c.b16 %v2201, %v2200
  %2234 = vmatprep.subr.bf16.mxu0 0
  %2235 = vmatpush1.bf16.msra.mxu0 %v2209
  %2236 = vmatprep.subr.bf16.mxu0 0
  %2237 = vmatpush1.bf16.msra.mxu0 %v2208
  %2238 = vmatprep.subr.bf16.mxu0 0
  %2239 = vmatpush1.bf16.msra.mxu0 %v2207
  %2240 = vmatprep.subr.bf16.mxu0 0
  %2241 = vmatpush1.bf16.msra.mxu0 %v2206
  %2242 = vmatprep.subr.bf16.mxu0 0
  %2243 = vmatpush1.bf16.msra.mxu0 %v2205
  %2244 = vmatprep.subr.bf16.mxu0 0
  %2245 = vmatpush1.bf16.msra.mxu0 %v2204
  %2246 = vmatprep.subr.bf16.mxu0 0
  %2247 = vmatpush1.bf16.msra.mxu0 %v2203
  %2248 = vmatprep.subr.bf16.mxu0 0
  %2249 = vmatpush1.bf16.msra.mxu0 %v2202
  %2250 = vmatprep.subr.bf16.mxu0 0
  %2251 = vmatpush2.bf16.msra.mxu0 %v2217
  %2252 = vmatprep.subr.bf16.mxu0 0
  %2253 = vmatpush2.bf16.msra.mxu0 %v2216
  %2254 = vmatprep.subr.bf16.mxu0 0
  %2255 = vmatpush2.bf16.msra.mxu0 %v2215
  %2256 = vmatprep.subr.bf16.mxu0 0
  %2257 = vmatpush2.bf16.msra.mxu0 %v2214
  %2258 = vmatprep.subr.bf16.mxu0 0
  %2259 = vmatpush2.bf16.msra.mxu0 %v2213
  %2260 = vmatprep.subr.bf16.mxu0 0
  %2261 = vmatpush2.bf16.msra.mxu0 %v2212
  %2262 = vmatprep.subr.bf16.mxu0 0
  %2263 = vmatpush2.bf16.msra.mxu0 %v2211
  %2264 = vmatprep.subr.bf16.mxu0 0
  %2265 = vmatpush2.bf16.msra.mxu0 %v2210
  %2266 = vmatprep.mubr.bf16.mxu0 %v2104
  %2267 = vmatmul.mubr.bf16.gmra.mxu0 %v2103
  %v2268 = vpop.f32.mrf.mxu0
  %v2269 = vadd.f32 0.0, %v2268
  %v2270 = vpop.f32.mrf.mxu0
  %v2271 = vpop.f32.mrf.mxu0
  %v2272 = vpop.f32.mrf.mxu0
  %2273 = vdwg.mxu0
  %v2274 = vsel %vm174, %v2269, -inf
  %2275 = vmax.xlane.f32.xlu0 %v2274
  %v2276 = vpop.xlane.xlu0 %2275
  %v2277 = vsub.f32 %v2269, %v2276
  %v2278 = vmul.f32 %v2277, 1.442695
  %v2279 = vpow.pop %v2278
  %v2280 = vsel %vm174, %v2279, 0.0
  %2281 = vadd.xlane.f32.xlu0 %v2280
  %v2282 = vpop.xlane.xlu0 %2281
  %v2283 = vrcp.pop %v2282
  %v2284 = vmul.f32 %v2279, %v2283
  %v2286 = vcombine.high %v2284, %v2284
  %v2288 = vunpack.c.l.s4 1966171168
  %v2289 = vunpack.c.0.s8 %v2288
  %v2290 = vlaneseq
  %v2291 = vshrl.u32 %v2290, 7
  %v2292 = vsub.s32 %v2289, %v2291
  %v2293 = vrot.slane %v2284, %v2292
  %v2295 = vunpack.c.l.s4 1966171168
  %v2296 = vunpack.c.0.s8 %v2295
  %v2297 = vlaneseq
  %v2298 = vshrl.u32 %v2297, 7
  %v2299 = vsub.s32 %v2296, %v2298
  %v2300 = vrot.slane %v2286, %v2299
  %v2301 = vcombine.high %v2293, %v2293
  %v2302 = vcombine.high %v2300, %v2300
  %v2304 = vunpack.c.l.s4 1966171168
  %v2305 = vunpack.c.0.s8 %v2304
  %v2306 = vlaneseq
  %v2307 = vshrl.u32 %v2306, 7
  %v2308 = vsub.s32 %v2305, %v2307
  %v2309 = vrot.slane %v2293, %v2308
  %v2311 = vunpack.c.l.s4 1966171168
  %v2312 = vunpack.c.0.s8 %v2311
  %v2313 = vlaneseq
  %v2314 = vshrl.u32 %v2313, 7
  %v2315 = vsub.s32 %v2312, %v2314
  %v2316 = vrot.slane %v2300, %v2315
  %v2318 = vunpack.c.l.s4 1966171168
  %v2319 = vunpack.c.0.s8 %v2318
  %v2320 = vlaneseq
  %v2321 = vshrl.u32 %v2320, 7
  %v2322 = vsub.s32 %v2319, %v2321
  %v2323 = vrot.slane %v2301, %v2322
  %v2325 = vunpack.c.l.s4 1966171168
  %v2326 = vunpack.c.0.s8 %v2325
  %v2327 = vlaneseq
  %v2328 = vshrl.u32 %v2327, 7
  %v2329 = vsub.s32 %v2326, %v2328
  %v2330 = vrot.slane %v2302, %v2329
  %v2331 = vcombine.high %v2309, %v2309
  %v2332 = vcombine.high %v2316, %v2316
  %v2333 = vcombine.high %v2323, %v2323
  %v2334 = vcombine.high %v2330, %v2330
  %v2335 = vlaneseq
  %v2336 = vshrl.u32 %v2335, 7
  %v2337 = vsub.s32 0, %v2336
  %v2338 = vrot.slane %v2309, %v2337
  %v2339 = vlaneseq
  %v2340 = vshrl.u32 %v2339, 7
  %v2341 = vsub.s32 0, %v2340
  %v2342 = vrot.slane %v2323, %v2341
  %v2343 = vlaneseq
  %v2344 = vshrl.u32 %v2343, 7
  %v2345 = vsub.s32 0, %v2344
  %v2346 = vrot.slane %v2331, %v2345
  %v2347 = vlaneseq
  %v2348 = vshrl.u32 %v2347, 7
  %v2349 = vsub.s32 0, %v2348
  %v2350 = vrot.slane %v2333, %v2349
  %v2351 = vlaneseq
  %v2352 = vshrl.u32 %v2351, 7
  %v2353 = vsub.s32 0, %v2352
  %v2354 = vrot.slane %v2316, %v2353
  %v2355 = vlaneseq
  %v2356 = vshrl.u32 %v2355, 7
  %v2357 = vsub.s32 0, %v2356
  %v2358 = vrot.slane %v2330, %v2357
  %v2359 = vlaneseq
  %v2360 = vshrl.u32 %v2359, 7
  %v2361 = vsub.s32 0, %v2360
  %v2362 = vrot.slane %v2332, %v2361
  %v2363 = vlaneseq
  %v2364 = vshrl.u32 %v2363, 7
  %v2365 = vsub.s32 0, %v2364
  %v2366 = vrot.slane %v2334, %v2365
  %v2375 = vmul.f32 %v48, %v2338
  %v2376 = vmul.f32 %v49, %v2338
  %v2377 = vmul.f32 %v50, %v2338
  %v2378 = vmul.f32 %v51, %v2338
  %v2379 = vmul.f32 %v52, %v2342
  %v2380 = vmul.f32 %v53, %v2342
  %v2381 = vmul.f32 %v54, %v2342
  %v2382 = vmul.f32 %v55, %v2342
  %v2383 = vmul.f32 %v56, %v2346
  %v2384 = vmul.f32 %v57, %v2346
  %v2385 = vmul.f32 %v58, %v2346
  %v2386 = vmul.f32 %v59, %v2346
  %v2387 = vmul.f32 %v60, %v2350
  %v2388 = vmul.f32 %v61, %v2350
  %v2389 = vmul.f32 %v62, %v2350
  %v2390 = vmul.f32 %v63, %v2350
  %v2391 = vmul.f32 %v64, %v2354
  %v2392 = vmul.f32 %v65, %v2354
  %v2393 = vmul.f32 %v66, %v2354
  %v2394 = vmul.f32 %v67, %v2354
  %v2395 = vmul.f32 %v68, %v2358
  %v2396 = vmul.f32 %v69, %v2358
  %v2397 = vmul.f32 %v70, %v2358
  %v2398 = vmul.f32 %v71, %v2358
  %v2399 = vmul.f32 %v72, %v2362
  %v2400 = vmul.f32 %v73, %v2362
  %v2401 = vmul.f32 %v74, %v2362
  %v2402 = vmul.f32 %v75, %v2362
  %v2403 = vmul.f32 %v76, %v2366
  %v2404 = vmul.f32 %v77, %v2366
  %v2405 = vmul.f32 %v78, %v2366
  %v2406 = vmul.f32 %v79, %v2366
  %v2407 = vsel %vm174, %v2375, 0.0
  %2408 = vadd.xlane.f32.xlu0 %v2407
  %v2409 = vpop.xlane.xlu0 %2408
  %v2410 = vsel %vm174, %v2376, 0.0
  %2411 = vadd.xlane.f32.xlu0 %v2410
  %v2412 = vpop.xlane.xlu0 %2411
  %v2413 = vsel %vm174, %v2377, 0.0
  %2414 = vadd.xlane.f32.xlu0 %v2413
  %v2415 = vpop.xlane.xlu0 %2414
  %v2416 = vsel %vm174, %v2378, 0.0
  %2417 = vadd.xlane.f32.xlu0 %v2416
  %v2418 = vpop.xlane.xlu0 %2417
  %v2419 = vsel %vm174, %v2379, 0.0
  %2420 = vadd.xlane.f32.xlu0 %v2419
  %v2421 = vpop.xlane.xlu0 %2420
  %v2422 = vsel %vm174, %v2380, 0.0
  %2423 = vadd.xlane.f32.xlu0 %v2422
  %v2424 = vpop.xlane.xlu0 %2423
  %v2425 = vsel %vm174, %v2381, 0.0
  %2426 = vadd.xlane.f32.xlu0 %v2425
  %v2427 = vpop.xlane.xlu0 %2426
  %v2428 = vsel %vm174, %v2382, 0.0
  %2429 = vadd.xlane.f32.xlu0 %v2428
  %v2430 = vpop.xlane.xlu0 %2429
  %v2431 = vsel %vm174, %v2383, 0.0
  %2432 = vadd.xlane.f32.xlu0 %v2431
  %v2433 = vpop.xlane.xlu0 %2432
  %v2434 = vsel %vm174, %v2384, 0.0
  %2435 = vadd.xlane.f32.xlu0 %v2434
  %v2436 = vpop.xlane.xlu0 %2435
  %v2437 = vsel %vm174, %v2385, 0.0
  %2438 = vadd.xlane.f32.xlu0 %v2437
  %v2439 = vpop.xlane.xlu0 %2438
  %v2440 = vsel %vm174, %v2386, 0.0
  %2441 = vadd.xlane.f32.xlu0 %v2440
  %v2442 = vpop.xlane.xlu0 %2441
  %v2443 = vsel %vm174, %v2387, 0.0
  %2444 = vadd.xlane.f32.xlu0 %v2443
  %v2445 = vpop.xlane.xlu0 %2444
  %v2446 = vsel %vm174, %v2388, 0.0
  %2447 = vadd.xlane.f32.xlu0 %v2446
  %v2448 = vpop.xlane.xlu0 %2447
  %v2449 = vsel %vm174, %v2389, 0.0
  %2450 = vadd.xlane.f32.xlu0 %v2449
  %v2451 = vpop.xlane.xlu0 %2450
  %v2452 = vsel %vm174, %v2390, 0.0
  %2453 = vadd.xlane.f32.xlu0 %v2452
  %v2454 = vpop.xlane.xlu0 %2453
  %v2455 = vsel %vm174, %v2391, 0.0
  %2456 = vadd.xlane.f32.xlu0 %v2455
  %v2457 = vpop.xlane.xlu0 %2456
  %v2458 = vsel %vm174, %v2392, 0.0
  %2459 = vadd.xlane.f32.xlu0 %v2458
  %v2460 = vpop.xlane.xlu0 %2459
  %v2461 = vsel %vm174, %v2393, 0.0
  %2462 = vadd.xlane.f32.xlu0 %v2461
  %v2463 = vpop.xlane.xlu0 %2462
  %v2464 = vsel %vm174, %v2394, 0.0
  %2465 = vadd.xlane.f32.xlu0 %v2464
  %v2466 = vpop.xlane.xlu0 %2465
  %v2467 = vsel %vm174, %v2395, 0.0
  %2468 = vadd.xlane.f32.xlu0 %v2467
  %v2469 = vpop.xlane.xlu0 %2468
  %v2470 = vsel %vm174, %v2396, 0.0
  %2471 = vadd.xlane.f32.xlu0 %v2470
  %v2472 = vpop.xlane.xlu0 %2471
  %v2473 = vsel %vm174, %v2397, 0.0
  %2474 = vadd.xlane.f32.xlu0 %v2473
  %v2475 = vpop.xlane.xlu0 %2474
  %v2476 = vsel %vm174, %v2398, 0.0
  %2477 = vadd.xlane.f32.xlu0 %v2476
  %v2478 = vpop.xlane.xlu0 %2477
  %v2479 = vsel %vm174, %v2399, 0.0
  %2480 = vadd.xlane.f32.xlu0 %v2479
  %v2481 = vpop.xlane.xlu0 %2480
  %v2482 = vsel %vm174, %v2400, 0.0
  %2483 = vadd.xlane.f32.xlu0 %v2482
  %v2484 = vpop.xlane.xlu0 %2483
  %v2485 = vsel %vm174, %v2401, 0.0
  %2486 = vadd.xlane.f32.xlu0 %v2485
  %v2487 = vpop.xlane.xlu0 %2486
  %v2488 = vsel %vm174, %v2402, 0.0
  %2489 = vadd.xlane.f32.xlu0 %v2488
  %v2490 = vpop.xlane.xlu0 %2489
  %v2491 = vsel %vm174, %v2403, 0.0
  %2492 = vadd.xlane.f32.xlu0 %v2491
  %v2493 = vpop.xlane.xlu0 %2492
  %v2494 = vsel %vm174, %v2404, 0.0
  %2495 = vadd.xlane.f32.xlu0 %v2494
  %v2496 = vpop.xlane.xlu0 %2495
  %v2497 = vsel %vm174, %v2405, 0.0
  %2498 = vadd.xlane.f32.xlu0 %v2497
  %v2499 = vpop.xlane.xlu0 %2498
  %v2500 = vsel %vm174, %v2406, 0.0
  %2501 = vadd.xlane.f32.xlu0 %v2500
  %v2502 = vpop.xlane.xlu0 %2501
  %2503 = vrot.lane.b32.xlu0 %v80, 64
  %v2504 = vpop.permute.xlu0 %2503
  %v2538 = vlaneseq
  %v2539 = vshrl.u32 %v2538, 7
  %v2540 = vsub.s32 %v626, %v2539
  %v2541 = vrot.slane %v2409, %v2540
  %v2542 = vlaneseq
  %v2543 = vshrl.u32 %v2542, 7
  %v2544 = vsub.s32 %v631, %v2543
  %v2545 = vrot.slane %v2412, %v2544
  %v2546 = vsel %vm636, %v2545, %v2541
  %v2547 = vlaneseq
  %v2548 = vshrl.u32 %v2547, 7
  %v2549 = vsub.s32 %v638, %v2548
  %v2550 = vrot.slane %v2415, %v2549
  %v2551 = vsel %vm643, %v2550, %v2546
  %v2552 = vlaneseq
  %v2553 = vshrl.u32 %v2552, 7
  %v2554 = vsub.s32 %v645, %v2553
  %v2555 = vrot.slane %v2418, %v2554
  %v2556 = vsel %vm650, %v2555, %v2551
  %v2557 = vlaneseq
  %v2558 = vshrl.u32 %v2557, 7
  %v2559 = vsub.s32 %v626, %v2558
  %v2560 = vrot.slane %v2421, %v2559
  %v2561 = vlaneseq
  %v2562 = vshrl.u32 %v2561, 7
  %v2563 = vsub.s32 %v631, %v2562
  %v2564 = vrot.slane %v2424, %v2563
  %v2565 = vsel %vm636, %v2564, %v2560
  %v2566 = vlaneseq
  %v2567 = vshrl.u32 %v2566, 7
  %v2568 = vsub.s32 %v638, %v2567
  %v2569 = vrot.slane %v2427, %v2568
  %v2570 = vsel %vm643, %v2569, %v2565
  %v2571 = vlaneseq
  %v2572 = vshrl.u32 %v2571, 7
  %v2573 = vsub.s32 %v645, %v2572
  %v2574 = vrot.slane %v2430, %v2573
  %v2575 = vsel %vm650, %v2574, %v2570
  %v2576 = vlaneseq
  %v2577 = vshrl.u32 %v2576, 7
  %v2578 = vsub.s32 %v626, %v2577
  %v2579 = vrot.slane %v2433, %v2578
  %v2580 = vlaneseq
  %v2581 = vshrl.u32 %v2580, 7
  %v2582 = vsub.s32 %v631, %v2581
  %v2583 = vrot.slane %v2436, %v2582
  %v2584 = vsel %vm636, %v2583, %v2579
  %v2585 = vlaneseq
  %v2586 = vshrl.u32 %v2585, 7
  %v2587 = vsub.s32 %v638, %v2586
  %v2588 = vrot.slane %v2439, %v2587
  %v2589 = vsel %vm643, %v2588, %v2584
  %v2590 = vlaneseq
  %v2591 = vshrl.u32 %v2590, 7
  %v2592 = vsub.s32 %v645, %v2591
  %v2593 = vrot.slane %v2442, %v2592
  %v2594 = vsel %vm650, %v2593, %v2589
  %v2595 = vlaneseq
  %v2596 = vshrl.u32 %v2595, 7
  %v2597 = vsub.s32 %v626, %v2596
  %v2598 = vrot.slane %v2445, %v2597
  %v2599 = vlaneseq
  %v2600 = vshrl.u32 %v2599, 7
  %v2601 = vsub.s32 %v631, %v2600
  %v2602 = vrot.slane %v2448, %v2601
  %v2603 = vsel %vm636, %v2602, %v2598
  %v2604 = vlaneseq
  %v2605 = vshrl.u32 %v2604, 7
  %v2606 = vsub.s32 %v638, %v2605
  %v2607 = vrot.slane %v2451, %v2606
  %v2608 = vsel %vm643, %v2607, %v2603
  %v2609 = vlaneseq
  %v2610 = vshrl.u32 %v2609, 7
  %v2611 = vsub.s32 %v645, %v2610
  %v2612 = vrot.slane %v2454, %v2611
  %v2613 = vsel %vm650, %v2612, %v2608
  %v2614 = vlaneseq
  %v2615 = vshrl.u32 %v2614, 7
  %v2616 = vsub.s32 %v626, %v2615
  %v2617 = vrot.slane %v2457, %v2616
  %v2618 = vlaneseq
  %v2619 = vshrl.u32 %v2618, 7
  %v2620 = vsub.s32 %v631, %v2619
  %v2621 = vrot.slane %v2460, %v2620
  %v2622 = vsel %vm636, %v2621, %v2617
  %v2623 = vlaneseq
  %v2624 = vshrl.u32 %v2623, 7
  %v2625 = vsub.s32 %v638, %v2624
  %v2626 = vrot.slane %v2463, %v2625
  %v2627 = vsel %vm643, %v2626, %v2622
  %v2628 = vlaneseq
  %v2629 = vshrl.u32 %v2628, 7
  %v2630 = vsub.s32 %v645, %v2629
  %v2631 = vrot.slane %v2466, %v2630
  %v2632 = vsel %vm650, %v2631, %v2627
  %v2633 = vlaneseq
  %v2634 = vshrl.u32 %v2633, 7
  %v2635 = vsub.s32 %v626, %v2634
  %v2636 = vrot.slane %v2469, %v2635
  %v2637 = vlaneseq
  %v2638 = vshrl.u32 %v2637, 7
  %v2639 = vsub.s32 %v631, %v2638
  %v2640 = vrot.slane %v2472, %v2639
  %v2641 = vsel %vm636, %v2640, %v2636
  %v2642 = vlaneseq
  %v2643 = vshrl.u32 %v2642, 7
  %v2644 = vsub.s32 %v638, %v2643
  %v2645 = vrot.slane %v2475, %v2644
  %v2646 = vsel %vm643, %v2645, %v2641
  %v2647 = vlaneseq
  %v2648 = vshrl.u32 %v2647, 7
  %v2649 = vsub.s32 %v645, %v2648
  %v2650 = vrot.slane %v2478, %v2649
  %v2651 = vsel %vm650, %v2650, %v2646
  %v2652 = vlaneseq
  %v2653 = vshrl.u32 %v2652, 7
  %v2654 = vsub.s32 %v626, %v2653
  %v2655 = vrot.slane %v2481, %v2654
  %v2656 = vlaneseq
  %v2657 = vshrl.u32 %v2656, 7
  %v2658 = vsub.s32 %v631, %v2657
  %v2659 = vrot.slane %v2484, %v2658
  %v2660 = vsel %vm636, %v2659, %v2655
  %v2661 = vlaneseq
  %v2662 = vshrl.u32 %v2661, 7
  %v2663 = vsub.s32 %v638, %v2662
  %v2664 = vrot.slane %v2487, %v2663
  %v2665 = vsel %vm643, %v2664, %v2660
  %v2666 = vlaneseq
  %v2667 = vshrl.u32 %v2666, 7
  %v2668 = vsub.s32 %v645, %v2667
  %v2669 = vrot.slane %v2490, %v2668
  %v2670 = vsel %vm650, %v2669, %v2665
  %v2671 = vlaneseq
  %v2672 = vshrl.u32 %v2671, 7
  %v2673 = vsub.s32 %v626, %v2672
  %v2674 = vrot.slane %v2493, %v2673
  %v2675 = vlaneseq
  %v2676 = vshrl.u32 %v2675, 7
  %v2677 = vsub.s32 %v631, %v2676
  %v2678 = vrot.slane %v2496, %v2677
  %v2679 = vsel %vm636, %v2678, %v2674
  %v2680 = vlaneseq
  %v2681 = vshrl.u32 %v2680, 7
  %v2682 = vsub.s32 %v638, %v2681
  %v2683 = vrot.slane %v2499, %v2682
  %v2684 = vsel %vm643, %v2683, %v2679
  %v2685 = vlaneseq
  %v2686 = vshrl.u32 %v2685, 7
  %v2687 = vsub.s32 %v645, %v2686
  %v2688 = vrot.slane %v2502, %v2687
  %v2689 = vsel %vm650, %v2688, %v2684
  %v2690 = vsel %vm785, %v2575, %v2556
  %v2691 = vsel %vm787, %v2594, %v2690
  %v2692 = vsel %vm789, %v2613, %v2691
  %v2693 = vsel %vm791, %v2632, %v2692
  %v2694 = vsel %vm793, %v2651, %v2693
  %v2695 = vsel %vm795, %v2670, %v2694
  %v2696 = vsel %vm797, %v2689, %v2695
  %v2698 = vsel %vm108, %v1996, %v2504
  %v2699 = vsel %vm179, %v2698, %v2696
  %v2700 = vpack.c.bf16 %v2699, %v2699
  %s2701 = scalar_lea.vmem %s7, 96
  %v2702 = vld [vmem:[%s2701] sm:$0xff]
  %v2703 = vld [vmem:[%s2701 + $0x8] sm:$0xff]
  %v2704 = vld [vmem:[%s2701 + $0x10] sm:$0xff]
  %v2705 = vld [vmem:[%s2701 + $0x18] sm:$0xff]
  %v2706 = vld [vmem:[%s2701 + $0x20] sm:$0xff]
  %v2707 = vld [vmem:[%s2701 + $0x28] sm:$0xff]
  %v2708 = vld [vmem:[%s2701 + $0x30] sm:$0xff]
  %v2709 = vld [vmem:[%s2701 + $0x38] sm:$0xff]
  %v2710 = vld [vmem:[%s2701 + $0x40] sm:$0xff]
  %v2711 = vld [vmem:[%s2701 + $0x48] sm:$0xff]
  %v2712 = vld [vmem:[%s2701 + $0x50] sm:$0xff]
  %v2713 = vld [vmem:[%s2701 + $0x58] sm:$0xff]
  %s2714 = scalar_lea.vmem %s8, 2
  %v2715 = vld [vmem:[%s2714] sm:$0x3]
  %v2717 = vlaneseq
  %v2718 = vshrl.u32 %v2717, 7
  %v2719 = vsub.s32 0, %v2718
  %v2720 = vrot.slane %v2715, %v2719
  %v2721 = vlaneseq
  %v2722 = vshrl.u32 %v2721, 7
  %v2723 = vsub.s32 1, %v2722
  %v2724 = vrot.slane %v2715, %v2723
  %v2739 = vunpack.c.l.b16 %v2702
  %v2740 = vunpack.c.h.b16 %v2702
  %v2741 = vunpack.c.l.b16 %v2703
  %v2742 = vunpack.c.h.b16 %v2703
  %v2743 = vunpack.c.l.b16 %v2704
  %v2744 = vunpack.c.h.b16 %v2704
  %v2745 = vunpack.c.l.b16 %v2705
  %v2746 = vunpack.c.h.b16 %v2705
  %v2747 = vunpack.c.l.b16 %v2706
  %v2748 = vunpack.c.h.b16 %v2706
  %v2749 = vunpack.c.l.b16 %v2707
  %v2750 = vunpack.c.h.b16 %v2707
  %v2751 = vunpack.c.l.b16 %v2708
  %v2752 = vunpack.c.h.b16 %v2708
  %v2753 = vunpack.c.l.b16 %v2709
  %v2754 = vunpack.c.h.b16 %v2709
  %v2755 = vunpack.c.l.b16 %v2710
  %v2756 = vunpack.c.h.b16 %v2710
  %v2757 = vunpack.c.l.b16 %v2711
  %v2758 = vunpack.c.h.b16 %v2711
  %v2759 = vunpack.c.l.b16 %v2712
  %v2760 = vunpack.c.h.b16 %v2712
  %v2761 = vunpack.c.l.b16 %v2713
  %v2762 = vunpack.c.h.b16 %v2713
  %v2763 = vpack.c.b16 %v2741, %v2739
  %v2764 = vpack.c.b16 %v2742, %v2740
  %v2765 = vpack.c.b16 %v2745, %v2743
  %v2766 = vpack.c.b16 %v2746, %v2744
  %v2767 = vpack.c.b16 %v2749, %v2747
  %v2768 = vpack.c.b16 %v2750, %v2748
  %v2769 = vpack.c.b16 %v2753, %v2751
  %v2770 = vpack.c.b16 %v2754, %v2752
  %v2771 = vpack.c.b16 %v2757, %v2755
  %v2772 = vpack.c.b16 %v2758, %v2756
  %v2773 = vpack.c.b16 %v2761, %v2759
  %v2774 = vpack.c.b16 %v2762, %v2760
  %v2788 = vsel %vm183, %v2700, 0
  %2790 = vmatprep.subr.bf16.mxu0 0
  %2791 = vmatpush1.bf16.msra.mxu0 0
  %2792 = vmatprep.subr.bf16.mxu0 0
  %2793 = vmatpush1.bf16.msra.mxu0 0
  %2794 = vmatprep.subr.bf16.mxu0 %v2774
  %2795 = vmatpush1.bf16.msra.mxu0 %v2773
  %2796 = vmatprep.subr.bf16.mxu0 %v2772
  %2797 = vmatpush1.bf16.msra.mxu0 %v2771
  %2798 = vmatprep.subr.bf16.mxu0 %v2770
  %2799 = vmatpush1.bf16.msra.mxu0 %v2769
  %2800 = vmatprep.subr.bf16.mxu0 %v2768
  %2801 = vmatpush1.bf16.msra.mxu0 %v2767
  %2802 = vmatprep.subr.bf16.mxu0 %v2766
  %2803 = vmatpush1.bf16.msra.mxu0 %v2765
  %2804 = vmatprep.subr.bf16.mxu0 %v2764
  %2805 = vmatpush1.bf16.msra.mxu0 %v2763
  %2806 = vmatprep.subr.bf16.mxu0 0
  %2807 = vmatpush2.bf16.msra.mxu0 0
  %2808 = vmatprep.subr.bf16.mxu0 0
  %2809 = vmatpush2.bf16.msra.mxu0 0
  %2810 = vmatprep.subr.bf16.mxu0 0
  %2811 = vmatpush2.bf16.msra.mxu0 0
  %2812 = vmatprep.subr.bf16.mxu0 0
  %2813 = vmatpush2.bf16.msra.mxu0 0
  %2814 = vmatprep.subr.bf16.mxu0 0
  %2815 = vmatpush2.bf16.msra.mxu0 0
  %2816 = vmatprep.subr.bf16.mxu0 0
  %2817 = vmatpush2.bf16.msra.mxu0 0
  %2818 = vmatprep.subr.bf16.mxu0 0
  %2819 = vmatpush2.bf16.msra.mxu0 0
  %2820 = vmatprep.subr.bf16.mxu0 0
  %2821 = vmatpush2.bf16.msra.mxu0 0
  %2822 = vmatprep.mubr.bf16.mxu0 0
  %2823 = vmatmul.mubr.bf16.gmra.mxu0 %v2788
  %v2824 = vpop.f32.mrf.mxu0
  %v2825 = vadd.f32 %v2720, %v2824
  %v2826 = vpop.f32.mrf.mxu0
  %v2827 = vadd.f32 %v2724, %v2826
  %v2828 = vpop.f32.mrf.mxu0
  %v2829 = vpop.f32.mrf.mxu0
  %2830 = vdwg.mxu0
  %v2831 = vtanh.pop %v2825
  %v2832 = vtanh.pop %v2827
  %v2833 = vmul.f32 %v2831, 0.5
  %v2834 = vmul.f32 %v2832, 0.5
  %v2835 = vadd.f32 %v2833, 0.5
  %v2836 = vadd.f32 %v2834, 0.5
  %v2837 = vsel %vm934, %v2835, %v2831
  %v2838 = vsel %vm935, %v2836, %v2832
  %2839 = vrot.lane.b32.xlu0 %v80, 96
  %v2840 = vpop.permute.xlu0 %2839
  %v2842 = vsel %vm108, %v2504, %v2840
  %2844 = vrot.lane.b32.xlu0 %v2842, 64
  %v2845 = vpop.permute.xlu0 %2844
  %v2847 = vmul.f32 %v2837, %v2845
  %2849 = vrot.lane.b32.xlu0 %v2838, 64
  %v2850 = vpop.permute.xlu0 %2849
  %v2852 = vmul.f32 %v2837, %v2850
  %2854 = vrot.lane.b32.xlu0 %v2852, 64
  %v2855 = vpop.permute.xlu0 %2854
  %v2857 = vadd.f32 %v2847, %v2855
  %v2858 = vtanh.pop %v2857
  %2860 = vrot.lane.b32.xlu0 %v2858, 64
  %v2861 = vpop.permute.xlu0 %2860
  %v2863 = vmul.f32 %v2838, %v2861
  %2865 = vrot.lane.b32.xlu0 %v2857, 96
  %v2866 = vpop.permute.xlu0 %2865
  %v2868 = vadd.f32 %v2857, %v2866
  %2870 = vrot.lane.b32.xlu0 %v2863, 96
  %v2871 = vpop.permute.xlu0 %2870
  %v2873 = vadd.f32 %v2863, %v2871
  %v2874 = vmul.f32 %v2868, 0.5
  %v2875 = vmul.f32 %v2873, 0.5
  %v2876 = vpack.c.bf16 %v2875, %v2875
  %s2877 = scalar_lea.vmem %s4, 48
  %v2878 = vld [vmem:[%s2877] sm:$0xf]
  %v2879 = vld [vmem:[%s2877 + $0x4] sm:$0xf]
  %v2880 = vld [vmem:[%s2877 + $0x8] sm:$0xf]
  %v2881 = vld [vmem:[%s2877 + $0xc] sm:$0xf]
  %s2882 = scalar_lea.vmem %s5, 3
  %v2883 = vld [vmem:[%s2882] sm:$0x1]
  %v2885 = vlaneseq
  %v2886 = vshrl.u32 %v2885, 7
  %v2887 = vsub.s32 0, %v2886
  %v2888 = vrot.slane %v2883, %v2887
  %v2894 = vunpack.c.l.b16 %v2878
  %v2895 = vunpack.c.l.b16 %v2879
  %v2896 = vunpack.c.l.b16 %v2880
  %v2897 = vunpack.c.l.b16 %v2881
  %v2898 = vpack.c.b16 %v2895, %v2894
  %v2899 = vpack.c.b16 %v2897, %v2896
  %v2903 = vsel %vm108, %v2876, 0
  %2905 = vmatprep.subr.bf16.mxu0 0
  %2906 = vmatpush1.bf16.msra.mxu0 0
  %2907 = vmatprep.subr.bf16.mxu0 0
  %2908 = vmatpush1.bf16.msra.mxu0 0
  %2909 = vmatprep.subr.bf16.mxu0 0
  %2910 = vmatpush1.bf16.msra.mxu0 0
  %2911 = vmatprep.subr.bf16.mxu0 0
  %2912 = vmatpush1.bf16.msra.mxu0 0
  %2913 = vmatprep.subr.bf16.mxu0 0
  %2914 = vmatpush1.bf16.msra.mxu0 0
  %2915 = vmatprep.subr.bf16.mxu0 0
  %2916 = vmatpush1.bf16.msra.mxu0 0
  %2917 = vmatprep.subr.bf16.mxu0 0
  %2918 = vmatpush1.bf16.msra.mxu0 %v2899
  %2919 = vmatprep.subr.bf16.mxu0 0
  %2920 = vmatpush1.bf16.msra.mxu0 %v2898
  %2921 = vmatprep.subr.bf16.mxu0 0
  %2922 = vmatpush2.bf16.msra.mxu0 0
  %2923 = vmatprep.subr.bf16.mxu0 0
  %2924 = vmatpush2.bf16.msra.mxu0 0
  %2925 = vmatprep.subr.bf16.mxu0 0
  %2926 = vmatpush2.bf16.msra.mxu0 0
  %2927 = vmatprep.subr.bf16.mxu0 0
  %2928 = vmatpush2.bf16.msra.mxu0 0
  %2929 = vmatprep.subr.bf16.mxu0 0
  %2930 = vmatpush2.bf16.msra.mxu0 0
  %2931 = vmatprep.subr.bf16.mxu0 0
  %2932 = vmatpush2.bf16.msra.mxu0 0
  %2933 = vmatprep.subr.bf16.mxu0 0
  %2934 = vmatpush2.bf16.msra.mxu0 0
  %2935 = vmatprep.subr.bf16.mxu0 0
  %2936 = vmatpush2.bf16.msra.mxu0 0
  %2937 = vmatprep.mubr.bf16.mxu0 0
  %2938 = vmatmul.mubr.bf16.gmra.mxu0 %v2903
  %v2939 = vpop.f32.mrf.mxu0
  %v2940 = vadd.f32 %v2888, %v2939
  %v2941 = vpop.f32.mrf.mxu0
  %v2942 = vpop.f32.mrf.mxu0
  %v2943 = vpop.f32.mrf.mxu0
  %2944 = vdwg.mxu0
  %2946 = vrot.lane.b32.xlu0 %v2940, 16
  %v2947 = vpop.permute.xlu0 %2946
  %2949 = vrot.lane.b32.xlu0 %v2940, 32
  %v2950 = vpop.permute.xlu0 %2949
  %2952 = vrot.lane.b32.xlu0 %v2940, 48
  %v2953 = vpop.permute.xlu0 %2952
  %2955 = vrot.lane.b32.xlu0 %v2940, 64
  %v2956 = vpop.permute.xlu0 %2955
  %2958 = vrot.lane.b32.xlu0 %v2940, 80
  %v2959 = vpop.permute.xlu0 %2958
  %2961 = vrot.lane.b32.xlu0 %v2940, 96
  %v2962 = vpop.permute.xlu0 %2961
  %2964 = vrot.lane.b32.xlu0 %v2940, 112
  %v2965 = vpop.permute.xlu0 %2964
  %v2967 = vsel %vm174, %v2940, %v2947
  %v2968 = vsel %vm108, %v2967, %v2950
  %v2969 = vsel %vm177, %v2968, %v2953
  %v2970 = vsel %vm179, %v2969, %v2956
  %v2971 = vsel %vm181, %v2970, %v2959
  %v2972 = vsel %vm183, %v2971, %v2962
  %v2973 = vsel %vm185, %v2972, %v2965
  %s2974 = scalar_lea.vmem %s2, 48
  %v2975 = vld [vmem:[%s2974] sm:$0xff]
  %v2976 = vld [vmem:[%s2974 + $0x8] sm:$0xff]
  %v2977 = vadd.f32 %v2975, %v2973
  %v2978 = vadd.f32 %v2976, %v2973
  %v2979 = vtanh.pop %v2977
  %v2980 = vtanh.pop %v2978
  %v2981 = vpack.c.bf16 %v2979, %v2979
  %v2982 = vpack.c.bf16 %v2980, %v2980
  %s2983 = scalar_lea.vmem %s6, 384
  %v2984 = vld [vmem:[%s2983] sm:$0xf]
  %v2985 = vld [vmem:[%s2983 + $0x4] sm:$0xf]
  %v2986 = vld [vmem:[%s2983 + $0x8] sm:$0xf]
  %v2987 = vld [vmem:[%s2983 + $0xc] sm:$0xf]
  %v2988 = vld [vmem:[%s2983 + $0x10] sm:$0xf]
  %v2989 = vld [vmem:[%s2983 + $0x14] sm:$0xf]
  %v2990 = vld [vmem:[%s2983 + $0x18] sm:$0xf]
  %v2991 = vld [vmem:[%s2983 + $0x1c] sm:$0xf]
  %v2992 = vld [vmem:[%s2983 + $0x20] sm:$0xf]
  %v2993 = vld [vmem:[%s2983 + $0x24] sm:$0xf]
  %v2994 = vld [vmem:[%s2983 + $0x28] sm:$0xf]
  %v2995 = vld [vmem:[%s2983 + $0x2c] sm:$0xf]
  %v2996 = vld [vmem:[%s2983 + $0x30] sm:$0xf]
  %v2997 = vld [vmem:[%s2983 + $0x34] sm:$0xf]
  %v2998 = vld [vmem:[%s2983 + $0x38] sm:$0xf]
  %v2999 = vld [vmem:[%s2983 + $0x3c] sm:$0xf]
  %v3000 = vld [vmem:[%s2983 + $0x40] sm:$0xf]
  %v3001 = vld [vmem:[%s2983 + $0x44] sm:$0xf]
  %v3002 = vld [vmem:[%s2983 + $0x48] sm:$0xf]
  %v3003 = vld [vmem:[%s2983 + $0x4c] sm:$0xf]
  %v3004 = vld [vmem:[%s2983 + $0x50] sm:$0xf]
  %v3005 = vld [vmem:[%s2983 + $0x54] sm:$0xf]
  %v3006 = vld [vmem:[%s2983 + $0x58] sm:$0xf]
  %v3007 = vld [vmem:[%s2983 + $0x5c] sm:$0xf]
  %v3008 = vld [vmem:[%s2983 + $0x60] sm:$0xf]
  %v3009 = vld [vmem:[%s2983 + $0x64] sm:$0xf]
  %v3010 = vld [vmem:[%s2983 + $0x68] sm:$0xf]
  %v3011 = vld [vmem:[%s2983 + $0x6c] sm:$0xf]
  %v3012 = vld [vmem:[%s2983 + $0x70] sm:$0xf]
  %v3013 = vld [vmem:[%s2983 + $0x74] sm:$0xf]
  %v3014 = vld [vmem:[%s2983 + $0x78] sm:$0xf]
  %v3015 = vld [vmem:[%s2983 + $0x7c] sm:$0xf]
  %v3048 = vunpack.c.l.b16 %v2984
  %v3049 = vunpack.c.l.b16 %v2985
  %v3050 = vunpack.c.l.b16 %v2986
  %v3051 = vunpack.c.l.b16 %v2987
  %v3052 = vunpack.c.l.b16 %v2988
  %v3053 = vunpack.c.l.b16 %v2989
  %v3054 = vunpack.c.l.b16 %v2990
  %v3055 = vunpack.c.l.b16 %v2991
  %v3056 = vunpack.c.l.b16 %v2992
  %v3057 = vunpack.c.l.b16 %v2993
  %v3058 = vunpack.c.l.b16 %v2994
  %v3059 = vunpack.c.l.b16 %v2995
  %v3060 = vunpack.c.l.b16 %v2996
  %v3061 = vunpack.c.l.b16 %v2997
  %v3062 = vunpack.c.l.b16 %v2998
  %v3063 = vunpack.c.l.b16 %v2999
  %v3064 = vunpack.c.l.b16 %v3000
  %v3065 = vunpack.c.l.b16 %v3001
  %v3066 = vunpack.c.l.b16 %v3002
  %v3067 = vunpack.c.l.b16 %v3003
  %v3068 = vunpack.c.l.b16 %v3004
  %v3069 = vunpack.c.l.b16 %v3005
  %v3070 = vunpack.c.l.b16 %v3006
  %v3071 = vunpack.c.l.b16 %v3007
  %v3072 = vunpack.c.l.b16 %v3008
  %v3073 = vunpack.c.l.b16 %v3009
  %v3074 = vunpack.c.l.b16 %v3010
  %v3075 = vunpack.c.l.b16 %v3011
  %v3076 = vunpack.c.l.b16 %v3012
  %v3077 = vunpack.c.l.b16 %v3013
  %v3078 = vunpack.c.l.b16 %v3014
  %v3079 = vunpack.c.l.b16 %v3015
  %v3080 = vpack.c.b16 %v3049, %v3048
  %v3081 = vpack.c.b16 %v3051, %v3050
  %v3082 = vpack.c.b16 %v3053, %v3052
  %v3083 = vpack.c.b16 %v3055, %v3054
  %v3084 = vpack.c.b16 %v3057, %v3056
  %v3085 = vpack.c.b16 %v3059, %v3058
  %v3086 = vpack.c.b16 %v3061, %v3060
  %v3087 = vpack.c.b16 %v3063, %v3062
  %v3088 = vpack.c.b16 %v3065, %v3064
  %v3089 = vpack.c.b16 %v3067, %v3066
  %v3090 = vpack.c.b16 %v3069, %v3068
  %v3091 = vpack.c.b16 %v3071, %v3070
  %v3092 = vpack.c.b16 %v3073, %v3072
  %v3093 = vpack.c.b16 %v3075, %v3074
  %v3094 = vpack.c.b16 %v3077, %v3076
  %v3095 = vpack.c.b16 %v3079, %v3078
  %3112 = vmatprep.subr.bf16.mxu0 0
  %3113 = vmatpush1.bf16.msra.mxu0 %v3087
  %3114 = vmatprep.subr.bf16.mxu0 0
  %3115 = vmatpush1.bf16.msra.mxu0 %v3086
  %3116 = vmatprep.subr.bf16.mxu0 0
  %3117 = vmatpush1.bf16.msra.mxu0 %v3085
  %3118 = vmatprep.subr.bf16.mxu0 0
  %3119 = vmatpush1.bf16.msra.mxu0 %v3084
  %3120 = vmatprep.subr.bf16.mxu0 0
  %3121 = vmatpush1.bf16.msra.mxu0 %v3083
  %3122 = vmatprep.subr.bf16.mxu0 0
  %3123 = vmatpush1.bf16.msra.mxu0 %v3082
  %3124 = vmatprep.subr.bf16.mxu0 0
  %3125 = vmatpush1.bf16.msra.mxu0 %v3081
  %3126 = vmatprep.subr.bf16.mxu0 0
  %3127 = vmatpush1.bf16.msra.mxu0 %v3080
  %3128 = vmatprep.subr.bf16.mxu0 0
  %3129 = vmatpush2.bf16.msra.mxu0 %v3095
  %3130 = vmatprep.subr.bf16.mxu0 0
  %3131 = vmatpush2.bf16.msra.mxu0 %v3094
  %3132 = vmatprep.subr.bf16.mxu0 0
  %3133 = vmatpush2.bf16.msra.mxu0 %v3093
  %3134 = vmatprep.subr.bf16.mxu0 0
  %3135 = vmatpush2.bf16.msra.mxu0 %v3092
  %3136 = vmatprep.subr.bf16.mxu0 0
  %3137 = vmatpush2.bf16.msra.mxu0 %v3091
  %3138 = vmatprep.subr.bf16.mxu0 0
  %3139 = vmatpush2.bf16.msra.mxu0 %v3090
  %3140 = vmatprep.subr.bf16.mxu0 0
  %3141 = vmatpush2.bf16.msra.mxu0 %v3089
  %3142 = vmatprep.subr.bf16.mxu0 0
  %3143 = vmatpush2.bf16.msra.mxu0 %v3088
  %3144 = vmatprep.mubr.bf16.mxu0 %v2982
  %3145 = vmatmul.mubr.bf16.gmra.mxu0 %v2981
  %v3146 = vpop.f32.mrf.mxu0
  %v3147 = vadd.f32 0.0, %v3146
  %v3148 = vpop.f32.mrf.mxu0
  %v3149 = vpop.f32.mrf.mxu0
  %v3150 = vpop.f32.mrf.mxu0
  %3151 = vdwg.mxu0
  %v3152 = vsel %vm174, %v3147, -inf
  %3153 = vmax.xlane.f32.xlu0 %v3152
  %v3154 = vpop.xlane.xlu0 %3153
  %v3155 = vsub.f32 %v3147, %v3154
  %v3156 = vmul.f32 %v3155, 1.442695
  %v3157 = vpow.pop %v3156
  %v3158 = vsel %vm174, %v3157, 0.0
  %3159 = vadd.xlane.f32.xlu0 %v3158
  %v3160 = vpop.xlane.xlu0 %3159
  %v3161 = vrcp.pop %v3160
  %v3162 = vmul.f32 %v3157, %v3161
  %v3164 = vcombine.high %v3162, %v3162
  %v3166 = vunpack.c.l.s4 1966171168
  %v3167 = vunpack.c.0.s8 %v3166
  %v3168 = vlaneseq
  %v3169 = vshrl.u32 %v3168, 7
  %v3170 = vsub.s32 %v3167, %v3169
  %v3171 = vrot.slane %v3162, %v3170
  %v3173 = vunpack.c.l.s4 1966171168
  %v3174 = vunpack.c.0.s8 %v3173
  %v3175 = vlaneseq
  %v3176 = vshrl.u32 %v3175, 7
  %v3177 = vsub.s32 %v3174, %v3176
  %v3178 = vrot.slane %v3164, %v3177
  %v3179 = vcombine.high %v3171, %v3171
  %v3180 = vcombine.high %v3178, %v3178
  %v3182 = vunpack.c.l.s4 1966171168
  %v3183 = vunpack.c.0.s8 %v3182
  %v3184 = vlaneseq
  %v3185 = vshrl.u32 %v3184, 7
  %v3186 = vsub.s32 %v3183, %v3185
  %v3187 = vrot.slane %v3171, %v3186
  %v3189 = vunpack.c.l.s4 1966171168
  %v3190 = vunpack.c.0.s8 %v3189
  %v3191 = vlaneseq
  %v3192 = vshrl.u32 %v3191, 7
  %v3193 = vsub.s32 %v3190, %v3192
  %v3194 = vrot.slane %v3178, %v3193
  %v3196 = vunpack.c.l.s4 1966171168
  %v3197 = vunpack.c.0.s8 %v3196
  %v3198 = vlaneseq
  %v3199 = vshrl.u32 %v3198, 7
  %v3200 = vsub.s32 %v3197, %v3199
  %v3201 = vrot.slane %v3179, %v3200
  %v3203 = vunpack.c.l.s4 1966171168
  %v3204 = vunpack.c.0.s8 %v3203
  %v3205 = vlaneseq
  %v3206 = vshrl.u32 %v3205, 7
  %v3207 = vsub.s32 %v3204, %v3206
  %v3208 = vrot.slane %v3180, %v3207
  %v3209 = vcombine.high %v3187, %v3187
  %v3210 = vcombine.high %v3194, %v3194
  %v3211 = vcombine.high %v3201, %v3201
  %v3212 = vcombine.high %v3208, %v3208
  %v3213 = vlaneseq
  %v3214 = vshrl.u32 %v3213, 7
  %v3215 = vsub.s32 0, %v3214
  %v3216 = vrot.slane %v3187, %v3215
  %v3217 = vlaneseq
  %v3218 = vshrl.u32 %v3217, 7
  %v3219 = vsub.s32 0, %v3218
  %v3220 = vrot.slane %v3201, %v3219
  %v3221 = vlaneseq
  %v3222 = vshrl.u32 %v3221, 7
  %v3223 = vsub.s32 0, %v3222
  %v3224 = vrot.slane %v3209, %v3223
  %v3225 = vlaneseq
  %v3226 = vshrl.u32 %v3225, 7
  %v3227 = vsub.s32 0, %v3226
  %v3228 = vrot.slane %v3211, %v3227
  %v3229 = vlaneseq
  %v3230 = vshrl.u32 %v3229, 7
  %v3231 = vsub.s32 0, %v3230
  %v3232 = vrot.slane %v3194, %v3231
  %v3233 = vlaneseq
  %v3234 = vshrl.u32 %v3233, 7
  %v3235 = vsub.s32 0, %v3234
  %v3236 = vrot.slane %v3208, %v3235
  %v3237 = vlaneseq
  %v3238 = vshrl.u32 %v3237, 7
  %v3239 = vsub.s32 0, %v3238
  %v3240 = vrot.slane %v3210, %v3239
  %v3241 = vlaneseq
  %v3242 = vshrl.u32 %v3241, 7
  %v3243 = vsub.s32 0, %v3242
  %v3244 = vrot.slane %v3212, %v3243
  %v3253 = vmul.f32 %v48, %v3216
  %v3254 = vmul.f32 %v49, %v3216
  %v3255 = vmul.f32 %v50, %v3216
  %v3256 = vmul.f32 %v51, %v3216
  %v3257 = vmul.f32 %v52, %v3220
  %v3258 = vmul.f32 %v53, %v3220
  %v3259 = vmul.f32 %v54, %v3220
  %v3260 = vmul.f32 %v55, %v3220
  %v3261 = vmul.f32 %v56, %v3224
  %v3262 = vmul.f32 %v57, %v3224
  %v3263 = vmul.f32 %v58, %v3224
  %v3264 = vmul.f32 %v59, %v3224
  %v3265 = vmul.f32 %v60, %v3228
  %v3266 = vmul.f32 %v61, %v3228
  %v3267 = vmul.f32 %v62, %v3228
  %v3268 = vmul.f32 %v63, %v3228
  %v3269 = vmul.f32 %v64, %v3232
  %v3270 = vmul.f32 %v65, %v3232
  %v3271 = vmul.f32 %v66, %v3232
  %v3272 = vmul.f32 %v67, %v3232
  %v3273 = vmul.f32 %v68, %v3236
  %v3274 = vmul.f32 %v69, %v3236
  %v3275 = vmul.f32 %v70, %v3236
  %v3276 = vmul.f32 %v71, %v3236
  %v3277 = vmul.f32 %v72, %v3240
  %v3278 = vmul.f32 %v73, %v3240
  %v3279 = vmul.f32 %v74, %v3240
  %v3280 = vmul.f32 %v75, %v3240
  %v3281 = vmul.f32 %v76, %v3244
  %v3282 = vmul.f32 %v77, %v3244
  %v3283 = vmul.f32 %v78, %v3244
  %v3284 = vmul.f32 %v79, %v3244
  %v3285 = vsel %vm174, %v3253, 0.0
  %3286 = vadd.xlane.f32.xlu0 %v3285
  %v3287 = vpop.xlane.xlu0 %3286
  %v3288 = vsel %vm174, %v3254, 0.0
  %3289 = vadd.xlane.f32.xlu0 %v3288
  %v3290 = vpop.xlane.xlu0 %3289
  %v3291 = vsel %vm174, %v3255, 0.0
  %3292 = vadd.xlane.f32.xlu0 %v3291
  %v3293 = vpop.xlane.xlu0 %3292
  %v3294 = vsel %vm174, %v3256, 0.0
  %3295 = vadd.xlane.f32.xlu0 %v3294
  %v3296 = vpop.xlane.xlu0 %3295
  %v3297 = vsel %vm174, %v3257, 0.0
  %3298 = vadd.xlane.f32.xlu0 %v3297
  %v3299 = vpop.xlane.xlu0 %3298
  %v3300 = vsel %vm174, %v3258, 0.0
  %3301 = vadd.xlane.f32.xlu0 %v3300
  %v3302 = vpop.xlane.xlu0 %3301
  %v3303 = vsel %vm174, %v3259, 0.0
  %3304 = vadd.xlane.f32.xlu0 %v3303
  %v3305 = vpop.xlane.xlu0 %3304
  %v3306 = vsel %vm174, %v3260, 0.0
  %3307 = vadd.xlane.f32.xlu0 %v3306
  %v3308 = vpop.xlane.xlu0 %3307
  %v3309 = vsel %vm174, %v3261, 0.0
  %3310 = vadd.xlane.f32.xlu0 %v3309
  %v3311 = vpop.xlane.xlu0 %3310
  %v3312 = vsel %vm174, %v3262, 0.0
  %3313 = vadd.xlane.f32.xlu0 %v3312
  %v3314 = vpop.xlane.xlu0 %3313
  %v3315 = vsel %vm174, %v3263, 0.0
  %3316 = vadd.xlane.f32.xlu0 %v3315
  %v3317 = vpop.xlane.xlu0 %3316
  %v3318 = vsel %vm174, %v3264, 0.0
  %3319 = vadd.xlane.f32.xlu0 %v3318
  %v3320 = vpop.xlane.xlu0 %3319
  %v3321 = vsel %vm174, %v3265, 0.0
  %3322 = vadd.xlane.f32.xlu0 %v3321
  %v3323 = vpop.xlane.xlu0 %3322
  %v3324 = vsel %vm174, %v3266, 0.0
  %3325 = vadd.xlane.f32.xlu0 %v3324
  %v3326 = vpop.xlane.xlu0 %3325
  %v3327 = vsel %vm174, %v3267, 0.0
  %3328 = vadd.xlane.f32.xlu0 %v3327
  %v3329 = vpop.xlane.xlu0 %3328
  %v3330 = vsel %vm174, %v3268, 0.0
  %3331 = vadd.xlane.f32.xlu0 %v3330
  %v3332 = vpop.xlane.xlu0 %3331
  %v3333 = vsel %vm174, %v3269, 0.0
  %3334 = vadd.xlane.f32.xlu0 %v3333
  %v3335 = vpop.xlane.xlu0 %3334
  %v3336 = vsel %vm174, %v3270, 0.0
  %3337 = vadd.xlane.f32.xlu0 %v3336
  %v3338 = vpop.xlane.xlu0 %3337
  %v3339 = vsel %vm174, %v3271, 0.0
  %3340 = vadd.xlane.f32.xlu0 %v3339
  %v3341 = vpop.xlane.xlu0 %3340
  %v3342 = vsel %vm174, %v3272, 0.0
  %3343 = vadd.xlane.f32.xlu0 %v3342
  %v3344 = vpop.xlane.xlu0 %3343
  %v3345 = vsel %vm174, %v3273, 0.0
  %3346 = vadd.xlane.f32.xlu0 %v3345
  %v3347 = vpop.xlane.xlu0 %3346
  %v3348 = vsel %vm174, %v3274, 0.0
  %3349 = vadd.xlane.f32.xlu0 %v3348
  %v3350 = vpop.xlane.xlu0 %3349
  %v3351 = vsel %vm174, %v3275, 0.0
  %3352 = vadd.xlane.f32.xlu0 %v3351
  %v3353 = vpop.xlane.xlu0 %3352
  %v3354 = vsel %vm174, %v3276, 0.0
  %3355 = vadd.xlane.f32.xlu0 %v3354
  %v3356 = vpop.xlane.xlu0 %3355
  %v3357 = vsel %vm174, %v3277, 0.0
  %3358 = vadd.xlane.f32.xlu0 %v3357
  %v3359 = vpop.xlane.xlu0 %3358
  %v3360 = vsel %vm174, %v3278, 0.0
  %3361 = vadd.xlane.f32.xlu0 %v3360
  %v3362 = vpop.xlane.xlu0 %3361
  %v3363 = vsel %vm174, %v3279, 0.0
  %3364 = vadd.xlane.f32.xlu0 %v3363
  %v3365 = vpop.xlane.xlu0 %3364
  %v3366 = vsel %vm174, %v3280, 0.0
  %3367 = vadd.xlane.f32.xlu0 %v3366
  %v3368 = vpop.xlane.xlu0 %3367
  %v3369 = vsel %vm174, %v3281, 0.0
  %3370 = vadd.xlane.f32.xlu0 %v3369
  %v3371 = vpop.xlane.xlu0 %3370
  %v3372 = vsel %vm174, %v3282, 0.0
  %3373 = vadd.xlane.f32.xlu0 %v3372
  %v3374 = vpop.xlane.xlu0 %3373
  %v3375 = vsel %vm174, %v3283, 0.0
  %3376 = vadd.xlane.f32.xlu0 %v3375
  %v3377 = vpop.xlane.xlu0 %3376
  %v3378 = vsel %vm174, %v3284, 0.0
  %3379 = vadd.xlane.f32.xlu0 %v3378
  %v3380 = vpop.xlane.xlu0 %3379
  %v3382 = vlaneseq
  %v3383 = vshrl.u32 %v3382, 7
  %v3384 = vsub.s32 0, %v3383
  %v3385 = vrot.slane %v2875, %v3384
  %3387 = vbcast.lane.b32.xlu0 %v3385, 256
  %v3388 = vpop.permute.xlu0 %3387
  %s3390 = sor.u32 256, 8
  %3391 = vbcast.lane.b32.xlu0 %v3385, %s3390
  %v3392 = vpop.permute.xlu0 %3391
  %s3394 = sor.u32 256, 16
  %3395 = vbcast.lane.b32.xlu0 %v3385, %s3394
  %v3396 = vpop.permute.xlu0 %3395
  %s3398 = sor.u32 256, 24
  %3399 = vbcast.lane.b32.xlu0 %v3385, %s3398
  %v3400 = vpop.permute.xlu0 %3399
  %v3401 = vlaneseq
  %v3402 = vshrl.u32 %v3401, 7
  %v3403 = vsub.s32 1, %v3402
  %v3404 = vrot.slane %v2875, %v3403
  %3406 = vbcast.lane.b32.xlu0 %v3404, 256
  %v3407 = vpop.permute.xlu0 %3406
  %s3409 = sor.u32 256, 8
  %3410 = vbcast.lane.b32.xlu0 %v3404, %s3409
  %v3411 = vpop.permute.xlu0 %3410
  %s3413 = sor.u32 256, 16
  %3414 = vbcast.lane.b32.xlu0 %v3404, %s3413
  %v3415 = vpop.permute.xlu0 %3414
  %s3417 = sor.u32 256, 24
  %3418 = vbcast.lane.b32.xlu0 %v3404, %s3417
  %v3419 = vpop.permute.xlu0 %3418
  %v3420 = vlaneseq
  %v3421 = vshrl.u32 %v3420, 7
  %v3422 = vsub.s32 2, %v3421
  %v3423 = vrot.slane %v2875, %v3422
  %3425 = vbcast.lane.b32.xlu0 %v3423, 256
  %v3426 = vpop.permute.xlu0 %3425
  %s3428 = sor.u32 256, 8
  %3429 = vbcast.lane.b32.xlu0 %v3423, %s3428
  %v3430 = vpop.permute.xlu0 %3429
  %s3432 = sor.u32 256, 16
  %3433 = vbcast.lane.b32.xlu0 %v3423, %s3432
  %v3434 = vpop.permute.xlu0 %3433
  %s3436 = sor.u32 256, 24
  %3437 = vbcast.lane.b32.xlu0 %v3423, %s3436
  %v3438 = vpop.permute.xlu0 %3437
  %v3439 = vlaneseq
  %v3440 = vshrl.u32 %v3439, 7
  %v3441 = vsub.s32 3, %v3440
  %v3442 = vrot.slane %v2875, %v3441
  %3444 = vbcast.lane.b32.xlu0 %v3442, 256
  %v3445 = vpop.permute.xlu0 %3444
  %s3447 = sor.u32 256, 8
  %3448 = vbcast.lane.b32.xlu0 %v3442, %s3447
  %v3449 = vpop.permute.xlu0 %3448
  %s3451 = sor.u32 256, 16
  %3452 = vbcast.lane.b32.xlu0 %v3442, %s3451
  %v3453 = vpop.permute.xlu0 %3452
  %s3455 = sor.u32 256, 24
  %3456 = vbcast.lane.b32.xlu0 %v3442, %s3455
  %v3457 = vpop.permute.xlu0 %3456
  %v3458 = vlaneseq
  %v3459 = vshrl.u32 %v3458, 7
  %v3460 = vsub.s32 4, %v3459
  %v3461 = vrot.slane %v2875, %v3460
  %3463 = vbcast.lane.b32.xlu0 %v3461, 256
  %v3464 = vpop.permute.xlu0 %3463
  %s3466 = sor.u32 256, 8
  %3467 = vbcast.lane.b32.xlu0 %v3461, %s3466
  %v3468 = vpop.permute.xlu0 %3467
  %s3470 = sor.u32 256, 16
  %3471 = vbcast.lane.b32.xlu0 %v3461, %s3470
  %v3472 = vpop.permute.xlu0 %3471
  %s3474 = sor.u32 256, 24
  %3475 = vbcast.lane.b32.xlu0 %v3461, %s3474
  %v3476 = vpop.permute.xlu0 %3475
  %v3477 = vlaneseq
  %v3478 = vshrl.u32 %v3477, 7
  %v3479 = vsub.s32 5, %v3478
  %v3480 = vrot.slane %v2875, %v3479
  %3482 = vbcast.lane.b32.xlu0 %v3480, 256
  %v3483 = vpop.permute.xlu0 %3482
  %s3485 = sor.u32 256, 8
  %3486 = vbcast.lane.b32.xlu0 %v3480, %s3485
  %v3487 = vpop.permute.xlu0 %3486
  %s3489 = sor.u32 256, 16
  %3490 = vbcast.lane.b32.xlu0 %v3480, %s3489
  %v3491 = vpop.permute.xlu0 %3490
  %s3493 = sor.u32 256, 24
  %3494 = vbcast.lane.b32.xlu0 %v3480, %s3493
  %v3495 = vpop.permute.xlu0 %3494
  %v3496 = vlaneseq
  %v3497 = vshrl.u32 %v3496, 7
  %v3498 = vsub.s32 6, %v3497
  %v3499 = vrot.slane %v2875, %v3498
  %3501 = vbcast.lane.b32.xlu0 %v3499, 256
  %v3502 = vpop.permute.xlu0 %3501
  %s3504 = sor.u32 256, 8
  %3505 = vbcast.lane.b32.xlu0 %v3499, %s3504
  %v3506 = vpop.permute.xlu0 %3505
  %s3508 = sor.u32 256, 16
  %3509 = vbcast.lane.b32.xlu0 %v3499, %s3508
  %v3510 = vpop.permute.xlu0 %3509
  %s3512 = sor.u32 256, 24
  %3513 = vbcast.lane.b32.xlu0 %v3499, %s3512
  %v3514 = vpop.permute.xlu0 %3513
  %v3515 = vlaneseq
  %v3516 = vshrl.u32 %v3515, 7
  %v3517 = vsub.s32 7, %v3516
  %v3518 = vrot.slane %v2875, %v3517
  %3520 = vbcast.lane.b32.xlu0 %v3518, 256
  %v3521 = vpop.permute.xlu0 %3520
  %s3523 = sor.u32 256, 8
  %3524 = vbcast.lane.b32.xlu0 %v3518, %s3523
  %v3525 = vpop.permute.xlu0 %3524
  %s3527 = sor.u32 256, 16
  %3528 = vbcast.lane.b32.xlu0 %v3518, %s3527
  %v3529 = vpop.permute.xlu0 %3528
  %s3531 = sor.u32 256, 24
  %3532 = vbcast.lane.b32.xlu0 %v3518, %s3531
  %v3533 = vpop.permute.xlu0 %3532
  %v3566 = vadd.f32 %v3287, %v3388
  %v3567 = vadd.f32 %v3290, %v3392
  %v3568 = vadd.f32 %v3293, %v3396
  %v3569 = vadd.f32 %v3296, %v3400
  %v3570 = vadd.f32 %v3299, %v3407
  %v3571 = vadd.f32 %v3302, %v3411
  %v3572 = vadd.f32 %v3305, %v3415
  %v3573 = vadd.f32 %v3308, %v3419
  %v3574 = vadd.f32 %v3311, %v3426
  %v3575 = vadd.f32 %v3314, %v3430
  %v3576 = vadd.f32 %v3317, %v3434
  %v3577 = vadd.f32 %v3320, %v3438
  %v3578 = vadd.f32 %v3323, %v3445
  %v3579 = vadd.f32 %v3326, %v3449
  %v3580 = vadd.f32 %v3329, %v3453
  %v3581 = vadd.f32 %v3332, %v3457
  %v3582 = vadd.f32 %v3335, %v3464
  %v3583 = vadd.f32 %v3338, %v3468
  %v3584 = vadd.f32 %v3341, %v3472
  %v3585 = vadd.f32 %v3344, %v3476
  %v3586 = vadd.f32 %v3347, %v3483
  %v3587 = vadd.f32 %v3350, %v3487
  %v3588 = vadd.f32 %v3353, %v3491
  %v3589 = vadd.f32 %v3356, %v3495
  %v3590 = vadd.f32 %v3359, %v3502
  %v3591 = vadd.f32 %v3362, %v3506
  %v3592 = vadd.f32 %v3365, %v3510
  %v3593 = vadd.f32 %v3368, %v3514
  %v3594 = vadd.f32 %v3371, %v3521
  %v3595 = vadd.f32 %v3374, %v3525
  %v3596 = vadd.f32 %v3377, %v3529
  %v3597 = vadd.f32 %v3380, %v3533
  %3599 = vrot.lane.b32.xlu0 %v978, 64
  %v3600 = vpop.permute.xlu0 %3599
  %v3602 = vadd.s32 %v625, 4294967264
  %v3603 = vlaneseq
  %v3604 = vshrl.u32 %v3603, 7
  %v3605 = vsub.s32 %v3602, %v3604
  %v3606 = vrot.slane %v1736, %v3605
  %v3607 = vadd.s32 %v625, 4294967256
  %v3608 = vlaneseq
  %v3609 = vshrl.u32 %v3608, 7
  %v3610 = vsub.s32 %v3607, %v3609
  %v3611 = vrot.slane %v1739, %v3610
  %vm3612 = vcmask 392512
  %v3613 = vsel %vm3612, %v3611, %v3606
  %v3614 = vadd.s32 %v625, 4294967248
  %v3615 = vlaneseq
  %v3616 = vshrl.u32 %v3615, 7
  %v3617 = vsub.s32 %v3614, %v3616
  %v3618 = vrot.slane %v1742, %v3617
  %vm3619 = vcmask 458112
  %v3620 = vsel %vm3619, %v3618, %v3613
  %v3621 = vadd.s32 %v625, 4294967240
  %v3622 = vlaneseq
  %v3623 = vshrl.u32 %v3622, 7
  %v3624 = vsub.s32 %v3621, %v3623
  %v3625 = vrot.slane %v1745, %v3624
  %vm3626 = vcmask 523712
  %v3627 = vsel %vm3626, %v3625, %v3620
  %v3628 = vlaneseq
  %v3629 = vshrl.u32 %v3628, 7
  %v3630 = vsub.s32 %v3602, %v3629
  %v3631 = vrot.slane %v1748, %v3630
  %v3632 = vlaneseq
  %v3633 = vshrl.u32 %v3632, 7
  %v3634 = vsub.s32 %v3607, %v3633
  %v3635 = vrot.slane %v1751, %v3634
  %v3636 = vsel %vm3612, %v3635, %v3631
  %v3637 = vlaneseq
  %v3638 = vshrl.u32 %v3637, 7
  %v3639 = vsub.s32 %v3614, %v3638
  %v3640 = vrot.slane %v1754, %v3639
  %v3641 = vsel %vm3619, %v3640, %v3636
  %v3642 = vlaneseq
  %v3643 = vshrl.u32 %v3642, 7
  %v3644 = vsub.s32 %v3621, %v3643
  %v3645 = vrot.slane %v1757, %v3644
  %v3646 = vsel %vm3626, %v3645, %v3641
  %v3647 = vlaneseq
  %v3648 = vshrl.u32 %v3647, 7
  %v3649 = vsub.s32 %v3602, %v3648
  %v3650 = vrot.slane %v1760, %v3649
  %v3651 = vlaneseq
  %v3652 = vshrl.u32 %v3651, 7
  %v3653 = vsub.s32 %v3607, %v3652
  %v3654 = vrot.slane %v1763, %v3653
  %v3655 = vsel %vm3612, %v3654, %v3650
  %v3656 = vlaneseq
  %v3657 = vshrl.u32 %v3656, 7
  %v3658 = vsub.s32 %v3614, %v3657
  %v3659 = vrot.slane %v1766, %v3658
  %v3660 = vsel %vm3619, %v3659, %v3655
  %v3661 = vlaneseq
  %v3662 = vshrl.u32 %v3661, 7
  %v3663 = vsub.s32 %v3621, %v3662
  %v3664 = vrot.slane %v1769, %v3663
  %v3665 = vsel %vm3626, %v3664, %v3660
  %v3666 = vlaneseq
  %v3667 = vshrl.u32 %v3666, 7
  %v3668 = vsub.s32 %v3602, %v3667
  %v3669 = vrot.slane %v1772, %v3668
  %v3670 = vlaneseq
  %v3671 = vshrl.u32 %v3670, 7
  %v3672 = vsub.s32 %v3607, %v3671
  %v3673 = vrot.slane %v1775, %v3672
  %v3674 = vsel %vm3612, %v3673, %v3669
  %v3675 = vlaneseq
  %v3676 = vshrl.u32 %v3675, 7
  %v3677 = vsub.s32 %v3614, %v3676
  %v3678 = vrot.slane %v1778, %v3677
  %v3679 = vsel %vm3619, %v3678, %v3674
  %v3680 = vlaneseq
  %v3681 = vshrl.u32 %v3680, 7
  %v3682 = vsub.s32 %v3621, %v3681
  %v3683 = vrot.slane %v1781, %v3682
  %v3684 = vsel %vm3626, %v3683, %v3679
  %v3685 = vlaneseq
  %v3686 = vshrl.u32 %v3685, 7
  %v3687 = vsub.s32 %v3602, %v3686
  %v3688 = vrot.slane %v1784, %v3687
  %v3689 = vlaneseq
  %v3690 = vshrl.u32 %v3689, 7
  %v3691 = vsub.s32 %v3607, %v3690
  %v3692 = vrot.slane %v1787, %v3691
  %v3693 = vsel %vm3612, %v3692, %v3688
  %v3694 = vlaneseq
  %v3695 = vshrl.u32 %v3694, 7
  %v3696 = vsub.s32 %v3614, %v3695
  %v3697 = vrot.slane %v1790, %v3696
  %v3698 = vsel %vm3619, %v3697, %v3693
  %v3699 = vlaneseq
  %v3700 = vshrl.u32 %v3699, 7
  %v3701 = vsub.s32 %v3621, %v3700
  %v3702 = vrot.slane %v1793, %v3701
  %v3703 = vsel %vm3626, %v3702, %v3698
  %v3704 = vlaneseq
  %v3705 = vshrl.u32 %v3704, 7
  %v3706 = vsub.s32 %v3602, %v3705
  %v3707 = vrot.slane %v1796, %v3706
  %v3708 = vlaneseq
  %v3709 = vshrl.u32 %v3708, 7
  %v3710 = vsub.s32 %v3607, %v3709
  %v3711 = vrot.slane %v1799, %v3710
  %v3712 = vsel %vm3612, %v3711, %v3707
  %v3713 = vlaneseq
  %v3714 = vshrl.u32 %v3713, 7
  %v3715 = vsub.s32 %v3614, %v3714
  %v3716 = vrot.slane %v1802, %v3715
  %v3717 = vsel %vm3619, %v3716, %v3712
  %v3718 = vlaneseq
  %v3719 = vshrl.u32 %v3718, 7
  %v3720 = vsub.s32 %v3621, %v3719
  %v3721 = vrot.slane %v1805, %v3720
  %v3722 = vsel %vm3626, %v3721, %v3717
  %v3723 = vlaneseq
  %v3724 = vshrl.u32 %v3723, 7
  %v3725 = vsub.s32 %v3602, %v3724
  %v3726 = vrot.slane %v1808, %v3725
  %v3727 = vlaneseq
  %v3728 = vshrl.u32 %v3727, 7
  %v3729 = vsub.s32 %v3607, %v3728
  %v3730 = vrot.slane %v1811, %v3729
  %v3731 = vsel %vm3612, %v3730, %v3726
  %v3732 = vlaneseq
  %v3733 = vshrl.u32 %v3732, 7
  %v3734 = vsub.s32 %v3614, %v3733
  %v3735 = vrot.slane %v1814, %v3734
  %v3736 = vsel %vm3619, %v3735, %v3731
  %v3737 = vlaneseq
  %v3738 = vshrl.u32 %v3737, 7
  %v3739 = vsub.s32 %v3621, %v3738
  %v3740 = vrot.slane %v1817, %v3739
  %v3741 = vsel %vm3626, %v3740, %v3736
  %v3742 = vlaneseq
  %v3743 = vshrl.u32 %v3742, 7
  %v3744 = vsub.s32 %v3602, %v3743
  %v3745 = vrot.slane %v1820, %v3744
  %v3746 = vlaneseq
  %v3747 = vshrl.u32 %v3746, 7
  %v3748 = vsub.s32 %v3607, %v3747
  %v3749 = vrot.slane %v1823, %v3748
  %v3750 = vsel %vm3612, %v3749, %v3745
  %v3751 = vlaneseq
  %v3752 = vshrl.u32 %v3751, 7
  %v3753 = vsub.s32 %v3614, %v3752
  %v3754 = vrot.slane %v1826, %v3753
  %v3755 = vsel %vm3619, %v3754, %v3750
  %v3756 = vlaneseq
  %v3757 = vshrl.u32 %v3756, 7
  %v3758 = vsub.s32 %v3621, %v3757
  %v3759 = vrot.slane %v1829, %v3758
  %v3760 = vsel %vm3626, %v3759, %v3755
  %v3761 = vsel %vm785, %v3646, %v3627
  %v3762 = vsel %vm787, %v3665, %v3761
  %v3763 = vsel %vm789, %v3684, %v3762
  %v3764 = vsel %vm791, %v3703, %v3763
  %v3765 = vsel %vm793, %v3722, %v3764
  %v3766 = vsel %vm795, %v3741, %v3765
  %v3767 = vsel %vm797, %v3760, %v3766
  %3801 = vset.pattern.permute.xlu0 0
  %3802 = vperm.xlu0 %3801, %v3566
  %v3803 = vpop.permute.xlu0 %3802
  %3804 = vset.pattern.permute.xlu0 0
  %3805 = vperm.xlu0 %3804, %v3567
  %v3806 = vpop.permute.xlu0 %3805
  %3807 = vset.pattern.permute.xlu0 0
  %3808 = vperm.xlu0 %3807, %v3568
  %v3809 = vpop.permute.xlu0 %3808
  %3810 = vset.pattern.permute.xlu0 0
  %3811 = vperm.xlu0 %3810, %v3569
  %v3812 = vpop.permute.xlu0 %3811
  %3813 = vset.pattern.permute.xlu0 0
  %3814 = vperm.xlu0 %3813, %v3570
  %v3815 = vpop.permute.xlu0 %3814
  %3816 = vset.pattern.permute.xlu0 0
  %3817 = vperm.xlu0 %3816, %v3571
  %v3818 = vpop.permute.xlu0 %3817
  %3819 = vset.pattern.permute.xlu0 0
  %3820 = vperm.xlu0 %3819, %v3572
  %v3821 = vpop.permute.xlu0 %3820
  %3822 = vset.pattern.permute.xlu0 0
  %3823 = vperm.xlu0 %3822, %v3573
  %v3824 = vpop.permute.xlu0 %3823
  %3825 = vset.pattern.permute.xlu0 0
  %3826 = vperm.xlu0 %3825, %v3574
  %v3827 = vpop.permute.xlu0 %3826
  %3828 = vset.pattern.permute.xlu0 0
  %3829 = vperm.xlu0 %3828, %v3575
  %v3830 = vpop.permute.xlu0 %3829
  %3831 = vset.pattern.permute.xlu0 0
  %3832 = vperm.xlu0 %3831, %v3576
  %v3833 = vpop.permute.xlu0 %3832
  %3834 = vset.pattern.permute.xlu0 0
  %3835 = vperm.xlu0 %3834, %v3577
  %v3836 = vpop.permute.xlu0 %3835
  %3837 = vset.pattern.permute.xlu0 0
  %3838 = vperm.xlu0 %3837, %v3578
  %v3839 = vpop.permute.xlu0 %3838
  %3840 = vset.pattern.permute.xlu0 0
  %3841 = vperm.xlu0 %3840, %v3579
  %v3842 = vpop.permute.xlu0 %3841
  %3843 = vset.pattern.permute.xlu0 0
  %3844 = vperm.xlu0 %3843, %v3580
  %v3845 = vpop.permute.xlu0 %3844
  %3846 = vset.pattern.permute.xlu0 0
  %3847 = vperm.xlu0 %3846, %v3581
  %v3848 = vpop.permute.xlu0 %3847
  %3849 = vset.pattern.permute.xlu0 0
  %3850 = vperm.xlu0 %3849, %v3582
  %v3851 = vpop.permute.xlu0 %3850
  %3852 = vset.pattern.permute.xlu0 0
  %3853 = vperm.xlu0 %3852, %v3583
  %v3854 = vpop.permute.xlu0 %3853
  %3855 = vset.pattern.permute.xlu0 0
  %3856 = vperm.xlu0 %3855, %v3584
  %v3857 = vpop.permute.xlu0 %3856
  %3858 = vset.pattern.permute.xlu0 0
  %3859 = vperm.xlu0 %3858, %v3585
  %v3860 = vpop.permute.xlu0 %3859
  %3861 = vset.pattern.permute.xlu0 0
  %3862 = vperm.xlu0 %3861, %v3586
  %v3863 = vpop.permute.xlu0 %3862
  %3864 = vset.pattern.permute.xlu0 0
  %3865 = vperm.xlu0 %3864, %v3587
  %v3866 = vpop.permute.xlu0 %3865
  %3867 = vset.pattern.permute.xlu0 0
  %3868 = vperm.xlu0 %3867, %v3588
  %v3869 = vpop.permute.xlu0 %3868
  %3870 = vset.pattern.permute.xlu0 0
  %3871 = vperm.xlu0 %3870, %v3589
  %v3872 = vpop.permute.xlu0 %3871
  %3873 = vset.pattern.permute.xlu0 0
  %3874 = vperm.xlu0 %3873, %v3590
  %v3875 = vpop.permute.xlu0 %3874
  %3876 = vset.pattern.permute.xlu0 0
  %3877 = vperm.xlu0 %3876, %v3591
  %v3878 = vpop.permute.xlu0 %3877
  %3879 = vset.pattern.permute.xlu0 0
  %3880 = vperm.xlu0 %3879, %v3592
  %v3881 = vpop.permute.xlu0 %3880
  %3882 = vset.pattern.permute.xlu0 0
  %3883 = vperm.xlu0 %3882, %v3593
  %v3884 = vpop.permute.xlu0 %3883
  %3885 = vset.pattern.permute.xlu0 0
  %3886 = vperm.xlu0 %3885, %v3594
  %v3887 = vpop.permute.xlu0 %3886
  %3888 = vset.pattern.permute.xlu0 0
  %3889 = vperm.xlu0 %3888, %v3595
  %v3890 = vpop.permute.xlu0 %3889
  %3891 = vset.pattern.permute.xlu0 0
  %3892 = vperm.xlu0 %3891, %v3596
  %v3893 = vpop.permute.xlu0 %3892
  %3894 = vset.pattern.permute.xlu0 0
  %3895 = vperm.xlu0 %3894, %v3597
  %v3896 = vpop.permute.xlu0 %3895
  %v3897 = vadd.s32 %v625, 4294967200
  %v3898 = vlaneseq
  %v3899 = vshrl.u32 %v3898, 7
  %v3900 = vsub.s32 %v3897, %v3899
  %v3901 = vrot.slane %v3803, %v3900
  %v3902 = vadd.s32 %v625, 4294967192
  %v3903 = vlaneseq
  %v3904 = vshrl.u32 %v3903, 7
  %v3905 = vsub.s32 %v3902, %v3904
  %v3906 = vrot.slane %v3806, %v3905
  %vm3907 = vcmask 917312
  %v3908 = vsel %vm3907, %v3906, %v3901
  %v3909 = vadd.s32 %v625, 4294967184
  %v3910 = vlaneseq
  %v3911 = vshrl.u32 %v3910, 7
  %v3912 = vsub.s32 %v3909, %v3911
  %v3913 = vrot.slane %v3809, %v3912
  %vm3914 = vcmask 982912
  %v3915 = vsel %vm3914, %v3913, %v3908
  %v3916 = vadd.s32 %v625, 4294967176
  %v3917 = vlaneseq
  %v3918 = vshrl.u32 %v3917, 7
  %v3919 = vsub.s32 %v3916, %v3918
  %v3920 = vrot.slane %v3812, %v3919
  %vm3921 = vcmask 1048512
  %v3922 = vsel %vm3921, %v3920, %v3915
  %v3923 = vlaneseq
  %v3924 = vshrl.u32 %v3923, 7
  %v3925 = vsub.s32 %v3897, %v3924
  %v3926 = vrot.slane %v3815, %v3925
  %v3927 = vlaneseq
  %v3928 = vshrl.u32 %v3927, 7
  %v3929 = vsub.s32 %v3902, %v3928
  %v3930 = vrot.slane %v3818, %v3929
  %v3931 = vsel %vm3907, %v3930, %v3926
  %v3932 = vlaneseq
  %v3933 = vshrl.u32 %v3932, 7
  %v3934 = vsub.s32 %v3909, %v3933
  %v3935 = vrot.slane %v3821, %v3934
  %v3936 = vsel %vm3914, %v3935, %v3931
  %v3937 = vlaneseq
  %v3938 = vshrl.u32 %v3937, 7
  %v3939 = vsub.s32 %v3916, %v3938
  %v3940 = vrot.slane %v3824, %v3939
  %v3941 = vsel %vm3921, %v3940, %v3936
  %v3942 = vlaneseq
  %v3943 = vshrl.u32 %v3942, 7
  %v3944 = vsub.s32 %v3897, %v3943
  %v3945 = vrot.slane %v3827, %v3944
  %v3946 = vlaneseq
  %v3947 = vshrl.u32 %v3946, 7
  %v3948 = vsub.s32 %v3902, %v3947
  %v3949 = vrot.slane %v3830, %v3948
  %v3950 = vsel %vm3907, %v3949, %v3945
  %v3951 = vlaneseq
  %v3952 = vshrl.u32 %v3951, 7
  %v3953 = vsub.s32 %v3909, %v3952
  %v3954 = vrot.slane %v3833, %v3953
  %v3955 = vsel %vm3914, %v3954, %v3950
  %v3956 = vlaneseq
  %v3957 = vshrl.u32 %v3956, 7
  %v3958 = vsub.s32 %v3916, %v3957
  %v3959 = vrot.slane %v3836, %v3958
  %v3960 = vsel %vm3921, %v3959, %v3955
  %v3961 = vlaneseq
  %v3962 = vshrl.u32 %v3961, 7
  %v3963 = vsub.s32 %v3897, %v3962
  %v3964 = vrot.slane %v3839, %v3963
  %v3965 = vlaneseq
  %v3966 = vshrl.u32 %v3965, 7
  %v3967 = vsub.s32 %v3902, %v3966
  %v3968 = vrot.slane %v3842, %v3967
  %v3969 = vsel %vm3907, %v3968, %v3964
  %v3970 = vlaneseq
  %v3971 = vshrl.u32 %v3970, 7
  %v3972 = vsub.s32 %v3909, %v3971
  %v3973 = vrot.slane %v3845, %v3972
  %v3974 = vsel %vm3914, %v3973, %v3969
  %v3975 = vlaneseq
  %v3976 = vshrl.u32 %v3975, 7
  %v3977 = vsub.s32 %v3916, %v3976
  %v3978 = vrot.slane %v3848, %v3977
  %v3979 = vsel %vm3921, %v3978, %v3974
  %v3980 = vlaneseq
  %v3981 = vshrl.u32 %v3980, 7
  %v3982 = vsub.s32 %v3897, %v3981
  %v3983 = vrot.slane %v3851, %v3982
  %v3984 = vlaneseq
  %v3985 = vshrl.u32 %v3984, 7
  %v3986 = vsub.s32 %v3902, %v3985
  %v3987 = vrot.slane %v3854, %v3986
  %v3988 = vsel %vm3907, %v3987, %v3983
  %v3989 = vlaneseq
  %v3990 = vshrl.u32 %v3989, 7
  %v3991 = vsub.s32 %v3909, %v3990
  %v3992 = vrot.slane %v3857, %v3991
  %v3993 = vsel %vm3914, %v3992, %v3988
  %v3994 = vlaneseq
  %v3995 = vshrl.u32 %v3994, 7
  %v3996 = vsub.s32 %v3916, %v3995
  %v3997 = vrot.slane %v3860, %v3996
  %v3998 = vsel %vm3921, %v3997, %v3993
  %v3999 = vlaneseq
  %v4000 = vshrl.u32 %v3999, 7
  %v4001 = vsub.s32 %v3897, %v4000
  %v4002 = vrot.slane %v3863, %v4001
  %v4003 = vlaneseq
  %v4004 = vshrl.u32 %v4003, 7
  %v4005 = vsub.s32 %v3902, %v4004
  %v4006 = vrot.slane %v3866, %v4005
  %v4007 = vsel %vm3907, %v4006, %v4002
  %v4008 = vlaneseq
  %v4009 = vshrl.u32 %v4008, 7
  %v4010 = vsub.s32 %v3909, %v4009
  %v4011 = vrot.slane %v3869, %v4010
  %v4012 = vsel %vm3914, %v4011, %v4007
  %v4013 = vlaneseq
  %v4014 = vshrl.u32 %v4013, 7
  %v4015 = vsub.s32 %v3916, %v4014
  %v4016 = vrot.slane %v3872, %v4015
  %v4017 = vsel %vm3921, %v4016, %v4012
  %v4018 = vlaneseq
  %v4019 = vshrl.u32 %v4018, 7
  %v4020 = vsub.s32 %v3897, %v4019
  %v4021 = vrot.slane %v3875, %v4020
  %v4022 = vlaneseq
  %v4023 = vshrl.u32 %v4022, 7
  %v4024 = vsub.s32 %v3902, %v4023
  %v4025 = vrot.slane %v3878, %v4024
  %v4026 = vsel %vm3907, %v4025, %v4021
  %v4027 = vlaneseq
  %v4028 = vshrl.u32 %v4027, 7
  %v4029 = vsub.s32 %v3909, %v4028
  %v4030 = vrot.slane %v3881, %v4029
  %v4031 = vsel %vm3914, %v4030, %v4026
  %v4032 = vlaneseq
  %v4033 = vshrl.u32 %v4032, 7
  %v4034 = vsub.s32 %v3916, %v4033
  %v4035 = vrot.slane %v3884, %v4034
  %v4036 = vsel %vm3921, %v4035, %v4031
  %v4037 = vlaneseq
  %v4038 = vshrl.u32 %v4037, 7
  %v4039 = vsub.s32 %v3897, %v4038
  %v4040 = vrot.slane %v3887, %v4039
  %v4041 = vlaneseq
  %v4042 = vshrl.u32 %v4041, 7
  %v4043 = vsub.s32 %v3902, %v4042
  %v4044 = vrot.slane %v3890, %v4043
  %v4045 = vsel %vm3907, %v4044, %v4040
  %v4046 = vlaneseq
  %v4047 = vshrl.u32 %v4046, 7
  %v4048 = vsub.s32 %v3909, %v4047
  %v4049 = vrot.slane %v3893, %v4048
  %v4050 = vsel %vm3914, %v4049, %v4045
  %v4051 = vlaneseq
  %v4052 = vshrl.u32 %v4051, 7
  %v4053 = vsub.s32 %v3916, %v4052
  %v4054 = vrot.slane %v3896, %v4053
  %v4055 = vsel %vm3921, %v4054, %v4050
  %v4056 = vsel %vm785, %v3941, %v3922
  %v4057 = vsel %vm787, %v3960, %v4056
  %v4058 = vsel %vm789, %v3979, %v4057
  %v4059 = vsel %vm791, %v3998, %v4058
  %v4060 = vsel %vm793, %v4017, %v4059
  %v4061 = vsel %vm795, %v4036, %v4060
  %v4062 = vsel %vm797, %v4055, %v4061
  %v4064 = vsel %vm108, %v3600, %v3767
  %v4065 = vsel %vm179, %v4064, %v2874
  %v4066 = vsel %vm183, %v4065, %v4062
  %4067 = vst [vmem:[#allocation2] sm:$0xff] %v4066
  %4068 = vst [vmem:[%s11] sm:$0xff] %v4066
  %v4069 = vpack.c.bf16 %v3567, %v3566
  %v4070 = vpack.c.bf16 %v3569, %v3568
  %v4071 = vpack.c.bf16 %v3571, %v3570
  %v4072 = vpack.c.bf16 %v3573, %v3572
  %v4073 = vpack.c.bf16 %v3575, %v3574
  %v4074 = vpack.c.bf16 %v3577, %v3576
  %v4075 = vpack.c.bf16 %v3579, %v3578
  %v4076 = vpack.c.bf16 %v3581, %v3580
  %v4077 = vpack.c.bf16 %v3583, %v3582
  %v4078 = vpack.c.bf16 %v3585, %v3584
  %v4079 = vpack.c.bf16 %v3587, %v3586
  %v4080 = vpack.c.bf16 %v3589, %v3588
  %v4081 = vpack.c.bf16 %v3591, %v3590
  %v4082 = vpack.c.bf16 %v3593, %v3592
  %v4083 = vpack.c.bf16 %v3595, %v3594
  %v4084 = vpack.c.bf16 %v3597, %v3596
  %v4085 = vld [vmem:[%s9] sm:$0xf]
  %v4086 = vld [vmem:[%s9 + $0x4] sm:$0xf]
  %v4087 = vld [vmem:[%s9 + $0x8] sm:$0xf]
  %v4088 = vld [vmem:[%s9 + $0xc] sm:$0xf]
  %v4089 = vld [vmem:[%s10] sm:$0x1]
  %v4091 = vlaneseq
  %v4092 = vshrl.u32 %v4091, 7
  %v4093 = vsub.s32 0, %v4092
  %v4094 = vrot.slane %v4089, %v4093
  %v4112 = vunpack.c.l.b16 %v4069
  %v4113 = vunpack.c.h.b16 %v4069
  %v4114 = vunpack.c.l.b16 %v4070
  %v4115 = vunpack.c.h.b16 %v4070
  %v4116 = vunpack.c.l.b16 %v4071
  %v4117 = vunpack.c.h.b16 %v4071
  %v4118 = vunpack.c.l.b16 %v4072
  %v4119 = vunpack.c.h.b16 %v4072
  %v4120 = vunpack.c.l.b16 %v4073
  %v4121 = vunpack.c.h.b16 %v4073
  %v4122 = vunpack.c.l.b16 %v4074
  %v4123 = vunpack.c.h.b16 %v4074
  %v4124 = vunpack.c.l.b16 %v4075
  %v4125 = vunpack.c.h.b16 %v4075
  %v4126 = vunpack.c.l.b16 %v4076
  %v4127 = vunpack.c.h.b16 %v4076
  %v4128 = vunpack.c.l.b16 %v4077
  %v4129 = vunpack.c.h.b16 %v4077
  %v4130 = vunpack.c.l.b16 %v4078
  %v4131 = vunpack.c.h.b16 %v4078
  %v4132 = vunpack.c.l.b16 %v4079
  %v4133 = vunpack.c.h.b16 %v4079
  %v4134 = vunpack.c.l.b16 %v4080
  %v4135 = vunpack.c.h.b16 %v4080
  %v4136 = vunpack.c.l.b16 %v4081
  %v4137 = vunpack.c.h.b16 %v4081
  %v4138 = vunpack.c.l.b16 %v4082
  %v4139 = vunpack.c.h.b16 %v4082
  %v4140 = vunpack.c.l.b16 %v4083
  %v4141 = vunpack.c.h.b16 %v4083
  %v4142 = vunpack.c.l.b16 %v4084
  %v4143 = vunpack.c.h.b16 %v4084
  %4144 = vset.pattern.permute.xlu0 0
  %4145 = vperm.xlu0 %4144, %v4112
  %v4146 = vpop.permute.xlu0 %4145
  %4147 = vset.pattern.permute.xlu0 0
  %4148 = vperm.xlu0 %4147, %v4113
  %v4149 = vpop.permute.xlu0 %4148
  %4150 = vset.pattern.permute.xlu0 0
  %4151 = vperm.xlu0 %4150, %v4114
  %v4152 = vpop.permute.xlu0 %4151
  %4153 = vset.pattern.permute.xlu0 0
  %4154 = vperm.xlu0 %4153, %v4115
  %v4155 = vpop.permute.xlu0 %4154
  %4156 = vset.pattern.permute.xlu0 0
  %4157 = vperm.xlu0 %4156, %v4116
  %v4158 = vpop.permute.xlu0 %4157
  %4159 = vset.pattern.permute.xlu0 0
  %4160 = vperm.xlu0 %4159, %v4117
  %v4161 = vpop.permute.xlu0 %4160
  %4162 = vset.pattern.permute.xlu0 0
  %4163 = vperm.xlu0 %4162, %v4118
  %v4164 = vpop.permute.xlu0 %4163
  %4165 = vset.pattern.permute.xlu0 0
  %4166 = vperm.xlu0 %4165, %v4119
  %v4167 = vpop.permute.xlu0 %4166
  %4168 = vset.pattern.permute.xlu0 0
  %4169 = vperm.xlu0 %4168, %v4120
  %v4170 = vpop.permute.xlu0 %4169
  %4171 = vset.pattern.permute.xlu0 0
  %4172 = vperm.xlu0 %4171, %v4121
  %v4173 = vpop.permute.xlu0 %4172
  %4174 = vset.pattern.permute.xlu0 0
  %4175 = vperm.xlu0 %4174, %v4122
  %v4176 = vpop.permute.xlu0 %4175
  %4177 = vset.pattern.permute.xlu0 0
  %4178 = vperm.xlu0 %4177, %v4123
  %v4179 = vpop.permute.xlu0 %4178
  %4180 = vset.pattern.permute.xlu0 0
  %4181 = vperm.xlu0 %4180, %v4124
  %v4182 = vpop.permute.xlu0 %4181
  %4183 = vset.pattern.permute.xlu0 0
  %4184 = vperm.xlu0 %4183, %v4125
  %v4185 = vpop.permute.xlu0 %4184
  %4186 = vset.pattern.permute.xlu0 0
  %4187 = vperm.xlu0 %4186, %v4126
  %v4188 = vpop.permute.xlu0 %4187
  %4189 = vset.pattern.permute.xlu0 0
  %4190 = vperm.xlu0 %4189, %v4127
  %v4191 = vpop.permute.xlu0 %4190
  %4192 = vset.pattern.permute.xlu0 0
  %4193 = vperm.xlu0 %4192, %v4128
  %v4194 = vpop.permute.xlu0 %4193
  %4195 = vset.pattern.permute.xlu0 0
  %4196 = vperm.xlu0 %4195, %v4129
  %v4197 = vpop.permute.xlu0 %4196
  %4198 = vset.pattern.permute.xlu0 0
  %4199 = vperm.xlu0 %4198, %v4130
  %v4200 = vpop.permute.xlu0 %4199
  %4201 = vset.pattern.permute.xlu0 0
  %4202 = vperm.xlu0 %4201, %v4131
  %v4203 = vpop.permute.xlu0 %4202
  %4204 = vset.pattern.permute.xlu0 0
  %4205 = vperm.xlu0 %4204, %v4132
  %v4206 = vpop.permute.xlu0 %4205
  %4207 = vset.pattern.permute.xlu0 0
  %4208 = vperm.xlu0 %4207, %v4133
  %v4209 = vpop.permute.xlu0 %4208
  %4210 = vset.pattern.permute.xlu0 0
  %4211 = vperm.xlu0 %4210, %v4134
  %v4212 = vpop.permute.xlu0 %4211
  %4213 = vset.pattern.permute.xlu0 0
  %4214 = vperm.xlu0 %4213, %v4135
  %v4215 = vpop.permute.xlu0 %4214
  %4216 = vset.pattern.permute.xlu0 0
  %4217 = vperm.xlu0 %4216, %v4136
  %v4218 = vpop.permute.xlu0 %4217
  %4219 = vset.pattern.permute.xlu0 0
  %4220 = vperm.xlu0 %4219, %v4137
  %v4221 = vpop.permute.xlu0 %4220
  %4222 = vset.pattern.permute.xlu0 0
  %4223 = vperm.xlu0 %4222, %v4138
  %v4224 = vpop.permute.xlu0 %4223
  %4225 = vset.pattern.permute.xlu0 0
  %4226 = vperm.xlu0 %4225, %v4139
  %v4227 = vpop.permute.xlu0 %4226
  %4228 = vset.pattern.permute.xlu0 0
  %4229 = vperm.xlu0 %4228, %v4140
  %v4230 = vpop.permute.xlu0 %4229
  %4231 = vset.pattern.permute.xlu0 0
  %4232 = vperm.xlu0 %4231, %v4141
  %v4233 = vpop.permute.xlu0 %4232
  %4234 = vset.pattern.permute.xlu0 0
  %4235 = vperm.xlu0 %4234, %v4142
  %v4236 = vpop.permute.xlu0 %4235
  %4237 = vset.pattern.permute.xlu0 0
  %4238 = vperm.xlu0 %4237, %v4143
  %v4239 = vpop.permute.xlu0 %4238
  %v4240 = vlaneseq
  %v4241 = vshrl.u32 %v4240, 7
  %v4242 = vsub.s32 %v625, %v4241
  %v4243 = vrot.slane %v4146, %v4242
  %v4244 = vlaneseq
  %v4245 = vshrl.u32 %v4244, 7
  %v4246 = vsub.s32 %v1834, %v4245
  %v4247 = vrot.slane %v4149, %v4246
  %v4248 = vsel %vm1839, %v4247, %v4243
  %v4249 = vlaneseq
  %v4250 = vshrl.u32 %v4249, 7
  %v4251 = vsub.s32 %v1841, %v4250
  %v4252 = vrot.slane %v4152, %v4251
  %v4253 = vsel %vm1846, %v4252, %v4248
  %v4254 = vlaneseq
  %v4255 = vshrl.u32 %v4254, 7
  %v4256 = vsub.s32 %v1848, %v4255
  %v4257 = vrot.slane %v4155, %v4256
  %v4258 = vsel %vm1853, %v4257, %v4253
  %v4259 = vlaneseq
  %v4260 = vshrl.u32 %v4259, 7
  %v4261 = vsub.s32 %v625, %v4260
  %v4262 = vrot.slane %v4158, %v4261
  %v4263 = vlaneseq
  %v4264 = vshrl.u32 %v4263, 7
  %v4265 = vsub.s32 %v1834, %v4264
  %v4266 = vrot.slane %v4161, %v4265
  %v4267 = vsel %vm1839, %v4266, %v4262
  %v4268 = vlaneseq
  %v4269 = vshrl.u32 %v4268, 7
  %v4270 = vsub.s32 %v1841, %v4269
  %v4271 = vrot.slane %v4164, %v4270
  %v4272 = vsel %vm1846, %v4271, %v4267
  %v4273 = vlaneseq
  %v4274 = vshrl.u32 %v4273, 7
  %v4275 = vsub.s32 %v1848, %v4274
  %v4276 = vrot.slane %v4167, %v4275
  %v4277 = vsel %vm1853, %v4276, %v4272
  %v4278 = vlaneseq
  %v4279 = vshrl.u32 %v4278, 7
  %v4280 = vsub.s32 %v625, %v4279
  %v4281 = vrot.slane %v4170, %v4280
  %v4282 = vlaneseq
  %v4283 = vshrl.u32 %v4282, 7
  %v4284 = vsub.s32 %v1834, %v4283
  %v4285 = vrot.slane %v4173, %v4284
  %v4286 = vsel %vm1839, %v4285, %v4281
  %v4287 = vlaneseq
  %v4288 = vshrl.u32 %v4287, 7
  %v4289 = vsub.s32 %v1841, %v4288
  %v4290 = vrot.slane %v4176, %v4289
  %v4291 = vsel %vm1846, %v4290, %v4286
  %v4292 = vlaneseq
  %v4293 = vshrl.u32 %v4292, 7
  %v4294 = vsub.s32 %v1848, %v4293
  %v4295 = vrot.slane %v4179, %v4294
  %v4296 = vsel %vm1853, %v4295, %v4291
  %v4297 = vlaneseq
  %v4298 = vshrl.u32 %v4297, 7
  %v4299 = vsub.s32 %v625, %v4298
  %v4300 = vrot.slane %v4182, %v4299
  %v4301 = vlaneseq
  %v4302 = vshrl.u32 %v4301, 7
  %v4303 = vsub.s32 %v1834, %v4302
  %v4304 = vrot.slane %v4185, %v4303
  %v4305 = vsel %vm1839, %v4304, %v4300
  %v4306 = vlaneseq
  %v4307 = vshrl.u32 %v4306, 7
  %v4308 = vsub.s32 %v1841, %v4307
  %v4309 = vrot.slane %v4188, %v4308
  %v4310 = vsel %vm1846, %v4309, %v4305
  %v4311 = vlaneseq
  %v4312 = vshrl.u32 %v4311, 7
  %v4313 = vsub.s32 %v1848, %v4312
  %v4314 = vrot.slane %v4191, %v4313
  %v4315 = vsel %vm1853, %v4314, %v4310
  %v4316 = vlaneseq
  %v4317 = vshrl.u32 %v4316, 7
  %v4318 = vsub.s32 %v625, %v4317
  %v4319 = vrot.slane %v4194, %v4318
  %v4320 = vlaneseq
  %v4321 = vshrl.u32 %v4320, 7
  %v4322 = vsub.s32 %v1834, %v4321
  %v4323 = vrot.slane %v4197, %v4322
  %v4324 = vsel %vm1839, %v4323, %v4319
  %v4325 = vlaneseq
  %v4326 = vshrl.u32 %v4325, 7
  %v4327 = vsub.s32 %v1841, %v4326
  %v4328 = vrot.slane %v4200, %v4327
  %v4329 = vsel %vm1846, %v4328, %v4324
  %v4330 = vlaneseq
  %v4331 = vshrl.u32 %v4330, 7
  %v4332 = vsub.s32 %v1848, %v4331
  %v4333 = vrot.slane %v4203, %v4332
  %v4334 = vsel %vm1853, %v4333, %v4329
  %v4335 = vlaneseq
  %v4336 = vshrl.u32 %v4335, 7
  %v4337 = vsub.s32 %v625, %v4336
  %v4338 = vrot.slane %v4206, %v4337
  %v4339 = vlaneseq
  %v4340 = vshrl.u32 %v4339, 7
  %v4341 = vsub.s32 %v1834, %v4340
  %v4342 = vrot.slane %v4209, %v4341
  %v4343 = vsel %vm1839, %v4342, %v4338
  %v4344 = vlaneseq
  %v4345 = vshrl.u32 %v4344, 7
  %v4346 = vsub.s32 %v1841, %v4345
  %v4347 = vrot.slane %v4212, %v4346
  %v4348 = vsel %vm1846, %v4347, %v4343
  %v4349 = vlaneseq
  %v4350 = vshrl.u32 %v4349, 7
  %v4351 = vsub.s32 %v1848, %v4350
  %v4352 = vrot.slane %v4215, %v4351
  %v4353 = vsel %vm1853, %v4352, %v4348
  %v4354 = vlaneseq
  %v4355 = vshrl.u32 %v4354, 7
  %v4356 = vsub.s32 %v625, %v4355
  %v4357 = vrot.slane %v4218, %v4356
  %v4358 = vlaneseq
  %v4359 = vshrl.u32 %v4358, 7
  %v4360 = vsub.s32 %v1834, %v4359
  %v4361 = vrot.slane %v4221, %v4360
  %v4362 = vsel %vm1839, %v4361, %v4357
  %v4363 = vlaneseq
  %v4364 = vshrl.u32 %v4363, 7
  %v4365 = vsub.s32 %v1841, %v4364
  %v4366 = vrot.slane %v4224, %v4365
  %v4367 = vsel %vm1846, %v4366, %v4362
  %v4368 = vlaneseq
  %v4369 = vshrl.u32 %v4368, 7
  %v4370 = vsub.s32 %v1848, %v4369
  %v4371 = vrot.slane %v4227, %v4370
  %v4372 = vsel %vm1853, %v4371, %v4367
  %v4373 = vlaneseq
  %v4374 = vshrl.u32 %v4373, 7
  %v4375 = vsub.s32 %v625, %v4374
  %v4376 = vrot.slane %v4230, %v4375
  %v4377 = vlaneseq
  %v4378 = vshrl.u32 %v4377, 7
  %v4379 = vsub.s32 %v1834, %v4378
  %v4380 = vrot.slane %v4233, %v4379
  %v4381 = vsel %vm1839, %v4380, %v4376
  %v4382 = vlaneseq
  %v4383 = vshrl.u32 %v4382, 7
  %v4384 = vsub.s32 %v1841, %v4383
  %v4385 = vrot.slane %v4236, %v4384
  %v4386 = vsel %vm1846, %v4385, %v4381
  %v4387 = vlaneseq
  %v4388 = vshrl.u32 %v4387, 7
  %v4389 = vsub.s32 %v1848, %v4388
  %v4390 = vrot.slane %v4239, %v4389
  %v4391 = vsel %vm1853, %v4390, %v4386
  %v4392 = vsel %vm785, %v4277, %v4258
  %v4393 = vsel %vm787, %v4296, %v4392
  %v4394 = vsel %vm789, %v4315, %v4393
  %v4395 = vsel %vm791, %v4334, %v4394
  %v4396 = vsel %vm793, %v4353, %v4395
  %v4397 = vsel %vm795, %v4372, %v4396
  %v4398 = vsel %vm797, %v4391, %v4397
  %v4399 = vpack.c.b16 %v4398, %v4398
  %v4404 = vunpack.c.l.b16 %v4085
  %v4405 = vunpack.c.l.b16 %v4086
  %v4406 = vunpack.c.l.b16 %v4087
  %v4407 = vunpack.c.l.b16 %v4088
  %v4408 = vpack.c.b16 %v4405, %v4404
  %v4409 = vpack.c.b16 %v4407, %v4406
  %v4413 = vsel %vm108, %v4399, 0
  %4415 = vmatprep.subr.bf16.mxu0 0
  %4416 = vmatpush1.bf16.msra.mxu0 0
  %4417 = vmatprep.subr.bf16.mxu0 0
  %4418 = vmatpush1.bf16.msra.mxu0 0
  %4419 = vmatprep.subr.bf16.mxu0 0
  %4420 = vmatpush1.bf16.msra.mxu0 0
  %4421 = vmatprep.subr.bf16.mxu0 0
  %4422 = vmatpush1.bf16.msra.mxu0 0
  %4423 = vmatprep.subr.bf16.mxu0 0
  %4424 = vmatpush1.bf16.msra.mxu0 0
  %4425 = vmatprep.subr.bf16.mxu0 0
  %4426 = vmatpush1.bf16.msra.mxu0 0
  %4427 = vmatprep.subr.bf16.mxu0 0
  %4428 = vmatpush1.bf16.msra.mxu0 %v4409
  %4429 = vmatprep.subr.bf16.mxu0 0
  %4430 = vmatpush1.bf16.msra.mxu0 %v4408
  %4431 = vmatprep.subr.bf16.mxu0 0
  %4432 = vmatpush2.bf16.msra.mxu0 0
  %4433 = vmatprep.subr.bf16.mxu0 0
  %4434 = vmatpush2.bf16.msra.mxu0 0
  %4435 = vmatprep.subr.bf16.mxu0 0
  %4436 = vmatpush2.bf16.msra.mxu0 0
  %4437 = vmatprep.subr.bf16.mxu0 0
  %4438 = vmatpush2.bf16.msra.mxu0 0
  %4439 = vmatprep.subr.bf16.mxu0 0
  %4440 = vmatpush2.bf16.msra.mxu0 0
  %4441 = vmatprep.subr.bf16.mxu0 0
  %4442 = vmatpush2.bf16.msra.mxu0 0
  %4443 = vmatprep.subr.bf16.mxu0 0
  %4444 = vmatpush2.bf16.msra.mxu0 0
  %4445 = vmatprep.subr.bf16.mxu0 0
  %4446 = vmatpush2.bf16.msra.mxu0 0
  %4447 = vmatprep.mubr.bf16.mxu0 0
  %4448 = vmatmul.mubr.bf16.gmra.mxu0 %v4413
  %v4449 = vpop.f32.mrf.mxu0
  %v4450 = vadd.f32 %v4094, %v4449
  %v4451 = vpop.f32.mrf.mxu0
  %v4452 = vpop.f32.mrf.mxu0
  %v4453 = vpop.f32.mrf.mxu0
  %4454 = vdwg.mxu0
  %4455 = vmax.xlane.f32.xlu0 %v4450
  %v4456 = vpop.xlane.xlu0 %4455
  %v4457 = vsub.f32 %v4450, %v4456
  %v4458 = vmul.f32 %v4457, 1.442695
  %v4459 = vpow.pop %v4458
  %4460 = vadd.xlane.f32.xlu0 %v4459
  %v4461 = vpop.xlane.xlu0 %4460
  %v4462 = vlog2.pop %v4461
  %v4463 = vmul.f32 %v4462, 0.6931472
  %v4464 = vsub.f32 %v4457, %v4463
  %4465 = vst [vmem:[%s12] sm:$0xff] %v4464
  // Predicated region
  $region50: #{lstm_double_att_forward.1} parent=0 // pred_check
    _
  $region51: #{lstm_double_att_forward.1} parent=0 // pred_check_branch
    %4467 = sbr.rel (0) target = $region53
  $region52: #{lstm_double_att_forward.1} parent=0 // pred_region
    _
  $region53: #{lstm_double_att_forward.1} parent=0 // pred_fallthru
    _
  // Predicated region
  $region54: #{lstm_double_att_forward.1} parent=0 // pred_check
    _
  $region55: #{lstm_double_att_forward.1} parent=0 // pred_check_branch
    %4469 = sbr.rel (0) target = $region57
  $region56: #{lstm_double_att_forward.1} parent=0 // pred_region
    _
  $region57: #{lstm_double_att_forward.1} parent=0 // pred_fallthru
    _
  // Predicated region
  $region58: #{lstm_double_att_forward.1} parent=0 // pred_check
    _
  $region59: #{lstm_double_att_forward.1} parent=0 // pred_check_branch
    %4471 = sbr.rel (0) target = $region61
  $region60: #{lstm_double_att_forward.1} parent=0 // pred_region
    _
  $region61: #{lstm_double_att_forward.1} parent=0 // pred_fallthru
    _
  // Predicated region
  $region62: #{lstm_double_att_forward.1} parent=0 // pred_check
    _
  $region63: #{lstm_double_att_forward.1} parent=0 // pred_check_branch
    %4473 = sbr.rel (0) target = $region65
  $region64: #{lstm_double_att_forward.1} parent=0 // pred_region
    _
  $region65: #{lstm_double_att_forward.1} parent=0 // pred_fallthru
    _

</llo_original>
